<compile_context>
chip_gen: v7x
topology: tpu7x:2x2x1
jax: 0.10.0
libtpu: 0.0.40
codegen_flags: <defaults>
</compile_context>

<pallas_src>
import functools

import jax
import jax.numpy as jnp
from jax import lax
from jax.experimental import pallas as pl
from jax.experimental.pallas import tpu as pltpu

EPS = 1e-5
LANE = 128
ROW_TILE_CAP = 1024              # (TR, 128) f32 block is TR*512 B; 1024 rows ~ 0.5 MiB
VMEM_LIMIT = 32 * 1024 * 1024    # >= scoped defaults everywhere, < v7x 64 MiB physical


def _round_up(x, m):
    return (x + m - 1) // m * m


def _pick_row_tile(r):
    """Largest multiple-of-8 divisor of r that is <= ROW_TILE_CAP (fallback r)."""
    cap = min(ROW_TILE_CAP, r)
    t = cap - cap % 8
    while t >= 8:
        if r % t == 0:
            return t
        t -= 8
    return r


def _mosaic(semantics):
    return pltpu.CompilerParams(dimension_semantics=semantics,
                                vmem_limit_bytes=VMEM_LIMIT)


# ----------------------------------------------------------------------------
# Kernels
# ----------------------------------------------------------------------------
def _conv1_ds_stats_kernel(x_ref, w_ref, yd_ref, ss_ref, sq_ref, *, split):
    """Row-tiled: fused [conv1 | downsample] 1x1 matmul; per-tile channel stats.

    x @ [w1 | wd] is one 256-lane-wide MXU matmul; the downsample half is
    written out (bf16) so K4 never re-reads x or redoes the matmul.
    """
    y = jnp.dot(x_ref[...], w_ref[...], preferred_element_type=jnp.float32)
    yd_ref[...] = y[:, split:].astype(yd_ref.dtype)
    s = jnp.sum(y, axis=0, keepdims=True)
    q = jnp.sum(y * y, axis=0, keepdims=True)
    # Per-grid-step partial stats broadcast into a full (8, C) block: no resident
    # accumulator, so the grid axis stays "parallel" (v7x megacore friendly).
    ss_ref[...] = jnp.broadcast_to(s, ss_ref.shape)
    sq_ref[...] = jnp.broadcast_to(q, sq_ref.shape)


def _conv1_bn1_conv3x3_kernel(x_ref, w1_ref, a1_ref, c1_ref, w2_ref,
                              y2_ref, ss_ref, sq_ref, *, h, w):
    """Per-image: conv1 + BN1 + 3x3/pad-1 conv as 3 deep-K MXU matmuls."""
    c = w1_ref.shape[0]
    hw = h * w

    # conv1 (1x1) + BN1 on the real pixels only (no FLOPs on the pad ring).
    y1 = jnp.dot(x_ref[...], w1_ref[...], preferred_element_type=jnp.float32)
    y1 = y1 * a1_ref[...] + c1_ref[...]

    # Realize the 3x3 conv's zero padding AFTER BatchNorm (bn(0) != 0): build the
    # ring-padded image as a value (single bf16 cast, no iota/select masking).
    y1i = y1.astype(jnp.bfloat16).reshape(h, w, c)
    zc = jnp.zeros((h, 1, c), jnp.bfloat16)
    zr = jnp.zeros((1, w + 2, c), jnp.bfloat16)
    y1p = jnp.concatenate(
        [zr, jnp.concatenate([zc, y1i, zc], axis=1), zr], axis=0)   # (h+2, w+2, c)

    # 3x3 conv: per dy, the 3 dx-shifted windows are concatenated along the
    # contraction dim (K = 3*C) -> 3 deep matmuls instead of 9 shallow ones.
    acc = None
    for dy in range(3):
        xcat = jnp.concatenate(
            [y1p[dy:dy + h, dx:dx + w, :].reshape(hw, c) for dx in range(3)],
            axis=1)
        part = jnp.dot(xcat, w2_ref[dy], preferred_element_type=jnp.float32)
        acc = part if acc is None else acc + part

    y2_ref[...] = acc.astype(y2_ref.dtype)
    s = jnp.sum(acc, axis=0, keepdims=True)
    q = jnp.sum(acc * acc, axis=0, keepdims=True)
    ss_ref[...] = jnp.broadcast_to(s, ss_ref.shape)
    sq_ref[...] = jnp.broadcast_to(q, sq_ref.shape)


def _bn2_conv3_kernel(y2_ref, a2_ref, c2_ref, w3_ref, y3_ref, ss_ref, sq_ref):
    """Row-tiled: BN2 + 1x1 conv; per-tile stats of the raw result."""
    y2n = y2_ref[...].astype(jnp.float32) * a2_ref[...] + c2_ref[...]
    y3 = jnp.dot(y2n.astype(jnp.bfloat16), w3_ref[...],
                 preferred_element_type=jnp.float32)
    y3_ref[...] = y3.astype(y3_ref.dtype)
    s = jnp.sum(y3, axis=0, keepdims=True)
    q = jnp.sum(y3 * y3, axis=0, keepdims=True)
    ss_ref[...] = jnp.broadcast_to(s, ss_ref.shape)
    sq_ref[...] = jnp.broadcast_to(q, sq_ref.shape)


def _bn3_bnd_add_relu_kernel(y3_ref, yd_ref, a3_ref, c3_ref, ad_ref, cd_ref,
                             o_ref):
    """Row-tiled, pure elementwise: BN3(y3) + BN_d(yd) + residual add + ReLU."""
    out = (y3_ref[...].astype(jnp.float32) * a3_ref[...] + c3_ref[...]
           + yd_ref[...].astype(jnp.float32) * ad_ref[...] + cd_ref[...])
    o_ref[...] = jnp.maximum(out, 0.0)


# ----------------------------------------------------------------------------
# Host wrapper
# ----------------------------------------------------------------------------
def _bn_affine(s_sum, s_sq, count, gamma_row, beta_row):
    """bn(y) = a*y + c with training-mode (biased) batch statistics."""
    mu = s_sum / count
    var = jnp.maximum(s_sq / count - mu * mu, 0.0)
    a = gamma_row * lax.rsqrt(var + EPS)
    return a, beta_row - mu * a


def _stats_reduce(partial):
    """Partial (T*8, C) stats (row broadcast into 8 sublanes) -> (1, C) total."""
    return partial[::8].sum(axis=0, keepdims=True)


def bottleneck_forward(x_nchw, p):
    N, Cin, H, W = x_nchw.shape
    Cout = p["w3"].shape[0]
    R = N * H * W
    HW = H * W
    Cp = _round_up(Cin, LANE)
    Cop = _round_up(Cout, LANE)
    Cpd = Cp + Cop
    TR = _pick_row_tile(R)
    T = R // TR
    f32, bf16 = jnp.float32, jnp.bfloat16

    # --- host layout glue (XLA): NCHW -> flattened channels-last rows, lane
    # padded, stored ONCE and in bf16 (every consumer feeds the MXU in bf16).
    x_nhwc = jnp.transpose(x_nchw.astype(f32), (0, 2, 3, 1))
    x2d = jnp.pad(x_nhwc, ((0, 0), (0, 0), (0, 0), (0, Cp - Cin))
                  ).reshape(R, Cp).astype(bf16)

    def pad2(m, r, c):
        return jnp.pad(m.astype(f32), ((0, r - m.shape[0]), (0, c - m.shape[1])))

    w1m = pad2(p["w1"][:, :, 0, 0].T, Cp, Cp).astype(bf16)
    w3m = pad2(p["w3"][:, :, 0, 0].T, Cp, Cop).astype(bf16)
    wdm = pad2(p["wd"][:, :, 0, 0].T, Cp, Cop).astype(bf16)
    w1d = jnp.concatenate([w1m, wdm], axis=1)                    # (Cp, Cp+Cop)
    # 3x3 weight regrouped for deep-K matmuls: w2m[dy] = [W(dy,0); W(dy,1); W(dy,2)]
    w2t = jnp.transpose(p["w2"].astype(f32), (2, 3, 1, 0))       # (kh, kw, I, O)
    w2m = jnp.pad(w2t, ((0, 0), (0, 0), (0, Cp - Cin), (0, Cp - Cin))
                  ).reshape(3, 3 * Cp, Cp).astype(bf16)

    def rowpad(v, c):
        v = v.reshape(1, -1).astype(f32)
        return jnp.pad(v, ((0, 0), (0, c - v.shape[1])))

    count = jnp.asarray(R, f32)
    full = lambda shape: pl.BlockSpec(shape, lambda *_, n=len(shape): (0,) * n)
    row_spec = lambda c: pl.BlockSpec((TR, c), lambda i: (i, 0))
    img_spec = lambda c: pl.BlockSpec((HW, c), lambda n: (n, 0))
    stat_spec = lambda c: pl.BlockSpec((8, c), lambda i: (i, 0))
    stat_shape = lambda g, c: jax.ShapeDtypeStruct((g * 8, c), f32)

    # ---- K1: fused conv1 | downsample 1x1 conv -> stats + yd (bf16) ----------
    yd_bf, s1p, q1p = pl.pallas_call(
        functools.partial(_conv1_ds_stats_kernel, split=Cp),
        out_shape=(jax.ShapeDtypeStruct((R, Cop), bf16),
                   stat_shape(T, Cpd), stat_shape(T, Cpd)),
        grid=(T,),
        in_specs=[row_spec(Cp), full((Cp, Cpd))],
        out_specs=(row_spec(Cop), stat_spec(Cpd), stat_spec(Cpd)),
        compiler_params=_mosaic(("parallel",)),
    )(x2d, w1d)

    s1 = _stats_reduce(s1p)
    q1 = _stats_reduce(q1p)
    a1, c1 = _bn_affine(s1[:, :Cp], q1[:, :Cp], count,
                        rowpad(p["g1"], Cp), rowpad(p["b1"], Cp))
    # Downsample conv bias intentionally dropped: a per-channel bias right before
    # a training-mode BatchNorm is cancelled exactly by the mean subtraction.
    ad, cd = _bn_affine(s1[:, Cp:], q1[:, Cp:], count,
                        rowpad(p["gd"], Cop), rowpad(p["bd"], Cop))

    # ---- K2: conv1 + BN1 + 3x3 conv (per image, in-kernel, no host im2col) ---
    y2_bf, s2p, q2p = pl.pallas_call(
        functools.partial(_conv1_bn1_conv3x3_kernel, h=H, w=W),
        out_shape=(jax.ShapeDtypeStruct((R, Cp), bf16),
                   stat_shape(N, Cp), stat_shape(N, Cp)),
        grid=(N,),
        in_specs=[img_spec(Cp),
                  full((Cp, Cp)), full((1, Cp)), full((1, Cp)),
                  full((3, 3 * Cp, Cp))],
        out_specs=(img_spec(Cp), stat_spec(Cp), stat_spec(Cp)),
        compiler_params=_mosaic(("parallel",)),
    )(x2d, w1m, a1, c1, w2m)

    a2, c2 = _bn_affine(_stats_reduce(s2p), _stats_reduce(q2p), count,
                        rowpad(p["g2"], Cp), rowpad(p["b2"], Cp))

    # ---- K3: BN2 + 1x1 conv + stats ------------------------------------------
    y3_bf, s3p, q3p = pl.pallas_call(
        _bn2_conv3_kernel,
        out_shape=(jax.ShapeDtypeStruct((R, Cop), bf16),
                   stat_shape(T, Cop), stat_shape(T, Cop)),
        grid=(T,),
        in_specs=[row_spec(Cp), full((1, Cp)), full((1, Cp)), full((Cp, Cop))],
        out_specs=(row_spec(Cop), stat_spec(Cop), stat_spec(Cop)),
        compiler_params=_mosaic(("parallel",)),
    )(y2_bf, a2, c2, w3m)

    a3, c3 = _bn_affine(_stats_reduce(s3p), _stats_reduce(q3p), count,
                        rowpad(p["g3"], Cop), rowpad(p["b3"], Cop))

    # ---- K4: BN3 + BN_d + residual add + ReLU (pure elementwise) -------------
    out2d = pl.pallas_call(
        _bn3_bnd_add_relu_kernel,
        out_shape=jax.ShapeDtypeStruct((R, Cop), f32),
        grid=(T,),
        in_specs=[row_spec(Cop), row_spec(Cop),
                  full((1, Cop)), full((1, Cop)), full((1, Cop)), full((1, Cop))],
        out_specs=row_spec(Cop),
        compiler_params=_mosaic(("parallel",)),
    )(y3_bf, yd_bf, a3, c3, ad, cd)

    out = out2d[:, :Cout].reshape(N, H, W, Cout)
    return jnp.transpose(out, (0, 3, 1, 2))


# ----------------------------------------------------------------------------
# Plain-JAX reference (matches the PyTorch module, training-mode BN)
# ----------------------------------------------------------------------------
def ref_forward(x, p):
    conv = lambda z, w, s=1, pad=0: lax.conv_general_dilated(
        z, w, (s, s), [(pad, pad), (pad, pad)],
        dimension_numbers=("NCHW", "OIHW", "NCHW"),
        precision=lax.Precision.HIGHEST)

    def bn(y, g, b):
        mu = y.mean(axis=(0, 2, 3), keepdims=True)
        var = ((y - mu) ** 2).mean(axis=(0, 2, 3), keepdims=True)
        return ((y - mu) / jnp.sqrt(var + EPS)
                * g.reshape(1, -1, 1, 1) + b.reshape(1, -1, 1, 1))

    out = bn(conv(x, p["w1"]), p["g1"], p["b1"])
    out = bn(conv(out, p["w2"], 1, 1), p["g2"], p["b2"])
    out = bn(conv(out, p["w3"]), p["g3"], p["b3"])
    idn = bn(conv(x, p["wd"]) + p["biasd"].reshape(1, -1, 1, 1), p["gd"], p["bd"])
    return jnp.maximum(out + idn, 0.0)


if __name__ == "__main__":
    # Small shapes consistent with the module: in_dim=4, out_dim=8, stride=1.
    N, Cin, Cout, H, W = 2, 4, 8, 16, 16

    key = jax.random.PRNGKey(0)
    ks = jax.random.split(key, 14)
    p = {
        "w1": 0.2 * jax.random.normal(ks[0], (Cin, Cin, 1, 1), jnp.float32),
        "g1": 1.0 + 0.1 * jax.random.normal(ks[1], (Cin,), jnp.float32),
        "b1": 0.1 * jax.random.normal(ks[2], (Cin,), jnp.float32),
        "w2": 0.2 * jax.random.normal(ks[3], (Cin, Cin, 3, 3), jnp.float32),
        "g2": 1.0 + 0.1 * jax.random.normal(ks[4], (Cin,), jnp.float32),
        "b2": 0.1 * jax.random.normal(ks[5], (Cin,), jnp.float32),
        "w3": 0.2 * jax.random.normal(ks[6], (Cout, Cin, 1, 1), jnp.float32),
        "g3": 1.0 + 0.1 * jax.random.normal(ks[7], (Cout,), jnp.float32),
        "b3": 0.1 * jax.random.normal(ks[8], (Cout,), jnp.float32),
        "wd": 0.2 * jax.random.normal(ks[9], (Cout, Cin, 1, 1), jnp.float32),
        "biasd": 0.1 * jax.random.normal(ks[10], (Cout,), jnp.float32),
        "gd": 1.0 + 0.1 * jax.random.normal(ks[11], (Cout,), jnp.float32),
        "bd": 0.1 * jax.random.normal(ks[12], (Cout,), jnp.float32),
    }
    x = jax.random.normal(ks[13], (N, Cin, H, W), jnp.float32)

    out = jax.block_until_ready(jax.jit(bottleneck_forward)(x, p))
    ref = jax.block_until_ready(ref_forward(x, p))

    assert out.shape == (N, Cout, H, W), out.shape
    assert bool(jnp.allclose(out, ref, atol=5e-2, rtol=5e-2)), "mismatch vs reference"
    print("KERNEL_OK")
</pallas_src>

<mosaic_0001>
module attributes {stable_mosaic.version = 11 : i64} {
  func.func @_conv1_ds_stats_kernel(%arg0: i32, %arg1: memref<512x128xbf16, #tpu.memory_space<vmem>>, %arg2: memref<128x256xbf16, #tpu.memory_space<vmem>>, %arg3: memref<512x128xbf16, #tpu.memory_space<vmem>>, %arg4: memref<8x256xf32, #tpu.memory_space<vmem>>, %arg5: memref<8x256xf32, #tpu.memory_space<vmem>>) attributes {dimension_semantics = [#tpu.dimension_semantics<parallel>], iteration_bounds = array<i64: 1>, scalar_prefetch = 0 : i64, scratch_operands = 0 : i64, tpu.core_type = #tpu.core_type<tc>, window_params = [{transform_indices = @transform_0, window_bounds = array<i64: 512, 128>}, {pipeline_mode = #tpu.pipeline_mode<synchronous>, transform_indices = @transform_1, window_bounds = array<i64: 128, 256>}, {transform_indices = @transform_2, window_bounds = array<i64: 512, 128>}, {transform_indices = @transform_3, window_bounds = array<i64: 8, 256>}, {transform_indices = @transform_4, window_bounds = array<i64: 8, 256>}]} {
    %c0 = arith.constant 0 : index
    %c0_0 = arith.constant 0 : index
    %0 = vector.load %arg1[%c0, %c0_0] : memref<512x128xbf16, #tpu.memory_space<vmem>>, vector<512x128xbf16>
    %c0_1 = arith.constant 0 : index
    %c0_2 = arith.constant 0 : index
    %1 = vector.load %arg2[%c0_1, %c0_2] : memref<128x256xbf16, #tpu.memory_space<vmem>>, vector<128x256xbf16>
    %cst = arith.constant dense<0.000000e+00> : vector<512x256xf32>
    %2 = tpu.matmul %0, %1, %cst {dimension_numbers = #tpu.dot_dimension_numbers<[1], [0], [0], [1], [0, 0, 1, 1], [], []>} : vector<512x128xbf16>, vector<128x256xbf16>, vector<512x256xf32> -> vector<512x256xf32>
    %3 = vector.extract_strided_slice %2 {offsets = [0, 128], sizes = [512, 128], strides = [1, 1]} : vector<512x256xf32> to vector<512x128xf32>
    %4 = arith.truncf %3 : vector<512x128xf32> to vector<512x128xbf16>
    %c0_3 = arith.constant 0 : index
    %c0_4 = arith.constant 0 : index
    %5 = vector.load %arg3[%c0_3, %c0_4] : memref<512x128xbf16, #tpu.memory_space<vmem>>, vector<512x128xbf16>
    tpu.vector_store %arg3[%c0_3, %c0_4], %4 {strides = array<i32>} : memref<512x128xbf16, #tpu.memory_space<vmem>>, vector<512x128xbf16>,
    %cst_5 = arith.constant dense<0.000000e+00> : vector<256xf32>
    %6 = vector.multi_reduction <add>, %2, %cst_5 [0] : vector<512x256xf32> to vector<256xf32>
    %7 = vector.shape_cast %6 : vector<256xf32> to vector<1x256xf32>
    %8 = arith.mulf %2, %2 : vector<512x256xf32>
    %cst_6 = arith.constant dense<0.000000e+00> : vector<256xf32>
    %9 = vector.multi_reduction <add>, %8, %cst_6 [0] : vector<512x256xf32> to vector<256xf32>
    %10 = vector.shape_cast %9 : vector<256xf32> to vector<1x256xf32>
    %11 = vector.shape_cast %7 : vector<1x256xf32> to vector<1x256xf32>
    %12 = vector.broadcast %11 : vector<1x256xf32> to vector<8x256xf32>
    %c0_7 = arith.constant 0 : index
    %c0_8 = arith.constant 0 : index
    %13 = vector.load %arg4[%c0_7, %c0_8] : memref<8x256xf32, #tpu.memory_space<vmem>>, vector<8x256xf32>
    tpu.vector_store %arg4[%c0_7, %c0_8], %12 {strides = array<i32>} : memref<8x256xf32, #tpu.memory_space<vmem>>, vector<8x256xf32>,
    %14 = vector.shape_cast %10 : vector<1x256xf32> to vector<1x256xf32>
    %15 = vector.broadcast %14 : vector<1x256xf32> to vector<8x256xf32>
    %c0_9 = arith.constant 0 : index
    %c0_10 = arith.constant 0 : index
    %16 = vector.load %arg5[%c0_9, %c0_10] : memref<8x256xf32, #tpu.memory_space<vmem>>, vector<8x256xf32>
    tpu.vector_store %arg5[%c0_9, %c0_10], %15 {strides = array<i32>} : memref<8x256xf32, #tpu.memory_space<vmem>>, vector<8x256xf32>,
    return
  }
  func.func @transform_0(%arg0: i32) -> (i32, i32) {
    %c0_i32 = arith.constant 0 : i32
    %c0_i32_0 = arith.constant 0 : i32
    return %arg0, %c0_i32 : i32, i32
  }
  func.func @transform_1(%arg0: i32) -> (i32, i32) {
    %c0_i32 = arith.constant 0 : i32
    %c0_i32_0 = arith.constant 0 : i32
    %c0_i32_1 = arith.constant 0 : i32
    return %c0_i32, %c0_i32_0 : i32, i32
  }
  func.func @transform_2(%arg0: i32) -> (i32, i32) {
    %c0_i32 = arith.constant 0 : i32
    %c0_i32_0 = arith.constant 0 : i32
    return %arg0, %c0_i32 : i32, i32
  }
  func.func @transform_3(%arg0: i32) -> (i32, i32) {
    %c0_i32 = arith.constant 0 : i32
    %c0_i32_0 = arith.constant 0 : i32
    return %arg0, %c0_i32 : i32, i32
  }
  func.func @transform_4(%arg0: i32) -> (i32, i32) {
    %c0_i32 = arith.constant 0 : i32
    %c0_i32_0 = arith.constant 0 : i32
    return %arg0, %c0_i32 : i32, i32
  }
}

module attributes {stable_mosaic.version = 11 : i64} {
  func.func @_conv1_bn1_conv3x3_kernel(%arg0: i32, %arg1: memref<256x128xbf16, #tpu.memory_space<vmem>>, %arg2: memref<128x128xbf16, #tpu.memory_space<vmem>>, %arg3: memref<1x128xf32, #tpu.memory_space<vmem>>, %arg4: memref<1x128xf32, #tpu.memory_space<vmem>>, %arg5: memref<3x384x128xbf16, #tpu.memory_space<vmem>>, %arg6: memref<256x128xbf16, #tpu.memory_space<vmem>>, %arg7: memref<8x128xf32, #tpu.memory_space<vmem>>, %arg8: memref<8x128xf32, #tpu.memory_space<vmem>>) attributes {dimension_semantics = [#tpu.dimension_semantics<parallel>], iteration_bounds = array<i64: 2>, scalar_prefetch = 0 : i64, scratch_operands = 0 : i64, tpu.core_type = #tpu.core_type<tc>, window_params = [{transform_indices = @transform_0, window_bounds = array<i64: 256, 128>}, {pipeline_mode = #tpu.pipeline_mode<synchronous>, transform_indices = @transform_1, window_bounds = array<i64: 128, 128>}, {pipeline_mode = #tpu.pipeline_mode<synchronous>, transform_indices = @transform_2, window_bounds = array<i64: 1, 128>}, {pipeline_mode = #tpu.pipeline_mode<synchronous>, transform_indices = @transform_3, window_bounds = array<i64: 1, 128>}, {pipeline_mode = #tpu.pipeline_mode<synchronous>, transform_indices = @transform_4, window_bounds = array<i64: 3, 384, 128>}, {transform_indices = @transform_5, window_bounds = array<i64: 256, 128>}, {transform_indices = @transform_6, window_bounds = array<i64: 8, 128>}, {transform_indices = @transform_7, window_bounds = array<i64: 8, 128>}]} {
    %c0 = arith.constant 0 : index
    %c0_0 = arith.constant 0 : index
    %0 = vector.load %arg1[%c0, %c0_0] : memref<256x128xbf16, #tpu.memory_space<vmem>>, vector<256x128xbf16>
    %c0_1 = arith.constant 0 : index
    %c0_2 = arith.constant 0 : index
    %1 = vector.load %arg2[%c0_1, %c0_2] : memref<128x128xbf16, #tpu.memory_space<vmem>>, vector<128x128xbf16>
    %cst = arith.constant dense<0.000000e+00> : vector<256x128xf32>
    %2 = tpu.matmul %0, %1, %cst {dimension_numbers = #tpu.dot_dimension_numbers<[1], [0], [0], [1], [0, 0, 1, 1], [], []>} : vector<256x128xbf16>, vector<128x128xbf16>, vector<256x128xf32> -> vector<256x128xf32>
    %c0_3 = arith.constant 0 : index
    %c0_4 = arith.constant 0 : index
    %3 = vector.load %arg3[%c0_3, %c0_4] : memref<1x128xf32, #tpu.memory_space<vmem>>, vector<1x128xf32>
    %4 = vector.broadcast %3 : vector<1x128xf32> to vector<256x128xf32>
    %5 = arith.mulf %2, %4 : vector<256x128xf32>
    %c0_5 = arith.constant 0 : index
    %c0_6 = arith.constant 0 : index
    %6 = vector.load %arg4[%c0_5, %c0_6] : memref<1x128xf32, #tpu.memory_space<vmem>>, vector<1x128xf32>
    %7 = vector.broadcast %6 : vector<1x128xf32> to vector<256x128xf32>
    %8 = arith.addf %5, %7 : vector<256x128xf32>
    %9 = arith.truncf %8 : vector<256x128xf32> to vector<256x128xbf16>
    %10 = vector.shape_cast %9 : vector<256x128xbf16> to vector<16x16x128xbf16>
    %cst_7 = arith.constant 0.000000e+00 : bf16
    %11 = vector.broadcast %cst_7 : bf16 to vector<16x1x128xbf16>
    %cst_8 = arith.constant 0.000000e+00 : bf16
    %12 = vector.broadcast %cst_8 : bf16 to vector<1x18x128xbf16>
    %13 = tpu.concatenate %11, %10, %11 in 1 : vector<16x1x128xbf16>, vector<16x16x128xbf16>, vector<16x1x128xbf16> -> vector<16x18x128xbf16>
    %14 = tpu.concatenate %12, %13, %12 in 0 : vector<1x18x128xbf16>, vector<16x18x128xbf16>, vector<1x18x128xbf16> -> vector<18x18x128xbf16>
    %15 = vector.extract_strided_slice %14 {offsets = [0, 0, 0], sizes = [16, 16, 128], strides = [1, 1, 1]} : vector<18x18x128xbf16> to vector<16x16x128xbf16>
    %16 = vector.shape_cast %15 : vector<16x16x128xbf16> to vector<256x128xbf16>
    %17 = vector.extract_strided_slice %14 {offsets = [0, 1, 0], sizes = [16, 16, 128], strides = [1, 1, 1]} : vector<18x18x128xbf16> to vector<16x16x128xbf16>
    %18 = vector.shape_cast %17 : vector<16x16x128xbf16> to vector<256x128xbf16>
    %19 = vector.extract_strided_slice %14 {offsets = [0, 2, 0], sizes = [16, 16, 128], strides = [1, 1, 1]} : vector<18x18x128xbf16> to vector<16x16x128xbf16>
    %20 = vector.shape_cast %19 : vector<16x16x128xbf16> to vector<256x128xbf16>
    %21 = tpu.concatenate %16, %18, %20 in 1 : vector<256x128xbf16>, vector<256x128xbf16>, vector<256x128xbf16> -> vector<256x384xbf16>
    %c0_9 = arith.constant 0 : index
    %c0_10 = arith.constant 0 : index
    %c0_11 = arith.constant 0 : index
    %22 = vector.load %arg5[%c0_9, %c0_10, %c0_11] : memref<3x384x128xbf16, #tpu.memory_space<vmem>>, vector<1x384x128xbf16>
    %23 = vector.shape_cast %22 : vector<1x384x128xbf16> to vector<384x128xbf16>
    %cst_12 = arith.constant dense<0.000000e+00> : vector<256x128xf32>
    %24 = tpu.matmul %21, %23, %cst_12 {dimension_numbers = #tpu.dot_dimension_numbers<[1], [0], [0], [1], [0, 0, 1, 1], [], []>} : vector<256x384xbf16>, vector<384x128xbf16>, vector<256x128xf32> -> vector<256x128xf32>
    %25 = vector.extract_strided_slice %14 {offsets = [1, 0, 0], sizes = [16, 16, 128], strides = [1, 1, 1]} : vector<18x18x128xbf16> to vector<16x16x128xbf16>
    %26 = vector.shape_cast %25 : vector<16x16x128xbf16> to vector<256x128xbf16>
    %27 = vector.extract_strided_slice %14 {offsets = [1, 1, 0], sizes = [16, 16, 128], strides = [1, 1, 1]} : vector<18x18x128xbf16> to vector<16x16x128xbf16>
    %28 = vector.shape_cast %27 : vector<16x16x128xbf16> to vector<256x128xbf16>
    %29 = vector.extract_strided_slice %14 {offsets = [1, 2, 0], sizes = [16, 16, 128], strides = [1, 1, 1]} : vector<18x18x128xbf16> to vector<16x16x128xbf16>
    %30 = vector.shape_cast %29 : vector<16x16x128xbf16> to vector<256x128xbf16>
    %31 = tpu.concatenate %26, %28, %30 in 1 : vector<256x128xbf16>, vector<256x128xbf16>, vector<256x128xbf16> -> vector<256x384xbf16>
    %c1 = arith.constant 1 : index
    %c0_13 = arith.constant 0 : index
    %c0_14 = arith.constant 0 : index
    %32 = vector.load %arg5[%c1, %c0_13, %c0_14] : memref<3x384x128xbf16, #tpu.memory_space<vmem>>, vector<1x384x128xbf16>
    %33 = vector.shape_cast %32 : vector<1x384x128xbf16> to vector<384x128xbf16>
    %cst_15 = arith.constant dense<0.000000e+00> : vector<256x128xf32>
    %34 = tpu.matmul %31, %33, %cst_15 {dimension_numbers = #tpu.dot_dimension_numbers<[1], [0], [0], [1], [0, 0, 1, 1], [], []>} : vector<256x384xbf16>, vector<384x128xbf16>, vector<256x128xf32> -> vector<256x128xf32>
    %35 = arith.addf %24, %34 : vector<256x128xf32>
    %36 = vector.extract_strided_slice %14 {offsets = [2, 0, 0], sizes = [16, 16, 128], strides = [1, 1, 1]} : vector<18x18x128xbf16> to vector<16x16x128xbf16>
    %37 = vector.shape_cast %36 : vector<16x16x128xbf16> to vector<256x128xbf16>
    %38 = vector.extract_strided_slice %14 {offsets = [2, 1, 0], sizes = [16, 16, 128], strides = [1, 1, 1]} : vector<18x18x128xbf16> to vector<16x16x128xbf16>
    %39 = vector.shape_cast %38 : vector<16x16x128xbf16> to vector<256x128xbf16>
    %40 = vector.extract_strided_slice %14 {offsets = [2, 2, 0], sizes = [16, 16, 128], strides = [1, 1, 1]} : vector<18x18x128xbf16> to vector<16x16x128xbf16>
    %41 = vector.shape_cast %40 : vector<16x16x128xbf16> to vector<256x128xbf16>
    %42 = tpu.concatenate %37, %39, %41 in 1 : vector<256x128xbf16>, vector<256x128xbf16>, vector<256x128xbf16> -> vector<256x384xbf16>
    %c2 = arith.constant 2 : index
    %c0_16 = arith.constant 0 : index
    %c0_17 = arith.constant 0 : index
    %43 = vector.load %arg5[%c2, %c0_16, %c0_17] : memref<3x384x128xbf16, #tpu.memory_space<vmem>>, vector<1x384x128xbf16>
    %44 = vector.shape_cast %43 : vector<1x384x128xbf16> to vector<384x128xbf16>
    %cst_18 = arith.constant dense<0.000000e+00> : vector<256x128xf32>
    %45 = tpu.matmul %42, %44, %cst_18 {dimension_numbers = #tpu.dot_dimension_numbers<[1], [0], [0], [1], [0, 0, 1, 1], [], []>} : vector<256x384xbf16>, vector<384x128xbf16>, vector<256x128xf32> -> vector<256x128xf32>
    %46 = arith.addf %35, %45 : vector<256x128xf32>
    %47 = arith.truncf %46 : vector<256x128xf32> to vector<256x128xbf16>
    %c0_19 = arith.constant 0 : index
    %c0_20 = arith.constant 0 : index
    %48 = vector.load %arg6[%c0_19, %c0_20] : memref<256x128xbf16, #tpu.memory_space<vmem>>, vector<256x128xbf16>
    tpu.vector_store %arg6[%c0_19, %c0_20], %47 {strides = array<i32>} : memref<256x128xbf16, #tpu.memory_space<vmem>>, vector<256x128xbf16>,
    %cst_21 = arith.constant dense<0.000000e+00> : vector<128xf32>
    %49 = vector.multi_reduction <add>, %46, %cst_21 [0] : vector<256x128xf32> to vector<128xf32>
    %50 = vector.shape_cast %49 : vector<128xf32> to vector<1x128xf32>
    %51 = arith.mulf %46, %46 : vector<256x128xf32>
    %cst_22 = arith.constant dense<0.000000e+00> : vector<128xf32>
    %52 = vector.multi_reduction <add>, %51, %cst_22 [0] : vector<256x128xf32> to vector<128xf32>
    %53 = vector.shape_cast %52 : vector<128xf32> to vector<1x128xf32>
    %54 = vector.shape_cast %50 : vector<1x128xf32> to vector<1x128xf32>
    %55 = vector.broadcast %54 : vector<1x128xf32> to vector<8x128xf32>
    %c0_23 = arith.constant 0 : index
    %c0_24 = arith.constant 0 : index
    %56 = vector.load %arg7[%c0_23, %c0_24] : memref<8x128xf32, #tpu.memory_space<vmem>>, vector<8x128xf32>
    tpu.vector_store %arg7[%c0_23, %c0_24], %55 {strides = array<i32>} : memref<8x128xf32, #tpu.memory_space<vmem>>, vector<8x128xf32>,
    %57 = vector.shape_cast %53 : vector<1x128xf32> to vector<1x128xf32>
    %58 = vector.broadcast %57 : vector<1x128xf32> to vector<8x128xf32>
    %c0_25 = arith.constant 0 : index
    %c0_26 = arith.constant 0 : index
    %59 = vector.load %arg8[%c0_25, %c0_26] : memref<8x128xf32, #tpu.memory_space<vmem>>, vector<8x128xf32>
    tpu.vector_store %arg8[%c0_25, %c0_26], %58 {strides = array<i32>} : memref<8x128xf32, #tpu.memory_space<vmem>>, vector<8x128xf32>,
    return
  }
  func.func @transform_0(%arg0: i32) -> (i32, i32) {
    %c0_i32 = arith.constant 0 : i32
    %c0_i32_0 = arith.constant 0 : i32
    return %arg0, %c0_i32 : i32, i32
  }
  func.func @transform_1(%arg0: i32) -> (i32, i32) {
    %c0_i32 = arith.constant 0 : i32
    %c0_i32_0 = arith.constant 0 : i32
    %c0_i32_1 = arith.constant 0 : i32
    return %c0_i32, %c0_i32_0 : i32, i32
  }
  func.func @transform_2(%arg0: i32) -> (i32, i32) {
    %c0_i32 = arith.constant 0 : i32
    %c0_i32_0 = arith.constant 0 : i32
    %c0_i32_1 = arith.constant 0 : i32
    return %c0_i32, %c0_i32_0 : i32, i32
  }
  func.func @transform_3(%arg0: i32) -> (i32, i32) {
    %c0_i32 = arith.constant 0 : i32
    %c0_i32_0 = arith.constant 0 : i32
    %c0_i32_1 = arith.constant 0 : i32
    return %c0_i32, %c0_i32_0 : i32, i32
  }
  func.func @transform_4(%arg0: i32) -> (i32, i32, i32) {
    %c0_i32 = arith.constant 0 : i32
    %c0_i32_0 = arith.constant 0 : i32
    %c0_i32_1 = arith.constant 0 : i32
    %c0_i32_2 = arith.constant 0 : i32
    return %c0_i32, %c0_i32_0, %c0_i32_1 : i32, i32, i32
  }
  func.func @transform_5(%arg0: i32) -> (i32, i32) {
    %c0_i32 = arith.constant 0 : i32
    %c0_i32_0 = arith.constant 0 : i32
    return %arg0, %c0_i32 : i32, i32
  }
  func.func @transform_6(%arg0: i32) -> (i32, i32) {
    %c0_i32 = arith.constant 0 : i32
    %c0_i32_0 = arith.constant 0 : i32
    return %arg0, %c0_i32 : i32, i32
  }
  func.func @transform_7(%arg0: i32) -> (i32, i32) {
    %c0_i32 = arith.constant 0 : i32
    %c0_i32_0 = arith.constant 0 : i32
    return %arg0, %c0_i32 : i32, i32
  }
}

module attributes {stable_mosaic.version = 11 : i64} {
  func.func @_bn2_conv3_kernel(%arg0: i32, %arg1: memref<512x128xbf16, #tpu.memory_space<vmem>>, %arg2: memref<1x128xf32, #tpu.memory_space<vmem>>, %arg3: memref<1x128xf32, #tpu.memory_space<vmem>>, %arg4: memref<128x128xbf16, #tpu.memory_space<vmem>>, %arg5: memref<512x128xbf16, #tpu.memory_space<vmem>>, %arg6: memref<8x128xf32, #tpu.memory_space<vmem>>, %arg7: memref<8x128xf32, #tpu.memory_space<vmem>>) attributes {dimension_semantics = [#tpu.dimension_semantics<parallel>], iteration_bounds = array<i64: 1>, scalar_prefetch = 0 : i64, scratch_operands = 0 : i64, tpu.core_type = #tpu.core_type<tc>, window_params = [{transform_indices = @transform_0, window_bounds = array<i64: 512, 128>}, {pipeline_mode = #tpu.pipeline_mode<synchronous>, transform_indices = @transform_1, window_bounds = array<i64: 1, 128>}, {pipeline_mode = #tpu.pipeline_mode<synchronous>, transform_indices = @transform_2, window_bounds = array<i64: 1, 128>}, {pipeline_mode = #tpu.pipeline_mode<synchronous>, transform_indices = @transform_3, window_bounds = array<i64: 128, 128>}, {transform_indices = @transform_4, window_bounds = array<i64: 512, 128>}, {transform_indices = @transform_5, window_bounds = array<i64: 8, 128>}, {transform_indices = @transform_6, window_bounds = array<i64: 8, 128>}]} {
    %c0 = arith.constant 0 : index
    %c0_0 = arith.constant 0 : index
    %0 = vector.load %arg1[%c0, %c0_0] : memref<512x128xbf16, #tpu.memory_space<vmem>>, vector<512x128xbf16>
    %1 = arith.extf %0 : vector<512x128xbf16> to vector<512x128xf32>
    %c0_1 = arith.constant 0 : index
    %c0_2 = arith.constant 0 : index
    %2 = vector.load %arg2[%c0_1, %c0_2] : memref<1x128xf32, #tpu.memory_space<vmem>>, vector<1x128xf32>
    %3 = vector.broadcast %2 : vector<1x128xf32> to vector<512x128xf32>
    %4 = arith.mulf %1, %3 : vector<512x128xf32>
    %c0_3 = arith.constant 0 : index
    %c0_4 = arith.constant 0 : index
    %5 = vector.load %arg3[%c0_3, %c0_4] : memref<1x128xf32, #tpu.memory_space<vmem>>, vector<1x128xf32>
    %6 = vector.broadcast %5 : vector<1x128xf32> to vector<512x128xf32>
    %7 = arith.addf %4, %6 : vector<512x128xf32>
    %8 = arith.truncf %7 : vector<512x128xf32> to vector<512x128xbf16>
    %c0_5 = arith.constant 0 : index
    %c0_6 = arith.constant 0 : index
    %9 = vector.load %arg4[%c0_5, %c0_6] : memref<128x128xbf16, #tpu.memory_space<vmem>>, vector<128x128xbf16>
    %cst = arith.constant dense<0.000000e+00> : vector<512x128xf32>
    %10 = tpu.matmul %8, %9, %cst {dimension_numbers = #tpu.dot_dimension_numbers<[1], [0], [0], [1], [0, 0, 1, 1], [], []>} : vector<512x128xbf16>, vector<128x128xbf16>, vector<512x128xf32> -> vector<512x128xf32>
    %11 = arith.truncf %10 : vector<512x128xf32> to vector<512x128xbf16>
    %c0_7 = arith.constant 0 : index
    %c0_8 = arith.constant 0 : index
    %12 = vector.load %arg5[%c0_7, %c0_8] : memref<512x128xbf16, #tpu.memory_space<vmem>>, vector<512x128xbf16>
    tpu.vector_store %arg5[%c0_7, %c0_8], %11 {strides = array<i32>} : memref<512x128xbf16, #tpu.memory_space<vmem>>, vector<512x128xbf16>,
    %cst_9 = arith.constant dense<0.000000e+00> : vector<128xf32>
    %13 = vector.multi_reduction <add>, %10, %cst_9 [0] : vector<512x128xf32> to vector<128xf32>
    %14 = vector.shape_cast %13 : vector<128xf32> to vector<1x128xf32>
    %15 = arith.mulf %10, %10 : vector<512x128xf32>
    %cst_10 = arith.constant dense<0.000000e+00> : vector<128xf32>
    %16 = vector.multi_reduction <add>, %15, %cst_10 [0] : vector<512x128xf32> to vector<128xf32>
    %17 = vector.shape_cast %16 : vector<128xf32> to vector<1x128xf32>
    %18 = vector.shape_cast %14 : vector<1x128xf32> to vector<1x128xf32>
    %19 = vector.broadcast %18 : vector<1x128xf32> to vector<8x128xf32>
    %c0_11 = arith.constant 0 : index
    %c0_12 = arith.constant 0 : index
    %20 = vector.load %arg6[%c0_11, %c0_12] : memref<8x128xf32, #tpu.memory_space<vmem>>, vector<8x128xf32>
    tpu.vector_store %arg6[%c0_11, %c0_12], %19 {strides = array<i32>} : memref<8x128xf32, #tpu.memory_space<vmem>>, vector<8x128xf32>,
    %21 = vector.shape_cast %17 : vector<1x128xf32> to vector<1x128xf32>
    %22 = vector.broadcast %21 : vector<1x128xf32> to vector<8x128xf32>
    %c0_13 = arith.constant 0 : index
    %c0_14 = arith.constant 0 : index
    %23 = vector.load %arg7[%c0_13, %c0_14] : memref<8x128xf32, #tpu.memory_space<vmem>>, vector<8x128xf32>
    tpu.vector_store %arg7[%c0_13, %c0_14], %22 {strides = array<i32>} : memref<8x128xf32, #tpu.memory_space<vmem>>, vector<8x128xf32>,
    return
  }
  func.func @transform_0(%arg0: i32) -> (i32, i32) {
    %c0_i32 = arith.constant 0 : i32
    %c0_i32_0 = arith.constant 0 : i32
    return %arg0, %c0_i32 : i32, i32
  }
  func.func @transform_1(%arg0: i32) -> (i32, i32) {
    %c0_i32 = arith.constant 0 : i32
    %c0_i32_0 = arith.constant 0 : i32
    %c0_i32_1 = arith.constant 0 : i32
    return %c0_i32, %c0_i32_0 : i32, i32
  }
  func.func @transform_2(%arg0: i32) -> (i32, i32) {
    %c0_i32 = arith.constant 0 : i32
    %c0_i32_0 = arith.constant 0 : i32
    %c0_i32_1 = arith.constant 0 : i32
    return %c0_i32, %c0_i32_0 : i32, i32
  }
  func.func @transform_3(%arg0: i32) -> (i32, i32) {
    %c0_i32 = arith.constant 0 : i32
    %c0_i32_0 = arith.constant 0 : i32
    %c0_i32_1 = arith.constant 0 : i32
    return %c0_i32, %c0_i32_0 : i32, i32
  }
  func.func @transform_4(%arg0: i32) -> (i32, i32) {
    %c0_i32 = arith.constant 0 : i32
    %c0_i32_0 = arith.constant 0 : i32
    return %arg0, %c0_i32 : i32, i32
  }
  func.func @transform_5(%arg0: i32) -> (i32, i32) {
    %c0_i32 = arith.constant 0 : i32
    %c0_i32_0 = arith.constant 0 : i32
    return %arg0, %c0_i32 : i32, i32
  }
  func.func @transform_6(%arg0: i32) -> (i32, i32) {
    %c0_i32 = arith.constant 0 : i32
    %c0_i32_0 = arith.constant 0 : i32
    return %arg0, %c0_i32 : i32, i32
  }
}

module attributes {stable_mosaic.version = 11 : i64} {
  func.func @_bn3_bnd_add_relu_kernel(%arg0: i32, %arg1: memref<512x128xbf16, #tpu.memory_space<vmem>>, %arg2: memref<512x128xbf16, #tpu.memory_space<vmem>>, %arg3: memref<1x128xf32, #tpu.memory_space<vmem>>, %arg4: memref<1x128xf32, #tpu.memory_space<vmem>>, %arg5: memref<1x128xf32, #tpu.memory_space<vmem>>, %arg6: memref<1x128xf32, #tpu.memory_space<vmem>>, %arg7: memref<512x128xf32, #tpu.memory_space<vmem>>) attributes {dimension_semantics = [#tpu.dimension_semantics<parallel>], iteration_bounds = array<i64: 1>, scalar_prefetch = 0 : i64, scratch_operands = 0 : i64, tpu.core_type = #tpu.core_type<tc>, window_params = [{transform_indices = @transform_0, window_bounds = array<i64: 512, 128>}, {transform_indices = @transform_1, window_bounds = array<i64: 512, 128>}, {pipeline_mode = #tpu.pipeline_mode<synchronous>, transform_indices = @transform_2, window_bounds = array<i64: 1, 128>}, {pipeline_mode = #tpu.pipeline_mode<synchronous>, transform_indices = @transform_3, window_bounds = array<i64: 1, 128>}, {pipeline_mode = #tpu.pipeline_mode<synchronous>, transform_indices = @transform_4, window_bounds = array<i64: 1, 128>}, {pipeline_mode = #tpu.pipeline_mode<synchronous>, transform_indices = @transform_5, window_bounds = array<i64: 1, 128>}, {transform_indices = @transform_6, window_bounds = array<i64: 512, 128>}]} {
    %c0 = arith.constant 0 : index
    %c0_0 = arith.constant 0 : index
    %0 = vector.load %arg1[%c0, %c0_0] : memref<512x128xbf16, #tpu.memory_space<vmem>>, vector<512x128xbf16>
    %1 = arith.extf %0 : vector<512x128xbf16> to vector<512x128xf32>
    %c0_1 = arith.constant 0 : index
    %c0_2 = arith.constant 0 : index
    %2 = vector.load %arg3[%c0_1, %c0_2] : memref<1x128xf32, #tpu.memory_space<vmem>>, vector<1x128xf32>
    %3 = vector.broadcast %2 : vector<1x128xf32> to vector<512x128xf32>
    %4 = arith.mulf %1, %3 : vector<512x128xf32>
    %c0_3 = arith.constant 0 : index
    %c0_4 = arith.constant 0 : index
    %5 = vector.load %arg4[%c0_3, %c0_4] : memref<1x128xf32, #tpu.memory_space<vmem>>, vector<1x128xf32>
    %6 = vector.broadcast %5 : vector<1x128xf32> to vector<512x128xf32>
    %7 = arith.addf %4, %6 : vector<512x128xf32>
    %c0_5 = arith.constant 0 : index
    %c0_6 = arith.constant 0 : index
    %8 = vector.load %arg2[%c0_5, %c0_6] : memref<512x128xbf16, #tpu.memory_space<vmem>>, vector<512x128xbf16>
    %9 = arith.extf %8 : vector<512x128xbf16> to vector<512x128xf32>
    %c0_7 = arith.constant 0 : index
    %c0_8 = arith.constant 0 : index
    %10 = vector.load %arg5[%c0_7, %c0_8] : memref<1x128xf32, #tpu.memory_space<vmem>>, vector<1x128xf32>
    %11 = vector.broadcast %10 : vector<1x128xf32> to vector<512x128xf32>
    %12 = arith.mulf %9, %11 : vector<512x128xf32>
    %13 = arith.addf %7, %12 : vector<512x128xf32>
    %c0_9 = arith.constant 0 : index
    %c0_10 = arith.constant 0 : index
    %14 = vector.load %arg6[%c0_9, %c0_10] : memref<1x128xf32, #tpu.memory_space<vmem>>, vector<1x128xf32>
    %15 = vector.broadcast %14 : vector<1x128xf32> to vector<512x128xf32>
    %16 = arith.addf %13, %15 : vector<512x128xf32>
    %cst = arith.constant 0.000000e+00 : f32
    %17 = vector.broadcast %cst : f32 to vector<512x128xf32>
    %18 = arith.maximumf %16, %17 : vector<512x128xf32>
    %c0_11 = arith.constant 0 : index
    %c0_12 = arith.constant 0 : index
    %19 = vector.load %arg7[%c0_11, %c0_12] : memref<512x128xf32, #tpu.memory_space<vmem>>, vector<512x128xf32>
    tpu.vector_store %arg7[%c0_11, %c0_12], %18 {strides = array<i32>} : memref<512x128xf32, #tpu.memory_space<vmem>>, vector<512x128xf32>,
    return
  }
  func.func @transform_0(%arg0: i32) -> (i32, i32) {
    %c0_i32 = arith.constant 0 : i32
    %c0_i32_0 = arith.constant 0 : i32
    return %arg0, %c0_i32 : i32, i32
  }
  func.func @transform_1(%arg0: i32) -> (i32, i32) {
    %c0_i32 = arith.constant 0 : i32
    %c0_i32_0 = arith.constant 0 : i32
    return %arg0, %c0_i32 : i32, i32
  }
  func.func @transform_2(%arg0: i32) -> (i32, i32) {
    %c0_i32 = arith.constant 0 : i32
    %c0_i32_0 = arith.constant 0 : i32
    %c0_i32_1 = arith.constant 0 : i32
    return %c0_i32, %c0_i32_0 : i32, i32
  }
  func.func @transform_3(%arg0: i32) -> (i32, i32) {
    %c0_i32 = arith.constant 0 : i32
    %c0_i32_0 = arith.constant 0 : i32
    %c0_i32_1 = arith.constant 0 : i32
    return %c0_i32, %c0_i32_0 : i32, i32
  }
  func.func @transform_4(%arg0: i32) -> (i32, i32) {
    %c0_i32 = arith.constant 0 : i32
    %c0_i32_0 = arith.constant 0 : i32
    %c0_i32_1 = arith.constant 0 : i32
    return %c0_i32, %c0_i32_0 : i32, i32
  }
  func.func @transform_5(%arg0: i32) -> (i32, i32) {
    %c0_i32 = arith.constant 0 : i32
    %c0_i32_0 = arith.constant 0 : i32
    %c0_i32_1 = arith.constant 0 : i32
    return %c0_i32, %c0_i32_0 : i32, i32
  }
  func.func @transform_6(%arg0: i32) -> (i32, i32) {
    %c0_i32 = arith.constant 0 : i32
    %c0_i32_0 = arith.constant 0 : i32
    return %arg0, %c0_i32 : i32, i32
  }
}

</mosaic_0001>

<llo_original>
// kernel: bottleneck_forward.7
$region0: #{bottleneck_forward.7}
  #allocation0 [shape = 'u32[]', space=smem, size = 0x4, offset = 0x4, fixed_abs, tag = 'smem constant byte address 0x4 - core index']
  #allocation1 [shape = 'u32[144,128]{1,0:T(1,128)}', space=vmem, size = 0x12000, scoped, tag = 'internal scratch']
  %s0 = inlined_call_operand.vmem [shape: bf16[512,128], index: 0, kind: input, shape index: {}]
  %s1 = inlined_call_operand.vmem [shape: bf16[512,128], index: 1, kind: input, shape index: {}]
  %s2 = inlined_call_operand.vmem [shape: f32[1,128], index: 2, kind: input, shape index: {}]
  %s3 = inlined_call_operand.vmem [shape: f32[1,128], index: 3, kind: input, shape index: {}]
  %s4 = inlined_call_operand.vmem [shape: f32[1,128], index: 4, kind: input, shape index: {}]
  %s5 = inlined_call_operand.vmem [shape: f32[1,128], index: 5, kind: input, shape index: {}]
  %s6 = inlined_call_operand.vmem [shape: f32[512,128], index: 6, kind: output, shape index: {}]
  %s7 = sld [smem:[#allocation0]]
  $region34: #{bottleneck_forward.7} parent=0
    _
  %s9 = ssub.s32 1, %s7
  %s10 = scalar_select 0, %s9, %s7
  // Predicated region
  $region2: #{bottleneck_forward.7} parent=0 // pred_check
    _
  $region3: #{bottleneck_forward.7} parent=0 // pred_check_branch
    %12 = sbr.rel (0) target = $region5
  $region4: #{bottleneck_forward.7} parent=0 // pred_region
    _
  $region5: #{bottleneck_forward.7} parent=0 // pred_fallthru
    _
  // Predicated region
  $region6: #{bottleneck_forward.7} parent=0 // pred_check
    _
  $region7: #{bottleneck_forward.7} parent=0 // pred_check_branch
    %14 = sbr.rel (0) target = $region9
  $region8: #{bottleneck_forward.7} parent=0 // pred_region
    _
  $region9: #{bottleneck_forward.7} parent=0 // pred_fallthru
    _
  // Predicated region
  $region10: #{bottleneck_forward.7} parent=0 // pred_check
    _
  $region11: #{bottleneck_forward.7} parent=0 // pred_check_branch
    %16 = sbr.rel (0) target = $region13
  $region12: #{bottleneck_forward.7} parent=0 // pred_region
    _
  $region13: #{bottleneck_forward.7} parent=0 // pred_fallthru
    _
  // Predicated region
  $region14: #{bottleneck_forward.7} parent=0 // pred_check
    _
  $region15: #{bottleneck_forward.7} parent=0 // pred_check_branch
    %18 = sbr.rel (0) target = $region17
  $region16: #{bottleneck_forward.7} parent=0 // pred_region
    _
  $region17: #{bottleneck_forward.7} parent=0 // pred_fallthru
    _
  // Predicated region
  $region18: #{bottleneck_forward.7} parent=0 // pred_check
    _
  $region19: #{bottleneck_forward.7} parent=0 // pred_check_branch
    %20 = sbr.rel (0) target = $region21
  $region20: #{bottleneck_forward.7} parent=0 // pred_region
    _
  $region21: #{bottleneck_forward.7} parent=0 // pred_fallthru
    _
  // Predicated region
  $region22: #{bottleneck_forward.7} parent=0 // pred_check
    _
  $region23: #{bottleneck_forward.7} parent=0 // pred_check_branch
    %22 = sbr.rel (0) target = $region25
  $region24: #{bottleneck_forward.7} parent=0 // pred_region
    _
  $region25: #{bottleneck_forward.7} parent=0 // pred_fallthru
    _
  %v23 = vld [vmem:[%s0] sm:$0xf]
  %v24 = vld [vmem:[%s0 + $0x4] sm:$0xf]
  %v25 = vld [vmem:[%s0 + $0x8] sm:$0xf]
  %v26 = vld [vmem:[%s0 + $0xc] sm:$0xf]
  %v27 = vld [vmem:[%s0 + $0x10] sm:$0xf]
  %v28 = vld [vmem:[%s0 + $0x14] sm:$0xf]
  %v29 = vld [vmem:[%s0 + $0x18] sm:$0xf]
  %v30 = vld [vmem:[%s0 + $0x1c] sm:$0xf]
  %v31 = vld [vmem:[%s0 + $0x20] sm:$0xf]
  %v32 = vld [vmem:[%s0 + $0x24] sm:$0xf]
  %v33 = vld [vmem:[%s0 + $0x28] sm:$0xf]
  %v34 = vld [vmem:[%s0 + $0x2c] sm:$0xf]
  %v35 = vld [vmem:[%s0 + $0x30] sm:$0xf]
  %v36 = vld [vmem:[%s0 + $0x34] sm:$0xf]
  %v37 = vld [vmem:[%s0 + $0x38] sm:$0xf]
  %v38 = vld [vmem:[%s0 + $0x3c] sm:$0xf]
  %v39 = vld [vmem:[%s0 + $0x40] sm:$0xf]
  %v40 = vld [vmem:[%s0 + $0x44] sm:$0xf]
  %v41 = vld [vmem:[%s0 + $0x48] sm:$0xf]
  %v42 = vld [vmem:[%s0 + $0x4c] sm:$0xf]
  %v43 = vld [vmem:[%s0 + $0x50] sm:$0xf]
  %v44 = vld [vmem:[%s0 + $0x54] sm:$0xf]
  %v45 = vld [vmem:[%s0 + $0x58] sm:$0xf]
  %v46 = vld [vmem:[%s0 + $0x5c] sm:$0xf]
  %v47 = vld [vmem:[%s0 + $0x60] sm:$0xf]
  %v48 = vld [vmem:[%s0 + $0x64] sm:$0xf]
  %v49 = vld [vmem:[%s0 + $0x68] sm:$0xf]
  %v50 = vld [vmem:[%s0 + $0x6c] sm:$0xf]
  %v51 = vld [vmem:[%s0 + $0x70] sm:$0xf]
  %v52 = vld [vmem:[%s0 + $0x74] sm:$0xf]
  %v53 = vld [vmem:[%s0 + $0x78] sm:$0xf]
  %v54 = vld [vmem:[%s0 + $0x7c] sm:$0xf]
  %v55 = vld [vmem:[%s0 + $0x80] sm:$0xf]
  %v56 = vld [vmem:[%s0 + $0x84] sm:$0xf]
  %v57 = vld [vmem:[%s0 + $0x88] sm:$0xf]
  %v58 = vld [vmem:[%s0 + $0x8c] sm:$0xf]
  %v59 = vld [vmem:[%s0 + $0x90] sm:$0xf]
  %v60 = vld [vmem:[%s0 + $0x94] sm:$0xf]
  %v61 = vld [vmem:[%s0 + $0x98] sm:$0xf]
  %v62 = vld [vmem:[%s0 + $0x9c] sm:$0xf]
  %v63 = vld [vmem:[%s0 + $0xa0] sm:$0xf]
  %v64 = vld [vmem:[%s0 + $0xa4] sm:$0xf]
  %v65 = vld [vmem:[%s0 + $0xa8] sm:$0xf]
  %v66 = vld [vmem:[%s0 + $0xac] sm:$0xf]
  %v67 = vld [vmem:[%s0 + $0xb0] sm:$0xf]
  %v68 = vld [vmem:[%s0 + $0xb4] sm:$0xf]
  %v69 = vld [vmem:[%s0 + $0xb8] sm:$0xf]
  %v70 = vld [vmem:[%s0 + $0xbc] sm:$0xf]
  %v71 = vld [vmem:[%s0 + $0xc0] sm:$0xf]
  %v72 = vld [vmem:[%s0 + $0xc4] sm:$0xf]
  %v73 = vld [vmem:[%s0 + $0xc8] sm:$0xf]
  %v74 = vld [vmem:[%s0 + $0xcc] sm:$0xf]
  %v75 = vld [vmem:[%s0 + $0xd0] sm:$0xf]
  %v76 = vld [vmem:[%s0 + $0xd4] sm:$0xf]
  %v77 = vld [vmem:[%s0 + $0xd8] sm:$0xf]
  %v78 = vld [vmem:[%s0 + $0xdc] sm:$0xf]
  %v79 = vld [vmem:[%s0 + $0xe0] sm:$0xf]
  %v80 = vld [vmem:[%s0 + $0xe4] sm:$0xf]
  %v81 = vld [vmem:[%s0 + $0xe8] sm:$0xf]
  %v82 = vld [vmem:[%s0 + $0xec] sm:$0xf]
  %v83 = vld [vmem:[%s0 + $0xf0] sm:$0xf]
  %v84 = vld [vmem:[%s0 + $0xf4] sm:$0xf]
  %v85 = vld [vmem:[%s0 + $0xf8] sm:$0xf]
  %v86 = vld [vmem:[%s0 + $0xfc] sm:$0xf]
  %v87 = vunpack.c.l.bf16 %v23
  %v88 = vunpack.c.l.bf16 %v24
  %v89 = vunpack.c.l.bf16 %v25
  %v90 = vunpack.c.l.bf16 %v26
  %v91 = vunpack.c.l.bf16 %v27
  %v92 = vunpack.c.l.bf16 %v28
  %v93 = vunpack.c.l.bf16 %v29
  %v94 = vunpack.c.l.bf16 %v30
  %v95 = vunpack.c.l.bf16 %v31
  %v96 = vunpack.c.l.bf16 %v32
  %v97 = vunpack.c.l.bf16 %v33
  %v98 = vunpack.c.l.bf16 %v34
  %v99 = vunpack.c.l.bf16 %v35
  %v100 = vunpack.c.l.bf16 %v36
  %v101 = vunpack.c.l.bf16 %v37
  %v102 = vunpack.c.l.bf16 %v38
  %v103 = vunpack.c.l.bf16 %v39
  %v104 = vunpack.c.l.bf16 %v40
  %v105 = vunpack.c.l.bf16 %v41
  %v106 = vunpack.c.l.bf16 %v42
  %v107 = vunpack.c.l.bf16 %v43
  %v108 = vunpack.c.l.bf16 %v44
  %v109 = vunpack.c.l.bf16 %v45
  %v110 = vunpack.c.l.bf16 %v46
  %v111 = vunpack.c.l.bf16 %v47
  %v112 = vunpack.c.l.bf16 %v48
  %v113 = vunpack.c.l.bf16 %v49
  %v114 = vunpack.c.l.bf16 %v50
  %v115 = vunpack.c.l.bf16 %v51
  %v116 = vunpack.c.l.bf16 %v52
  %v117 = vunpack.c.l.bf16 %v53
  %v118 = vunpack.c.l.bf16 %v54
  %v119 = vunpack.c.l.bf16 %v55
  %v120 = vunpack.c.l.bf16 %v56
  %v121 = vunpack.c.l.bf16 %v57
  %v122 = vunpack.c.l.bf16 %v58
  %v123 = vunpack.c.l.bf16 %v59
  %v124 = vunpack.c.l.bf16 %v60
  %v125 = vunpack.c.l.bf16 %v61
  %v126 = vunpack.c.l.bf16 %v62
  %v127 = vunpack.c.l.bf16 %v63
  %v128 = vunpack.c.l.bf16 %v64
  %v129 = vunpack.c.l.bf16 %v65
  %v130 = vunpack.c.l.bf16 %v66
  %v131 = vunpack.c.l.bf16 %v67
  %v132 = vunpack.c.l.bf16 %v68
  %v133 = vunpack.c.l.bf16 %v69
  %v134 = vunpack.c.l.bf16 %v70
  %v135 = vunpack.c.l.bf16 %v71
  %v136 = vunpack.c.l.bf16 %v72
  %v137 = vunpack.c.l.bf16 %v73
  %v138 = vunpack.c.l.bf16 %v74
  %v139 = vunpack.c.l.bf16 %v75
  %v140 = vunpack.c.l.bf16 %v76
  %v141 = vunpack.c.l.bf16 %v77
  %v142 = vunpack.c.l.bf16 %v78
  %v143 = vunpack.c.l.bf16 %v79
  %v144 = vunpack.c.l.bf16 %v80
  %v145 = vunpack.c.l.bf16 %v81
  %v146 = vunpack.c.l.bf16 %v82
  %v147 = vunpack.c.l.bf16 %v83
  %v148 = vunpack.c.l.bf16 %v84
  %v149 = vunpack.c.l.bf16 %v85
  %v150 = vunpack.c.l.bf16 %v86
  %v151 = vld [vmem:[%s2] sm:$0x1]
  %v153 = vlaneseq
  %v154 = vshrl.u32 %v153, 7
  %v155 = vsub.s32 0, %v154
  %v156 = vrot.slane %v151, %v155
  %v158 = vmul.f32 %v87, %v156
  %v159 = vmul.f32 %v88, %v156
  %v160 = vmul.f32 %v89, %v156
  %v161 = vmul.f32 %v90, %v156
  %v162 = vmul.f32 %v91, %v156
  %v163 = vmul.f32 %v92, %v156
  %v164 = vmul.f32 %v93, %v156
  %v165 = vmul.f32 %v94, %v156
  %v166 = vmul.f32 %v95, %v156
  %v167 = vmul.f32 %v96, %v156
  %v168 = vmul.f32 %v97, %v156
  %v169 = vmul.f32 %v98, %v156
  %v170 = vmul.f32 %v99, %v156
  %v171 = vmul.f32 %v100, %v156
  %v172 = vmul.f32 %v101, %v156
  %v173 = vmul.f32 %v102, %v156
  %v174 = vmul.f32 %v103, %v156
  %v175 = vmul.f32 %v104, %v156
  %v176 = vmul.f32 %v105, %v156
  %v177 = vmul.f32 %v106, %v156
  %v178 = vmul.f32 %v107, %v156
  %v179 = vmul.f32 %v108, %v156
  %v180 = vmul.f32 %v109, %v156
  %v181 = vmul.f32 %v110, %v156
  %v182 = vmul.f32 %v111, %v156
  %v183 = vmul.f32 %v112, %v156
  %v184 = vmul.f32 %v113, %v156
  %v185 = vmul.f32 %v114, %v156
  %v186 = vmul.f32 %v115, %v156
  %v187 = vmul.f32 %v116, %v156
  %v188 = vmul.f32 %v117, %v156
  %v189 = vmul.f32 %v118, %v156
  %v190 = vmul.f32 %v119, %v156
  %v191 = vmul.f32 %v120, %v156
  %v192 = vmul.f32 %v121, %v156
  %v193 = vmul.f32 %v122, %v156
  %v194 = vmul.f32 %v123, %v156
  %v195 = vmul.f32 %v124, %v156
  %v196 = vmul.f32 %v125, %v156
  %v197 = vmul.f32 %v126, %v156
  %v198 = vmul.f32 %v127, %v156
  %v199 = vmul.f32 %v128, %v156
  %v200 = vmul.f32 %v129, %v156
  %v201 = vmul.f32 %v130, %v156
  %v202 = vmul.f32 %v131, %v156
  %v203 = vmul.f32 %v132, %v156
  %v204 = vmul.f32 %v133, %v156
  %v205 = vmul.f32 %v134, %v156
  %v206 = vmul.f32 %v135, %v156
  %v207 = vmul.f32 %v136, %v156
  %v208 = vmul.f32 %v137, %v156
  %v209 = vmul.f32 %v138, %v156
  %v210 = vmul.f32 %v139, %v156
  %v211 = vmul.f32 %v140, %v156
  %v212 = vmul.f32 %v141, %v156
  %v213 = vmul.f32 %v142, %v156
  %v214 = vmul.f32 %v143, %v156
  %v215 = vmul.f32 %v144, %v156
  %v216 = vmul.f32 %v145, %v156
  %v217 = vmul.f32 %v146, %v156
  %v218 = vmul.f32 %v147, %v156
  %v219 = vmul.f32 %v148, %v156
  %v220 = vmul.f32 %v149, %v156
  %v221 = vmul.f32 %v150, %v156
  %v222 = vld [vmem:[%s3] sm:$0x1]
  %v224 = vlaneseq
  %v225 = vshrl.u32 %v224, 7
  %v226 = vsub.s32 0, %v225
  %v227 = vrot.slane %v222, %v226
  %v229 = vadd.f32 %v158, %v227
  %v230 = vadd.f32 %v159, %v227
  %v231 = vadd.f32 %v160, %v227
  %v232 = vadd.f32 %v161, %v227
  %v233 = vadd.f32 %v162, %v227
  %v234 = vadd.f32 %v163, %v227
  %v235 = vadd.f32 %v164, %v227
  %v236 = vadd.f32 %v165, %v227
  %v237 = vadd.f32 %v166, %v227
  %v238 = vadd.f32 %v167, %v227
  %v239 = vadd.f32 %v168, %v227
  %v240 = vadd.f32 %v169, %v227
  %v241 = vadd.f32 %v170, %v227
  %v242 = vadd.f32 %v171, %v227
  %v243 = vadd.f32 %v172, %v227
  %v244 = vadd.f32 %v173, %v227
  %v245 = vadd.f32 %v174, %v227
  %v246 = vadd.f32 %v175, %v227
  %v247 = vadd.f32 %v176, %v227
  %v248 = vadd.f32 %v177, %v227
  %v249 = vadd.f32 %v178, %v227
  %v250 = vadd.f32 %v179, %v227
  %v251 = vadd.f32 %v180, %v227
  %v252 = vadd.f32 %v181, %v227
  %v253 = vadd.f32 %v182, %v227
  %v254 = vadd.f32 %v183, %v227
  %v255 = vadd.f32 %v184, %v227
  %v256 = vadd.f32 %v185, %v227
  %v257 = vadd.f32 %v186, %v227
  %v258 = vadd.f32 %v187, %v227
  %v259 = vadd.f32 %v188, %v227
  %v260 = vadd.f32 %v189, %v227
  %v261 = vadd.f32 %v190, %v227
  %v262 = vadd.f32 %v191, %v227
  %v263 = vadd.f32 %v192, %v227
  %v264 = vadd.f32 %v193, %v227
  %v265 = vadd.f32 %v194, %v227
  %v266 = vadd.f32 %v195, %v227
  %v267 = vadd.f32 %v196, %v227
  %v268 = vadd.f32 %v197, %v227
  %v269 = vadd.f32 %v198, %v227
  %v270 = vadd.f32 %v199, %v227
  %v271 = vadd.f32 %v200, %v227
  %v272 = vadd.f32 %v201, %v227
  %v273 = vadd.f32 %v202, %v227
  %v274 = vadd.f32 %v203, %v227
  %v275 = vadd.f32 %v204, %v227
  %v276 = vadd.f32 %v205, %v227
  %v277 = vadd.f32 %v206, %v227
  %v278 = vadd.f32 %v207, %v227
  %v279 = vadd.f32 %v208, %v227
  %v280 = vadd.f32 %v209, %v227
  %v281 = vadd.f32 %v210, %v227
  %v282 = vadd.f32 %v211, %v227
  %v283 = vadd.f32 %v212, %v227
  %v284 = vadd.f32 %v213, %v227
  %v285 = vadd.f32 %v214, %v227
  %v286 = vadd.f32 %v215, %v227
  %v287 = vadd.f32 %v216, %v227
  %v288 = vadd.f32 %v217, %v227
  %v289 = vadd.f32 %v218, %v227
  %v290 = vadd.f32 %v219, %v227
  %v291 = vadd.f32 %v220, %v227
  %v292 = vadd.f32 %v221, %v227
  %v293 = vld [vmem:[%s1] sm:$0xf]
  %v294 = vld [vmem:[%s1 + $0x4] sm:$0xf]
  %v295 = vld [vmem:[%s1 + $0x8] sm:$0xf]
  %v296 = vld [vmem:[%s1 + $0xc] sm:$0xf]
  %v297 = vld [vmem:[%s1 + $0x10] sm:$0xf]
  %v298 = vld [vmem:[%s1 + $0x14] sm:$0xf]
  %v299 = vld [vmem:[%s1 + $0x18] sm:$0xf]
  %v300 = vld [vmem:[%s1 + $0x1c] sm:$0xf]
  %v301 = vld [vmem:[%s1 + $0x20] sm:$0xf]
  %v302 = vld [vmem:[%s1 + $0x24] sm:$0xf]
  %v303 = vld [vmem:[%s1 + $0x28] sm:$0xf]
  %v304 = vld [vmem:[%s1 + $0x2c] sm:$0xf]
  %v305 = vld [vmem:[%s1 + $0x30] sm:$0xf]
  %v306 = vld [vmem:[%s1 + $0x34] sm:$0xf]
  %v307 = vld [vmem:[%s1 + $0x38] sm:$0xf]
  %v308 = vld [vmem:[%s1 + $0x3c] sm:$0xf]
  %v309 = vld [vmem:[%s1 + $0x40] sm:$0xf]
  %v310 = vld [vmem:[%s1 + $0x44] sm:$0xf]
  %v311 = vld [vmem:[%s1 + $0x48] sm:$0xf]
  %v312 = vld [vmem:[%s1 + $0x4c] sm:$0xf]
  %v313 = vld [vmem:[%s1 + $0x50] sm:$0xf]
  %v314 = vld [vmem:[%s1 + $0x54] sm:$0xf]
  %v315 = vld [vmem:[%s1 + $0x58] sm:$0xf]
  %v316 = vld [vmem:[%s1 + $0x5c] sm:$0xf]
  %v317 = vld [vmem:[%s1 + $0x60] sm:$0xf]
  %v318 = vld [vmem:[%s1 + $0x64] sm:$0xf]
  %v319 = vld [vmem:[%s1 + $0x68] sm:$0xf]
  %v320 = vld [vmem:[%s1 + $0x6c] sm:$0xf]
  %v321 = vld [vmem:[%s1 + $0x70] sm:$0xf]
  %v322 = vld [vmem:[%s1 + $0x74] sm:$0xf]
  %v323 = vld [vmem:[%s1 + $0x78] sm:$0xf]
  %v324 = vld [vmem:[%s1 + $0x7c] sm:$0xf]
  %v325 = vld [vmem:[%s1 + $0x80] sm:$0xf]
  %v326 = vld [vmem:[%s1 + $0x84] sm:$0xf]
  %v327 = vld [vmem:[%s1 + $0x88] sm:$0xf]
  %v328 = vld [vmem:[%s1 + $0x8c] sm:$0xf]
  %v329 = vld [vmem:[%s1 + $0x90] sm:$0xf]
  %v330 = vld [vmem:[%s1 + $0x94] sm:$0xf]
  %v331 = vld [vmem:[%s1 + $0x98] sm:$0xf]
  %v332 = vld [vmem:[%s1 + $0x9c] sm:$0xf]
  %v333 = vld [vmem:[%s1 + $0xa0] sm:$0xf]
  %v334 = vld [vmem:[%s1 + $0xa4] sm:$0xf]
  %v335 = vld [vmem:[%s1 + $0xa8] sm:$0xf]
  %v336 = vld [vmem:[%s1 + $0xac] sm:$0xf]
  %v337 = vld [vmem:[%s1 + $0xb0] sm:$0xf]
  %v338 = vld [vmem:[%s1 + $0xb4] sm:$0xf]
  %v339 = vld [vmem:[%s1 + $0xb8] sm:$0xf]
  %v340 = vld [vmem:[%s1 + $0xbc] sm:$0xf]
  %v341 = vld [vmem:[%s1 + $0xc0] sm:$0xf]
  %v342 = vld [vmem:[%s1 + $0xc4] sm:$0xf]
  %v343 = vld [vmem:[%s1 + $0xc8] sm:$0xf]
  %v344 = vld [vmem:[%s1 + $0xcc] sm:$0xf]
  %v345 = vld [vmem:[%s1 + $0xd0] sm:$0xf]
  %v346 = vld [vmem:[%s1 + $0xd4] sm:$0xf]
  %v347 = vld [vmem:[%s1 + $0xd8] sm:$0xf]
  %v348 = vld [vmem:[%s1 + $0xdc] sm:$0xf]
  %v349 = vld [vmem:[%s1 + $0xe0] sm:$0xf]
  %v350 = vld [vmem:[%s1 + $0xe4] sm:$0xf]
  %v351 = vld [vmem:[%s1 + $0xe8] sm:$0xf]
  %v352 = vld [vmem:[%s1 + $0xec] sm:$0xf]
  %v353 = vld [vmem:[%s1 + $0xf0] sm:$0xf]
  %v354 = vld [vmem:[%s1 + $0xf4] sm:$0xf]
  %v355 = vld [vmem:[%s1 + $0xf8] sm:$0xf]
  %v356 = vld [vmem:[%s1 + $0xfc] sm:$0xf]
  %v357 = vunpack.c.l.bf16 %v293
  %v358 = vunpack.c.l.bf16 %v294
  %v359 = vunpack.c.l.bf16 %v295
  %v360 = vunpack.c.l.bf16 %v296
  %v361 = vunpack.c.l.bf16 %v297
  %v362 = vunpack.c.l.bf16 %v298
  %v363 = vunpack.c.l.bf16 %v299
  %v364 = vunpack.c.l.bf16 %v300
  %v365 = vunpack.c.l.bf16 %v301
  %v366 = vunpack.c.l.bf16 %v302
  %v367 = vunpack.c.l.bf16 %v303
  %v368 = vunpack.c.l.bf16 %v304
  %v369 = vunpack.c.l.bf16 %v305
  %v370 = vunpack.c.l.bf16 %v306
  %v371 = vunpack.c.l.bf16 %v307
  %v372 = vunpack.c.l.bf16 %v308
  %v373 = vunpack.c.l.bf16 %v309
  %v374 = vunpack.c.l.bf16 %v310
  %v375 = vunpack.c.l.bf16 %v311
  %v376 = vunpack.c.l.bf16 %v312
  %v377 = vunpack.c.l.bf16 %v313
  %v378 = vunpack.c.l.bf16 %v314
  %v379 = vunpack.c.l.bf16 %v315
  %v380 = vunpack.c.l.bf16 %v316
  %v381 = vunpack.c.l.bf16 %v317
  %v382 = vunpack.c.l.bf16 %v318
  %v383 = vunpack.c.l.bf16 %v319
  %v384 = vunpack.c.l.bf16 %v320
  %v385 = vunpack.c.l.bf16 %v321
  %v386 = vunpack.c.l.bf16 %v322
  %v387 = vunpack.c.l.bf16 %v323
  %v388 = vunpack.c.l.bf16 %v324
  %v389 = vunpack.c.l.bf16 %v325
  %v390 = vunpack.c.l.bf16 %v326
  %v391 = vunpack.c.l.bf16 %v327
  %v392 = vunpack.c.l.bf16 %v328
  %v393 = vunpack.c.l.bf16 %v329
  %v394 = vunpack.c.l.bf16 %v330
  %v395 = vunpack.c.l.bf16 %v331
  %v396 = vunpack.c.l.bf16 %v332
  %v397 = vunpack.c.l.bf16 %v333
  %v398 = vunpack.c.l.bf16 %v334
  %v399 = vunpack.c.l.bf16 %v335
  %v400 = vunpack.c.l.bf16 %v336
  %v401 = vunpack.c.l.bf16 %v337
  %v402 = vunpack.c.l.bf16 %v338
  %v403 = vunpack.c.l.bf16 %v339
  %v404 = vunpack.c.l.bf16 %v340
  %v405 = vunpack.c.l.bf16 %v341
  %v406 = vunpack.c.l.bf16 %v342
  %v407 = vunpack.c.l.bf16 %v343
  %v408 = vunpack.c.l.bf16 %v344
  %v409 = vunpack.c.l.bf16 %v345
  %v410 = vunpack.c.l.bf16 %v346
  %v411 = vunpack.c.l.bf16 %v347
  %v412 = vunpack.c.l.bf16 %v348
  %v413 = vunpack.c.l.bf16 %v349
  %v414 = vunpack.c.l.bf16 %v350
  %v415 = vunpack.c.l.bf16 %v351
  %v416 = vunpack.c.l.bf16 %v352
  %v417 = vunpack.c.l.bf16 %v353
  %v418 = vunpack.c.l.bf16 %v354
  %v419 = vunpack.c.l.bf16 %v355
  %v420 = vunpack.c.l.bf16 %v356
  %v421 = vld [vmem:[%s4] sm:$0x1]
  %v423 = vlaneseq
  %v424 = vshrl.u32 %v423, 7
  %v425 = vsub.s32 0, %v424
  %v426 = vrot.slane %v421, %v425
  %v428 = vmul.f32 %v357, %v426
  %v429 = vmul.f32 %v358, %v426
  %v430 = vmul.f32 %v359, %v426
  %v431 = vmul.f32 %v360, %v426
  %v432 = vmul.f32 %v361, %v426
  %v433 = vmul.f32 %v362, %v426
  %v434 = vmul.f32 %v363, %v426
  %v435 = vmul.f32 %v364, %v426
  %v436 = vmul.f32 %v365, %v426
  %v437 = vmul.f32 %v366, %v426
  %v438 = vmul.f32 %v367, %v426
  %v439 = vmul.f32 %v368, %v426
  %v440 = vmul.f32 %v369, %v426
  %v441 = vmul.f32 %v370, %v426
  %v442 = vmul.f32 %v371, %v426
  %v443 = vmul.f32 %v372, %v426
  %v444 = vmul.f32 %v373, %v426
  %v445 = vmul.f32 %v374, %v426
  %v446 = vmul.f32 %v375, %v426
  %v447 = vmul.f32 %v376, %v426
  %v448 = vmul.f32 %v377, %v426
  %v449 = vmul.f32 %v378, %v426
  %v450 = vmul.f32 %v379, %v426
  %v451 = vmul.f32 %v380, %v426
  %v452 = vmul.f32 %v381, %v426
  %v453 = vmul.f32 %v382, %v426
  %v454 = vmul.f32 %v383, %v426
  %v455 = vmul.f32 %v384, %v426
  %v456 = vmul.f32 %v385, %v426
  %v457 = vmul.f32 %v386, %v426
  %v458 = vmul.f32 %v387, %v426
  %v459 = vmul.f32 %v388, %v426
  %v460 = vmul.f32 %v389, %v426
  %v461 = vmul.f32 %v390, %v426
  %v462 = vmul.f32 %v391, %v426
  %v463 = vmul.f32 %v392, %v426
  %v464 = vmul.f32 %v393, %v426
  %v465 = vmul.f32 %v394, %v426
  %v466 = vmul.f32 %v395, %v426
  %v467 = vmul.f32 %v396, %v426
  %v468 = vmul.f32 %v397, %v426
  %v469 = vmul.f32 %v398, %v426
  %v470 = vmul.f32 %v399, %v426
  %v471 = vmul.f32 %v400, %v426
  %v472 = vmul.f32 %v401, %v426
  %v473 = vmul.f32 %v402, %v426
  %v474 = vmul.f32 %v403, %v426
  %v475 = vmul.f32 %v404, %v426
  %v476 = vmul.f32 %v405, %v426
  %v477 = vmul.f32 %v406, %v426
  %v478 = vmul.f32 %v407, %v426
  %v479 = vmul.f32 %v408, %v426
  %v480 = vmul.f32 %v409, %v426
  %v481 = vmul.f32 %v410, %v426
  %v482 = vmul.f32 %v411, %v426
  %v483 = vmul.f32 %v412, %v426
  %v484 = vmul.f32 %v413, %v426
  %v485 = vmul.f32 %v414, %v426
  %v486 = vmul.f32 %v415, %v426
  %v487 = vmul.f32 %v416, %v426
  %v488 = vmul.f32 %v417, %v426
  %v489 = vmul.f32 %v418, %v426
  %v490 = vmul.f32 %v419, %v426
  %v491 = vmul.f32 %v420, %v426
  %v492 = vadd.f32 %v229, %v428
  %v493 = vadd.f32 %v230, %v429
  %v494 = vadd.f32 %v231, %v430
  %v495 = vadd.f32 %v232, %v431
  %v496 = vadd.f32 %v233, %v432
  %v497 = vadd.f32 %v234, %v433
  %v498 = vadd.f32 %v235, %v434
  %v499 = vadd.f32 %v236, %v435
  %v500 = vadd.f32 %v237, %v436
  %v501 = vadd.f32 %v238, %v437
  %v502 = vadd.f32 %v239, %v438
  %v503 = vadd.f32 %v240, %v439
  %v504 = vadd.f32 %v241, %v440
  %v505 = vadd.f32 %v242, %v441
  %v506 = vadd.f32 %v243, %v442
  %v507 = vadd.f32 %v244, %v443
  %v508 = vadd.f32 %v245, %v444
  %v509 = vadd.f32 %v246, %v445
  %v510 = vadd.f32 %v247, %v446
  %v511 = vadd.f32 %v248, %v447
  %v512 = vadd.f32 %v249, %v448
  %v513 = vadd.f32 %v250, %v449
  %v514 = vadd.f32 %v251, %v450
  %v515 = vadd.f32 %v252, %v451
  %v516 = vadd.f32 %v253, %v452
  %v517 = vadd.f32 %v254, %v453
  %v518 = vadd.f32 %v255, %v454
  %v519 = vadd.f32 %v256, %v455
  %v520 = vadd.f32 %v257, %v456
  %v521 = vadd.f32 %v258, %v457
  %v522 = vadd.f32 %v259, %v458
  %v523 = vadd.f32 %v260, %v459
  %v524 = vadd.f32 %v261, %v460
  %v525 = vadd.f32 %v262, %v461
  %v526 = vadd.f32 %v263, %v462
  %v527 = vadd.f32 %v264, %v463
  %v528 = vadd.f32 %v265, %v464
  %v529 = vadd.f32 %v266, %v465
  %v530 = vadd.f32 %v267, %v466
  %v531 = vadd.f32 %v268, %v467
  %v532 = vadd.f32 %v269, %v468
  %v533 = vadd.f32 %v270, %v469
  %v534 = vadd.f32 %v271, %v470
  %v535 = vadd.f32 %v272, %v471
  %v536 = vadd.f32 %v273, %v472
  %v537 = vadd.f32 %v274, %v473
  %v538 = vadd.f32 %v275, %v474
  %v539 = vadd.f32 %v276, %v475
  %v540 = vadd.f32 %v277, %v476
  %v541 = vadd.f32 %v278, %v477
  %v542 = vadd.f32 %v279, %v478
  %v543 = vadd.f32 %v280, %v479
  %v544 = vadd.f32 %v281, %v480
  %v545 = vadd.f32 %v282, %v481
  %v546 = vadd.f32 %v283, %v482
  %v547 = vadd.f32 %v284, %v483
  %v548 = vadd.f32 %v285, %v484
  %v549 = vadd.f32 %v286, %v485
  %v550 = vadd.f32 %v287, %v486
  %v551 = vadd.f32 %v288, %v487
  %v552 = vadd.f32 %v289, %v488
  %v553 = vadd.f32 %v290, %v489
  %v554 = vadd.f32 %v291, %v490
  %v555 = vadd.f32 %v292, %v491
  %v556 = vld [vmem:[%s5] sm:$0x1]
  %v558 = vlaneseq
  %v559 = vshrl.u32 %v558, 7
  %v560 = vsub.s32 0, %v559
  %v561 = vrot.slane %v556, %v560
  %v563 = vadd.f32 %v492, %v561
  %v564 = vadd.f32 %v493, %v561
  %v565 = vadd.f32 %v494, %v561
  %v566 = vadd.f32 %v495, %v561
  %v567 = vadd.f32 %v496, %v561
  %v568 = vadd.f32 %v497, %v561
  %v569 = vadd.f32 %v498, %v561
  %v570 = vadd.f32 %v499, %v561
  %v571 = vadd.f32 %v500, %v561
  %v572 = vadd.f32 %v501, %v561
  %v573 = vadd.f32 %v502, %v561
  %v574 = vadd.f32 %v503, %v561
  %v575 = vadd.f32 %v504, %v561
  %v576 = vadd.f32 %v505, %v561
  %v577 = vadd.f32 %v506, %v561
  %v578 = vadd.f32 %v507, %v561
  %v579 = vadd.f32 %v508, %v561
  %v580 = vadd.f32 %v509, %v561
  %v581 = vadd.f32 %v510, %v561
  %v582 = vadd.f32 %v511, %v561
  %v583 = vadd.f32 %v512, %v561
  %v584 = vadd.f32 %v513, %v561
  %v585 = vadd.f32 %v514, %v561
  %v586 = vadd.f32 %v515, %v561
  %v587 = vadd.f32 %v516, %v561
  %v588 = vadd.f32 %v517, %v561
  %v589 = vadd.f32 %v518, %v561
  %v590 = vadd.f32 %v519, %v561
  %v591 = vadd.f32 %v520, %v561
  %v592 = vadd.f32 %v521, %v561
  %v593 = vadd.f32 %v522, %v561
  %v594 = vadd.f32 %v523, %v561
  %v595 = vadd.f32 %v524, %v561
  %v596 = vadd.f32 %v525, %v561
  %v597 = vadd.f32 %v526, %v561
  %v598 = vadd.f32 %v527, %v561
  %v599 = vadd.f32 %v528, %v561
  %v600 = vadd.f32 %v529, %v561
  %v601 = vadd.f32 %v530, %v561
  %v602 = vadd.f32 %v531, %v561
  %v603 = vadd.f32 %v532, %v561
  %v604 = vadd.f32 %v533, %v561
  %v605 = vadd.f32 %v534, %v561
  %v606 = vadd.f32 %v535, %v561
  %v607 = vadd.f32 %v536, %v561
  %v608 = vadd.f32 %v537, %v561
  %v609 = vadd.f32 %v538, %v561
  %v610 = vadd.f32 %v539, %v561
  %v611 = vadd.f32 %v540, %v561
  %v612 = vadd.f32 %v541, %v561
  %v613 = vadd.f32 %v542, %v561
  %v614 = vadd.f32 %v543, %v561
  %v615 = vadd.f32 %v544, %v561
  %v616 = vadd.f32 %v545, %v561
  %v617 = vadd.f32 %v546, %v561
  %v618 = vadd.f32 %v547, %v561
  %v619 = vadd.f32 %v548, %v561
  %v620 = vadd.f32 %v549, %v561
  %v621 = vadd.f32 %v550, %v561
  %v622 = vadd.f32 %v551, %v561
  %v623 = vadd.f32 %v552, %v561
  %v624 = vadd.f32 %v553, %v561
  %v625 = vadd.f32 %v554, %v561
  %v626 = vadd.f32 %v555, %v561
  %v627 = vmax.f32 %v563, 0.0
  %v628 = vmax.f32 %v564, 0.0
  %v629 = vmax.f32 %v565, 0.0
  %v630 = vmax.f32 %v566, 0.0
  %v631 = vmax.f32 %v567, 0.0
  %v632 = vmax.f32 %v568, 0.0
  %v633 = vmax.f32 %v569, 0.0
  %v634 = vmax.f32 %v570, 0.0
  %v635 = vmax.f32 %v571, 0.0
  %v636 = vmax.f32 %v572, 0.0
  %v637 = vmax.f32 %v573, 0.0
  %v638 = vmax.f32 %v574, 0.0
  %v639 = vmax.f32 %v575, 0.0
  %v640 = vmax.f32 %v576, 0.0
  %v641 = vmax.f32 %v577, 0.0
  %v642 = vmax.f32 %v578, 0.0
  %v643 = vmax.f32 %v579, 0.0
  %v644 = vmax.f32 %v580, 0.0
  %v645 = vmax.f32 %v581, 0.0
  %v646 = vmax.f32 %v582, 0.0
  %v647 = vmax.f32 %v583, 0.0
  %v648 = vmax.f32 %v584, 0.0
  %v649 = vmax.f32 %v585, 0.0
  %v650 = vmax.f32 %v586, 0.0
  %v651 = vmax.f32 %v587, 0.0
  %v652 = vmax.f32 %v588, 0.0
  %v653 = vmax.f32 %v589, 0.0
  %v654 = vmax.f32 %v590, 0.0
  %v655 = vmax.f32 %v591, 0.0
  %v656 = vmax.f32 %v592, 0.0
  %v657 = vmax.f32 %v593, 0.0
  %v658 = vmax.f32 %v594, 0.0
  %v659 = vmax.f32 %v595, 0.0
  %v660 = vmax.f32 %v596, 0.0
  %v661 = vmax.f32 %v597, 0.0
  %v662 = vmax.f32 %v598, 0.0
  %v663 = vmax.f32 %v599, 0.0
  %v664 = vmax.f32 %v600, 0.0
  %v665 = vmax.f32 %v601, 0.0
  %v666 = vmax.f32 %v602, 0.0
  %v667 = vmax.f32 %v603, 0.0
  %v668 = vmax.f32 %v604, 0.0
  %v669 = vmax.f32 %v605, 0.0
  %v670 = vmax.f32 %v606, 0.0
  %v671 = vmax.f32 %v607, 0.0
  %v672 = vmax.f32 %v608, 0.0
  %v673 = vmax.f32 %v609, 0.0
  %v674 = vmax.f32 %v610, 0.0
  %v675 = vmax.f32 %v611, 0.0
  %v676 = vmax.f32 %v612, 0.0
  %v677 = vmax.f32 %v613, 0.0
  %v678 = vmax.f32 %v614, 0.0
  %v679 = vmax.f32 %v615, 0.0
  %v680 = vmax.f32 %v616, 0.0
  %v681 = vmax.f32 %v617, 0.0
  %v682 = vmax.f32 %v618, 0.0
  %v683 = vmax.f32 %v619, 0.0
  %v684 = vmax.f32 %v620, 0.0
  %v685 = vmax.f32 %v621, 0.0
  %v686 = vmax.f32 %v622, 0.0
  %v687 = vmax.f32 %v623, 0.0
  %v688 = vmax.f32 %v624, 0.0
  %v689 = vmax.f32 %v625, 0.0
  %v690 = vmax.f32 %v626, 0.0
  %691 = vst [vmem:[%s6] sm:$0xff] %v627
  %692 = vst [vmem:[%s6 + $0x8] sm:$0xff] %v628
  %693 = vst [vmem:[%s6 + $0x10] sm:$0xff] %v629
  %694 = vst [vmem:[%s6 + $0x18] sm:$0xff] %v630
  %695 = vst [vmem:[%s6 + $0x20] sm:$0xff] %v631
  %696 = vst [vmem:[%s6 + $0x28] sm:$0xff] %v632
  %697 = vst [vmem:[%s6 + $0x30] sm:$0xff] %v633
  %698 = vst [vmem:[%s6 + $0x38] sm:$0xff] %v634
  %699 = vst [vmem:[%s6 + $0x40] sm:$0xff] %v635
  %700 = vst [vmem:[%s6 + $0x48] sm:$0xff] %v636
  %701 = vst [vmem:[%s6 + $0x50] sm:$0xff] %v637
  %702 = vst [vmem:[%s6 + $0x58] sm:$0xff] %v638
  %703 = vst [vmem:[%s6 + $0x60] sm:$0xff] %v639
  %704 = vst [vmem:[%s6 + $0x68] sm:$0xff] %v640
  %705 = vst [vmem:[%s6 + $0x70] sm:$0xff] %v641
  %706 = vst [vmem:[%s6 + $0x78] sm:$0xff] %v642
  %707 = vst [vmem:[%s6 + $0x80] sm:$0xff] %v643
  %708 = vst [vmem:[%s6 + $0x88] sm:$0xff] %v644
  %709 = vst [vmem:[%s6 + $0x90] sm:$0xff] %v645
  %710 = vst [vmem:[%s6 + $0x98] sm:$0xff] %v646
  %711 = vst [vmem:[%s6 + $0xa0] sm:$0xff] %v647
  %712 = vst [vmem:[%s6 + $0xa8] sm:$0xff] %v648
  %713 = vst [vmem:[%s6 + $0xb0] sm:$0xff] %v649
  %714 = vst [vmem:[%s6 + $0xb8] sm:$0xff] %v650
  %715 = vst [vmem:[%s6 + $0xc0] sm:$0xff] %v651
  %716 = vst [vmem:[%s6 + $0xc8] sm:$0xff] %v652
  %717 = vst [vmem:[%s6 + $0xd0] sm:$0xff] %v653
  %718 = vst [vmem:[%s6 + $0xd8] sm:$0xff] %v654
  %719 = vst [vmem:[%s6 + $0xe0] sm:$0xff] %v655
  %720 = vst [vmem:[%s6 + $0xe8] sm:$0xff] %v656
  %721 = vst [vmem:[%s6 + $0xf0] sm:$0xff] %v657
  %722 = vst [vmem:[%s6 + $0xf8] sm:$0xff] %v658
  %723 = vst [vmem:[%s6 + $0x100] sm:$0xff] %v659
  %724 = vst [vmem:[%s6 + $0x108] sm:$0xff] %v660
  %725 = vst [vmem:[%s6 + $0x110] sm:$0xff] %v661
  %726 = vst [vmem:[%s6 + $0x118] sm:$0xff] %v662
  %727 = vst [vmem:[%s6 + $0x120] sm:$0xff] %v663
  %728 = vst [vmem:[%s6 + $0x128] sm:$0xff] %v664
  %729 = vst [vmem:[%s6 + $0x130] sm:$0xff] %v665
  %730 = vst [vmem:[%s6 + $0x138] sm:$0xff] %v666
  %731 = vst [vmem:[%s6 + $0x140] sm:$0xff] %v667
  %732 = vst [vmem:[%s6 + $0x148] sm:$0xff] %v668
  %733 = vst [vmem:[%s6 + $0x150] sm:$0xff] %v669
  %734 = vst [vmem:[%s6 + $0x158] sm:$0xff] %v670
  %735 = vst [vmem:[%s6 + $0x160] sm:$0xff] %v671
  %736 = vst [vmem:[%s6 + $0x168] sm:$0xff] %v672
  %737 = vst [vmem:[%s6 + $0x170] sm:$0xff] %v673
  %738 = vst [vmem:[%s6 + $0x178] sm:$0xff] %v674
  %739 = vst [vmem:[%s6 + $0x180] sm:$0xff] %v675
  %740 = vst [vmem:[%s6 + $0x188] sm:$0xff] %v676
  %741 = vst [vmem:[%s6 + $0x190] sm:$0xff] %v677
  %742 = vst [vmem:[%s6 + $0x198] sm:$0xff] %v678
  %743 = vst [vmem:[%s6 + $0x1a0] sm:$0xff] %v679
  %744 = vst [vmem:[%s6 + $0x1a8] sm:$0xff] %v680
  %745 = vst [vmem:[%s6 + $0x1b0] sm:$0xff] %v681
  %746 = vst [vmem:[%s6 + $0x1b8] sm:$0xff] %v682
  %747 = vst [vmem:[%s6 + $0x1c0] sm:$0xff] %v683
  %748 = vst [vmem:[%s6 + $0x1c8] sm:$0xff] %v684
  %749 = vst [vmem:[%s6 + $0x1d0] sm:$0xff] %v685
  %750 = vst [vmem:[%s6 + $0x1d8] sm:$0xff] %v686
  %751 = vst [vmem:[%s6 + $0x1e0] sm:$0xff] %v687
  %752 = vst [vmem:[%s6 + $0x1e8] sm:$0xff] %v688
  %753 = vst [vmem:[%s6 + $0x1f0] sm:$0xff] %v689
  %754 = vst [vmem:[%s6 + $0x1f8] sm:$0xff] %v690
  // Predicated region
  $region26: #{bottleneck_forward.7} parent=0 // pred_check
    _
  $region27: #{bottleneck_forward.7} parent=0 // pred_check_branch
    %756 = sbr.rel (0) target = $region29
  $region28: #{bottleneck_forward.7} parent=0 // pred_region
    _
  $region29: #{bottleneck_forward.7} parent=0 // pred_fallthru
    _
  // Predicated region
  $region30: #{bottleneck_forward.7} parent=0 // pred_check
    _
  $region31: #{bottleneck_forward.7} parent=0 // pred_check_branch
    %758 = sbr.rel (0) target = $region33
  $region32: #{bottleneck_forward.7} parent=0 // pred_region
    _
  $region33: #{bottleneck_forward.7} parent=0 // pred_fallthru
    _

// kernel: bottleneck_forward.4
$region0: #{bottleneck_forward.4}
  #allocation0 [shape = 'u32[]', space=smem, size = 0x4, offset = 0x4, fixed_abs, tag = 'smem constant byte address 0x4 - core index']
  #allocation1 [shape = 'u32[144,128]{1,0:T(1,128)}', space=vmem, size = 0x12000, scoped, tag = 'internal scratch']
  %s0 = inlined_call_operand.vmem [shape: bf16[512,128], index: 0, kind: input, shape index: {}]
  %s1 = inlined_call_operand.vmem [shape: bf16[128,256], index: 1, kind: input, shape index: {}]
  %s2 = inlined_call_operand.vmem [shape: bf16[512,128], index: 2, kind: output, shape index: {0}]
  %s3 = inlined_call_operand.vmem [shape: f32[8,256], index: 3, kind: output, shape index: {1}]
  %s4 = inlined_call_operand.vmem [shape: f32[8,256], index: 4, kind: output, shape index: {2}]
  %5 = xla_tuple %s2, %s3, %s4
  %s6 = sld [smem:[#allocation0]]
  $region34: #{bottleneck_forward.4} parent=0
    _
  %s8 = ssub.s32 1, %s6
  %s9 = scalar_select 0, %s8, %s6
  // Predicated region
  $region2: #{bottleneck_forward.4} parent=0 // pred_check
    _
  $region3: #{bottleneck_forward.4} parent=0 // pred_check_branch
    %11 = sbr.rel (0) target = $region5
  $region4: #{bottleneck_forward.4} parent=0 // pred_region
    _
  $region5: #{bottleneck_forward.4} parent=0 // pred_fallthru
    _
  // Predicated region
  $region6: #{bottleneck_forward.4} parent=0 // pred_check
    _
  $region7: #{bottleneck_forward.4} parent=0 // pred_check_branch
    %13 = sbr.rel (0) target = $region9
  $region8: #{bottleneck_forward.4} parent=0 // pred_region
    _
  $region9: #{bottleneck_forward.4} parent=0 // pred_fallthru
    _
  %v15 = vld [vmem:[%s0] sm:$0xf]
  %v16 = vld [vmem:[%s0 + $0x4] sm:$0xf]
  %v17 = vld [vmem:[%s0 + $0x8] sm:$0xf]
  %v18 = vld [vmem:[%s0 + $0xc] sm:$0xf]
  %v19 = vld [vmem:[%s0 + $0x10] sm:$0xf]
  %v20 = vld [vmem:[%s0 + $0x14] sm:$0xf]
  %v21 = vld [vmem:[%s0 + $0x18] sm:$0xf]
  %v22 = vld [vmem:[%s0 + $0x1c] sm:$0xf]
  %v23 = vld [vmem:[%s0 + $0x20] sm:$0xf]
  %v24 = vld [vmem:[%s0 + $0x24] sm:$0xf]
  %v25 = vld [vmem:[%s0 + $0x28] sm:$0xf]
  %v26 = vld [vmem:[%s0 + $0x2c] sm:$0xf]
  %v27 = vld [vmem:[%s0 + $0x30] sm:$0xf]
  %v28 = vld [vmem:[%s0 + $0x34] sm:$0xf]
  %v29 = vld [vmem:[%s0 + $0x38] sm:$0xf]
  %v30 = vld [vmem:[%s0 + $0x3c] sm:$0xf]
  %v31 = vld [vmem:[%s0 + $0x40] sm:$0xf]
  %v32 = vld [vmem:[%s0 + $0x44] sm:$0xf]
  %v33 = vld [vmem:[%s0 + $0x48] sm:$0xf]
  %v34 = vld [vmem:[%s0 + $0x4c] sm:$0xf]
  %v35 = vld [vmem:[%s0 + $0x50] sm:$0xf]
  %v36 = vld [vmem:[%s0 + $0x54] sm:$0xf]
  %v37 = vld [vmem:[%s0 + $0x58] sm:$0xf]
  %v38 = vld [vmem:[%s0 + $0x5c] sm:$0xf]
  %v39 = vld [vmem:[%s0 + $0x60] sm:$0xf]
  %v40 = vld [vmem:[%s0 + $0x64] sm:$0xf]
  %v41 = vld [vmem:[%s0 + $0x68] sm:$0xf]
  %v42 = vld [vmem:[%s0 + $0x6c] sm:$0xf]
  %v43 = vld [vmem:[%s0 + $0x70] sm:$0xf]
  %v44 = vld [vmem:[%s0 + $0x74] sm:$0xf]
  %v45 = vld [vmem:[%s0 + $0x78] sm:$0xf]
  %v46 = vld [vmem:[%s0 + $0x7c] sm:$0xf]
  %v47 = vld [vmem:[%s0 + $0x80] sm:$0xf]
  %v48 = vld [vmem:[%s0 + $0x84] sm:$0xf]
  %v49 = vld [vmem:[%s0 + $0x88] sm:$0xf]
  %v50 = vld [vmem:[%s0 + $0x8c] sm:$0xf]
  %v51 = vld [vmem:[%s0 + $0x90] sm:$0xf]
  %v52 = vld [vmem:[%s0 + $0x94] sm:$0xf]
  %v53 = vld [vmem:[%s0 + $0x98] sm:$0xf]
  %v54 = vld [vmem:[%s0 + $0x9c] sm:$0xf]
  %v55 = vld [vmem:[%s0 + $0xa0] sm:$0xf]
  %v56 = vld [vmem:[%s0 + $0xa4] sm:$0xf]
  %v57 = vld [vmem:[%s0 + $0xa8] sm:$0xf]
  %v58 = vld [vmem:[%s0 + $0xac] sm:$0xf]
  %v59 = vld [vmem:[%s0 + $0xb0] sm:$0xf]
  %v60 = vld [vmem:[%s0 + $0xb4] sm:$0xf]
  %v61 = vld [vmem:[%s0 + $0xb8] sm:$0xf]
  %v62 = vld [vmem:[%s0 + $0xbc] sm:$0xf]
  %v63 = vld [vmem:[%s0 + $0xc0] sm:$0xf]
  %v64 = vld [vmem:[%s0 + $0xc4] sm:$0xf]
  %v65 = vld [vmem:[%s0 + $0xc8] sm:$0xf]
  %v66 = vld [vmem:[%s0 + $0xcc] sm:$0xf]
  %v67 = vld [vmem:[%s0 + $0xd0] sm:$0xf]
  %v68 = vld [vmem:[%s0 + $0xd4] sm:$0xf]
  %v69 = vld [vmem:[%s0 + $0xd8] sm:$0xf]
  %v70 = vld [vmem:[%s0 + $0xdc] sm:$0xf]
  %v71 = vld [vmem:[%s0 + $0xe0] sm:$0xf]
  %v72 = vld [vmem:[%s0 + $0xe4] sm:$0xf]
  %v73 = vld [vmem:[%s0 + $0xe8] sm:$0xf]
  %v74 = vld [vmem:[%s0 + $0xec] sm:$0xf]
  %v75 = vld [vmem:[%s0 + $0xf0] sm:$0xf]
  %v76 = vld [vmem:[%s0 + $0xf4] sm:$0xf]
  %v77 = vld [vmem:[%s0 + $0xf8] sm:$0xf]
  %v78 = vld [vmem:[%s0 + $0xfc] sm:$0xf]
  %v79 = vld [vmem:[%s1] sm:$0xff]
  %v80 = vld [vmem:[%s1 + $0x8] sm:$0xff]
  %v81 = vld [vmem:[%s1 + $0x10] sm:$0xff]
  %v82 = vld [vmem:[%s1 + $0x18] sm:$0xff]
  %v83 = vld [vmem:[%s1 + $0x20] sm:$0xff]
  %v84 = vld [vmem:[%s1 + $0x28] sm:$0xff]
  %v85 = vld [vmem:[%s1 + $0x30] sm:$0xff]
  %v86 = vld [vmem:[%s1 + $0x38] sm:$0xff]
  %v87 = vld [vmem:[%s1 + $0x40] sm:$0xff]
  %v88 = vld [vmem:[%s1 + $0x48] sm:$0xff]
  %v89 = vld [vmem:[%s1 + $0x50] sm:$0xff]
  %v90 = vld [vmem:[%s1 + $0x58] sm:$0xff]
  %v91 = vld [vmem:[%s1 + $0x60] sm:$0xff]
  %v92 = vld [vmem:[%s1 + $0x68] sm:$0xff]
  %v93 = vld [vmem:[%s1 + $0x70] sm:$0xff]
  %v94 = vld [vmem:[%s1 + $0x78] sm:$0xff]
  %v159 = vunpack.c.l.b16 %v15
  %v160 = vunpack.c.l.b16 %v16
  %v161 = vunpack.c.l.b16 %v17
  %v162 = vunpack.c.l.b16 %v18
  %v163 = vunpack.c.l.b16 %v19
  %v164 = vunpack.c.l.b16 %v20
  %v165 = vunpack.c.l.b16 %v21
  %v166 = vunpack.c.l.b16 %v22
  %v167 = vunpack.c.l.b16 %v23
  %v168 = vunpack.c.l.b16 %v24
  %v169 = vunpack.c.l.b16 %v25
  %v170 = vunpack.c.l.b16 %v26
  %v171 = vunpack.c.l.b16 %v27
  %v172 = vunpack.c.l.b16 %v28
  %v173 = vunpack.c.l.b16 %v29
  %v174 = vunpack.c.l.b16 %v30
  %v175 = vunpack.c.l.b16 %v31
  %v176 = vunpack.c.l.b16 %v32
  %v177 = vunpack.c.l.b16 %v33
  %v178 = vunpack.c.l.b16 %v34
  %v179 = vunpack.c.l.b16 %v35
  %v180 = vunpack.c.l.b16 %v36
  %v181 = vunpack.c.l.b16 %v37
  %v182 = vunpack.c.l.b16 %v38
  %v183 = vunpack.c.l.b16 %v39
  %v184 = vunpack.c.l.b16 %v40
  %v185 = vunpack.c.l.b16 %v41
  %v186 = vunpack.c.l.b16 %v42
  %v187 = vunpack.c.l.b16 %v43
  %v188 = vunpack.c.l.b16 %v44
  %v189 = vunpack.c.l.b16 %v45
  %v190 = vunpack.c.l.b16 %v46
  %v191 = vunpack.c.l.b16 %v47
  %v192 = vunpack.c.l.b16 %v48
  %v193 = vunpack.c.l.b16 %v49
  %v194 = vunpack.c.l.b16 %v50
  %v195 = vunpack.c.l.b16 %v51
  %v196 = vunpack.c.l.b16 %v52
  %v197 = vunpack.c.l.b16 %v53
  %v198 = vunpack.c.l.b16 %v54
  %v199 = vunpack.c.l.b16 %v55
  %v200 = vunpack.c.l.b16 %v56
  %v201 = vunpack.c.l.b16 %v57
  %v202 = vunpack.c.l.b16 %v58
  %v203 = vunpack.c.l.b16 %v59
  %v204 = vunpack.c.l.b16 %v60
  %v205 = vunpack.c.l.b16 %v61
  %v206 = vunpack.c.l.b16 %v62
  %v207 = vunpack.c.l.b16 %v63
  %v208 = vunpack.c.l.b16 %v64
  %v209 = vunpack.c.l.b16 %v65
  %v210 = vunpack.c.l.b16 %v66
  %v211 = vunpack.c.l.b16 %v67
  %v212 = vunpack.c.l.b16 %v68
  %v213 = vunpack.c.l.b16 %v69
  %v214 = vunpack.c.l.b16 %v70
  %v215 = vunpack.c.l.b16 %v71
  %v216 = vunpack.c.l.b16 %v72
  %v217 = vunpack.c.l.b16 %v73
  %v218 = vunpack.c.l.b16 %v74
  %v219 = vunpack.c.l.b16 %v75
  %v220 = vunpack.c.l.b16 %v76
  %v221 = vunpack.c.l.b16 %v77
  %v222 = vunpack.c.l.b16 %v78
  %v223 = vpack.c.b16 %v160, %v159
  %v224 = vpack.c.b16 %v162, %v161
  %v225 = vpack.c.b16 %v164, %v163
  %v226 = vpack.c.b16 %v166, %v165
  %v227 = vpack.c.b16 %v168, %v167
  %v228 = vpack.c.b16 %v170, %v169
  %v229 = vpack.c.b16 %v172, %v171
  %v230 = vpack.c.b16 %v174, %v173
  %v231 = vpack.c.b16 %v176, %v175
  %v232 = vpack.c.b16 %v178, %v177
  %v233 = vpack.c.b16 %v180, %v179
  %v234 = vpack.c.b16 %v182, %v181
  %v235 = vpack.c.b16 %v184, %v183
  %v236 = vpack.c.b16 %v186, %v185
  %v237 = vpack.c.b16 %v188, %v187
  %v238 = vpack.c.b16 %v190, %v189
  %v239 = vpack.c.b16 %v192, %v191
  %v240 = vpack.c.b16 %v194, %v193
  %v241 = vpack.c.b16 %v196, %v195
  %v242 = vpack.c.b16 %v198, %v197
  %v243 = vpack.c.b16 %v200, %v199
  %v244 = vpack.c.b16 %v202, %v201
  %v245 = vpack.c.b16 %v204, %v203
  %v246 = vpack.c.b16 %v206, %v205
  %v247 = vpack.c.b16 %v208, %v207
  %v248 = vpack.c.b16 %v210, %v209
  %v249 = vpack.c.b16 %v212, %v211
  %v250 = vpack.c.b16 %v214, %v213
  %v251 = vpack.c.b16 %v216, %v215
  %v252 = vpack.c.b16 %v218, %v217
  %v253 = vpack.c.b16 %v220, %v219
  %v254 = vpack.c.b16 %v222, %v221
  %v303 = vunpack.c.l.b16 %v79
  %v304 = vunpack.c.h.b16 %v79
  %v305 = vunpack.c.l.b16 %v80
  %v306 = vunpack.c.h.b16 %v80
  %v307 = vunpack.c.l.b16 %v81
  %v308 = vunpack.c.h.b16 %v81
  %v309 = vunpack.c.l.b16 %v82
  %v310 = vunpack.c.h.b16 %v82
  %v311 = vunpack.c.l.b16 %v83
  %v312 = vunpack.c.h.b16 %v83
  %v313 = vunpack.c.l.b16 %v84
  %v314 = vunpack.c.h.b16 %v84
  %v315 = vunpack.c.l.b16 %v85
  %v316 = vunpack.c.h.b16 %v85
  %v317 = vunpack.c.l.b16 %v86
  %v318 = vunpack.c.h.b16 %v86
  %v319 = vunpack.c.l.b16 %v87
  %v320 = vunpack.c.h.b16 %v87
  %v321 = vunpack.c.l.b16 %v88
  %v322 = vunpack.c.h.b16 %v88
  %v323 = vunpack.c.l.b16 %v89
  %v324 = vunpack.c.h.b16 %v89
  %v325 = vunpack.c.l.b16 %v90
  %v326 = vunpack.c.h.b16 %v90
  %v327 = vunpack.c.l.b16 %v91
  %v328 = vunpack.c.h.b16 %v91
  %v329 = vunpack.c.l.b16 %v92
  %v330 = vunpack.c.h.b16 %v92
  %v331 = vunpack.c.l.b16 %v93
  %v332 = vunpack.c.h.b16 %v93
  %v333 = vunpack.c.l.b16 %v94
  %v334 = vunpack.c.h.b16 %v94
  %v335 = vpack.c.b16 %v305, %v303
  %v336 = vpack.c.b16 %v306, %v304
  %v337 = vpack.c.b16 %v309, %v307
  %v338 = vpack.c.b16 %v310, %v308
  %v339 = vpack.c.b16 %v313, %v311
  %v340 = vpack.c.b16 %v314, %v312
  %v341 = vpack.c.b16 %v317, %v315
  %v342 = vpack.c.b16 %v318, %v316
  %v343 = vpack.c.b16 %v321, %v319
  %v344 = vpack.c.b16 %v322, %v320
  %v345 = vpack.c.b16 %v325, %v323
  %v346 = vpack.c.b16 %v326, %v324
  %v347 = vpack.c.b16 %v329, %v327
  %v348 = vpack.c.b16 %v330, %v328
  %v349 = vpack.c.b16 %v333, %v331
  %v350 = vpack.c.b16 %v334, %v332
  %367 = vmatprep.subr.bf16.mxu0 %v336
  %368 = vmatpush1.bf16.msra.mxu0 %v335
  %369 = vmatprep.subr.bf16.mxu0 %v338
  %370 = vmatpush1.bf16.msra.mxu0 %v337
  %371 = vmatprep.subr.bf16.mxu0 %v340
  %372 = vmatpush1.bf16.msra.mxu0 %v339
  %373 = vmatprep.subr.bf16.mxu0 %v342
  %374 = vmatpush1.bf16.msra.mxu0 %v341
  %375 = vmatprep.subr.bf16.mxu0 %v344
  %376 = vmatpush1.bf16.msra.mxu0 %v343
  %377 = vmatprep.subr.bf16.mxu0 %v346
  %378 = vmatpush1.bf16.msra.mxu0 %v345
  %379 = vmatprep.subr.bf16.mxu0 %v348
  %380 = vmatpush1.bf16.msra.mxu0 %v347
  %381 = vmatprep.subr.bf16.mxu0 %v350
  %382 = vmatpush1.bf16.msra.mxu0 %v349
  %383 = vmatprep.subr.bf16.mxu0 0
  %384 = vmatpush1.bf16.msra.mxu0 0
  %385 = vmatprep.subr.bf16.mxu0 0
  %386 = vmatpush1.bf16.msra.mxu0 0
  %387 = vmatprep.subr.bf16.mxu0 0
  %388 = vmatpush1.bf16.msra.mxu0 0
  %389 = vmatprep.subr.bf16.mxu0 0
  %390 = vmatpush1.bf16.msra.mxu0 0
  %391 = vmatprep.subr.bf16.mxu0 0
  %392 = vmatpush1.bf16.msra.mxu0 0
  %393 = vmatprep.subr.bf16.mxu0 0
  %394 = vmatpush1.bf16.msra.mxu0 0
  %395 = vmatprep.subr.bf16.mxu0 0
  %396 = vmatpush1.bf16.msra.mxu0 0
  %397 = vmatprep.subr.bf16.mxu0 0
  %398 = vmatpush1.bf16.msra.mxu0 0
  %399 = vmatprep.mubr.bf16.mxu0 0
  %400 = vmatmul.mubr.bf16.gmra.mrb[0].mxu0 %v223
  %v401 = vpop.f32.mrb[0].mxu0
  %v402 = vadd.f32 0.0, %v401
  %v403 = vpop.f32.mrb[0].mxu0
  %v404 = vadd.f32 0.0, %v403
  %v405 = vpop.f32.mrb[0].mxu0
  %v406 = vadd.f32 0.0, %v405
  %v407 = vpop.f32.mrb[0].mxu0
  %v408 = vadd.f32 0.0, %v407
  %409 = vmatprep.mubr.bf16.mxu0 0
  %410 = vmatmul.mubr.bf16.gmra.mrb[0].mxu0 %v224
  %v411 = vpop.f32.mrb[0].mxu0
  %v412 = vadd.f32 0.0, %v411
  %v413 = vpop.f32.mrb[0].mxu0
  %v414 = vadd.f32 0.0, %v413
  %v415 = vpop.f32.mrb[0].mxu0
  %v416 = vadd.f32 0.0, %v415
  %v417 = vpop.f32.mrb[0].mxu0
  %v418 = vadd.f32 0.0, %v417
  %419 = vmatprep.mubr.bf16.mxu0 0
  %420 = vmatmul.mubr.bf16.gmra.mrb[0].mxu0 %v225
  %v421 = vpop.f32.mrb[0].mxu0
  %v422 = vadd.f32 0.0, %v421
  %v423 = vpop.f32.mrb[0].mxu0
  %v424 = vadd.f32 0.0, %v423
  %v425 = vpop.f32.mrb[0].mxu0
  %v426 = vadd.f32 0.0, %v425
  %v427 = vpop.f32.mrb[0].mxu0
  %v428 = vadd.f32 0.0, %v427
  %429 = vmatprep.mubr.bf16.mxu0 0
  %430 = vmatmul.mubr.bf16.gmra.mrb[0].mxu0 %v226
  %v431 = vpop.f32.mrb[0].mxu0
  %v432 = vadd.f32 0.0, %v431
  %v433 = vpop.f32.mrb[0].mxu0
  %v434 = vadd.f32 0.0, %v433
  %v435 = vpop.f32.mrb[0].mxu0
  %v436 = vadd.f32 0.0, %v435
  %v437 = vpop.f32.mrb[0].mxu0
  %v438 = vadd.f32 0.0, %v437
  %439 = vmatprep.mubr.bf16.mxu0 0
  %440 = vmatmul.mubr.bf16.gmra.mrb[0].mxu0 %v227
  %v441 = vpop.f32.mrb[0].mxu0
  %v442 = vadd.f32 0.0, %v441
  %v443 = vpop.f32.mrb[0].mxu0
  %v444 = vadd.f32 0.0, %v443
  %v445 = vpop.f32.mrb[0].mxu0
  %v446 = vadd.f32 0.0, %v445
  %v447 = vpop.f32.mrb[0].mxu0
  %v448 = vadd.f32 0.0, %v447
  %449 = vmatprep.mubr.bf16.mxu0 0
  %450 = vmatmul.mubr.bf16.gmra.mrb[0].mxu0 %v228
  %v451 = vpop.f32.mrb[0].mxu0
  %v452 = vadd.f32 0.0, %v451
  %v453 = vpop.f32.mrb[0].mxu0
  %v454 = vadd.f32 0.0, %v453
  %v455 = vpop.f32.mrb[0].mxu0
  %v456 = vadd.f32 0.0, %v455
  %v457 = vpop.f32.mrb[0].mxu0
  %v458 = vadd.f32 0.0, %v457
  %459 = vmatprep.mubr.bf16.mxu0 0
  %460 = vmatmul.mubr.bf16.gmra.mrb[0].mxu0 %v229
  %v461 = vpop.f32.mrb[0].mxu0
  %v462 = vadd.f32 0.0, %v461
  %v463 = vpop.f32.mrb[0].mxu0
  %v464 = vadd.f32 0.0, %v463
  %v465 = vpop.f32.mrb[0].mxu0
  %v466 = vadd.f32 0.0, %v465
  %v467 = vpop.f32.mrb[0].mxu0
  %v468 = vadd.f32 0.0, %v467
  %469 = vmatprep.mubr.bf16.mxu0 0
  %470 = vmatmul.mubr.bf16.gmra.mrb[0].mxu0 %v230
  %v471 = vpop.f32.mrb[0].mxu0
  %v472 = vadd.f32 0.0, %v471
  %v473 = vpop.f32.mrb[0].mxu0
  %v474 = vadd.f32 0.0, %v473
  %v475 = vpop.f32.mrb[0].mxu0
  %v476 = vadd.f32 0.0, %v475
  %v477 = vpop.f32.mrb[0].mxu0
  %v478 = vadd.f32 0.0, %v477
  %479 = vmatprep.mubr.bf16.mxu0 0
  %480 = vmatmul.mubr.bf16.gmra.mrb[0].mxu0 %v231
  %v481 = vpop.f32.mrb[0].mxu0
  %v482 = vadd.f32 0.0, %v481
  %v483 = vpop.f32.mrb[0].mxu0
  %v484 = vadd.f32 0.0, %v483
  %v485 = vpop.f32.mrb[0].mxu0
  %v486 = vadd.f32 0.0, %v485
  %v487 = vpop.f32.mrb[0].mxu0
  %v488 = vadd.f32 0.0, %v487
  %489 = vmatprep.mubr.bf16.mxu0 0
  %490 = vmatmul.mubr.bf16.gmra.mrb[0].mxu0 %v232
  %v491 = vpop.f32.mrb[0].mxu0
  %v492 = vadd.f32 0.0, %v491
  %v493 = vpop.f32.mrb[0].mxu0
  %v494 = vadd.f32 0.0, %v493
  %v495 = vpop.f32.mrb[0].mxu0
  %v496 = vadd.f32 0.0, %v495
  %v497 = vpop.f32.mrb[0].mxu0
  %v498 = vadd.f32 0.0, %v497
  %499 = vmatprep.mubr.bf16.mxu0 0
  %500 = vmatmul.mubr.bf16.gmra.mrb[0].mxu0 %v233
  %v501 = vpop.f32.mrb[0].mxu0
  %v502 = vadd.f32 0.0, %v501
  %v503 = vpop.f32.mrb[0].mxu0
  %v504 = vadd.f32 0.0, %v503
  %v505 = vpop.f32.mrb[0].mxu0
  %v506 = vadd.f32 0.0, %v505
  %v507 = vpop.f32.mrb[0].mxu0
  %v508 = vadd.f32 0.0, %v507
  %509 = vmatprep.mubr.bf16.mxu0 0
  %510 = vmatmul.mubr.bf16.gmra.mrb[0].mxu0 %v234
  %v511 = vpop.f32.mrb[0].mxu0
  %v512 = vadd.f32 0.0, %v511
  %v513 = vpop.f32.mrb[0].mxu0
  %v514 = vadd.f32 0.0, %v513
  %v515 = vpop.f32.mrb[0].mxu0
  %v516 = vadd.f32 0.0, %v515
  %v517 = vpop.f32.mrb[0].mxu0
  %v518 = vadd.f32 0.0, %v517
  %519 = vmatprep.mubr.bf16.mxu0 0
  %520 = vmatmul.mubr.bf16.gmra.mrb[0].mxu0 %v235
  %v521 = vpop.f32.mrb[0].mxu0
  %v522 = vadd.f32 0.0, %v521
  %v523 = vpop.f32.mrb[0].mxu0
  %v524 = vadd.f32 0.0, %v523
  %v525 = vpop.f32.mrb[0].mxu0
  %v526 = vadd.f32 0.0, %v525
  %v527 = vpop.f32.mrb[0].mxu0
  %v528 = vadd.f32 0.0, %v527
  %529 = vmatprep.mubr.bf16.mxu0 0
  %530 = vmatmul.mubr.bf16.gmra.mrb[0].mxu0 %v236
  %v531 = vpop.f32.mrb[0].mxu0
  %v532 = vadd.f32 0.0, %v531
  %v533 = vpop.f32.mrb[0].mxu0
  %v534 = vadd.f32 0.0, %v533
  %v535 = vpop.f32.mrb[0].mxu0
  %v536 = vadd.f32 0.0, %v535
  %v537 = vpop.f32.mrb[0].mxu0
  %v538 = vadd.f32 0.0, %v537
  %539 = vmatprep.mubr.bf16.mxu0 0
  %540 = vmatmul.mubr.bf16.gmra.mrb[0].mxu0 %v237
  %v541 = vpop.f32.mrb[0].mxu0
  %v542 = vadd.f32 0.0, %v541
  %v543 = vpop.f32.mrb[0].mxu0
  %v544 = vadd.f32 0.0, %v543
  %v545 = vpop.f32.mrb[0].mxu0
  %v546 = vadd.f32 0.0, %v545
  %v547 = vpop.f32.mrb[0].mxu0
  %v548 = vadd.f32 0.0, %v547
  %549 = vmatprep.mubr.bf16.mxu0 0
  %550 = vmatmul.mubr.bf16.gmra.mrb[0].mxu0 %v238
  %v551 = vpop.f32.mrb[0].mxu0
  %v552 = vadd.f32 0.0, %v551
  %v553 = vpop.f32.mrb[0].mxu0
  %v554 = vadd.f32 0.0, %v553
  %v555 = vpop.f32.mrb[0].mxu0
  %v556 = vadd.f32 0.0, %v555
  %v557 = vpop.f32.mrb[0].mxu0
  %v558 = vadd.f32 0.0, %v557
  %559 = vmatprep.mubr.bf16.mxu0 0
  %560 = vmatmul.mubr.bf16.gmra.mrb[0].mxu0 %v239
  %v561 = vpop.f32.mrb[0].mxu0
  %v562 = vadd.f32 0.0, %v561
  %v563 = vpop.f32.mrb[0].mxu0
  %v564 = vadd.f32 0.0, %v563
  %v565 = vpop.f32.mrb[0].mxu0
  %v566 = vadd.f32 0.0, %v565
  %v567 = vpop.f32.mrb[0].mxu0
  %v568 = vadd.f32 0.0, %v567
  %569 = vmatprep.mubr.bf16.mxu0 0
  %570 = vmatmul.mubr.bf16.gmra.mrb[0].mxu0 %v240
  %v571 = vpop.f32.mrb[0].mxu0
  %v572 = vadd.f32 0.0, %v571
  %v573 = vpop.f32.mrb[0].mxu0
  %v574 = vadd.f32 0.0, %v573
  %v575 = vpop.f32.mrb[0].mxu0
  %v576 = vadd.f32 0.0, %v575
  %v577 = vpop.f32.mrb[0].mxu0
  %v578 = vadd.f32 0.0, %v577
  %579 = vmatprep.mubr.bf16.mxu0 0
  %580 = vmatmul.mubr.bf16.gmra.mrb[0].mxu0 %v241
  %v581 = vpop.f32.mrb[0].mxu0
  %v582 = vadd.f32 0.0, %v581
  %v583 = vpop.f32.mrb[0].mxu0
  %v584 = vadd.f32 0.0, %v583
  %v585 = vpop.f32.mrb[0].mxu0
  %v586 = vadd.f32 0.0, %v585
  %v587 = vpop.f32.mrb[0].mxu0
  %v588 = vadd.f32 0.0, %v587
  %589 = vmatprep.mubr.bf16.mxu0 0
  %590 = vmatmul.mubr.bf16.gmra.mrb[0].mxu0 %v242
  %v591 = vpop.f32.mrb[0].mxu0
  %v592 = vadd.f32 0.0, %v591
  %v593 = vpop.f32.mrb[0].mxu0
  %v594 = vadd.f32 0.0, %v593
  %v595 = vpop.f32.mrb[0].mxu0
  %v596 = vadd.f32 0.0, %v595
  %v597 = vpop.f32.mrb[0].mxu0
  %v598 = vadd.f32 0.0, %v597
  %599 = vmatprep.mubr.bf16.mxu0 0
  %600 = vmatmul.mubr.bf16.gmra.mrb[0].mxu0 %v243
  %v601 = vpop.f32.mrb[0].mxu0
  %v602 = vadd.f32 0.0, %v601
  %v603 = vpop.f32.mrb[0].mxu0
  %v604 = vadd.f32 0.0, %v603
  %v605 = vpop.f32.mrb[0].mxu0
  %v606 = vadd.f32 0.0, %v605
  %v607 = vpop.f32.mrb[0].mxu0
  %v608 = vadd.f32 0.0, %v607
  %609 = vmatprep.mubr.bf16.mxu0 0
  %610 = vmatmul.mubr.bf16.gmra.mrb[0].mxu0 %v244
  %v611 = vpop.f32.mrb[0].mxu0
  %v612 = vadd.f32 0.0, %v611
  %v613 = vpop.f32.mrb[0].mxu0
  %v614 = vadd.f32 0.0, %v613
  %v615 = vpop.f32.mrb[0].mxu0
  %v616 = vadd.f32 0.0, %v615
  %v617 = vpop.f32.mrb[0].mxu0
  %v618 = vadd.f32 0.0, %v617
  %619 = vmatprep.mubr.bf16.mxu0 0
  %620 = vmatmul.mubr.bf16.gmra.mrb[0].mxu0 %v245
  %v621 = vpop.f32.mrb[0].mxu0
  %v622 = vadd.f32 0.0, %v621
  %v623 = vpop.f32.mrb[0].mxu0
  %v624 = vadd.f32 0.0, %v623
  %v625 = vpop.f32.mrb[0].mxu0
  %v626 = vadd.f32 0.0, %v625
  %v627 = vpop.f32.mrb[0].mxu0
  %v628 = vadd.f32 0.0, %v627
  %629 = vmatprep.mubr.bf16.mxu0 0
  %630 = vmatmul.mubr.bf16.gmra.mrb[0].mxu0 %v246
  %v631 = vpop.f32.mrb[0].mxu0
  %v632 = vadd.f32 0.0, %v631
  %v633 = vpop.f32.mrb[0].mxu0
  %v634 = vadd.f32 0.0, %v633
  %v635 = vpop.f32.mrb[0].mxu0
  %v636 = vadd.f32 0.0, %v635
  %v637 = vpop.f32.mrb[0].mxu0
  %v638 = vadd.f32 0.0, %v637
  %639 = vmatprep.mubr.bf16.mxu0 0
  %640 = vmatmul.mubr.bf16.gmra.mrb[0].mxu0 %v247
  %v641 = vpop.f32.mrb[0].mxu0
  %v642 = vadd.f32 0.0, %v641
  %v643 = vpop.f32.mrb[0].mxu0
  %v644 = vadd.f32 0.0, %v643
  %v645 = vpop.f32.mrb[0].mxu0
  %v646 = vadd.f32 0.0, %v645
  %v647 = vpop.f32.mrb[0].mxu0
  %v648 = vadd.f32 0.0, %v647
  %649 = vmatprep.mubr.bf16.mxu0 0
  %650 = vmatmul.mubr.bf16.gmra.mrb[0].mxu0 %v248
  %v651 = vpop.f32.mrb[0].mxu0
  %v652 = vadd.f32 0.0, %v651
  %v653 = vpop.f32.mrb[0].mxu0
  %v654 = vadd.f32 0.0, %v653
  %v655 = vpop.f32.mrb[0].mxu0
  %v656 = vadd.f32 0.0, %v655
  %v657 = vpop.f32.mrb[0].mxu0
  %v658 = vadd.f32 0.0, %v657
  %659 = vmatprep.mubr.bf16.mxu0 0
  %660 = vmatmul.mubr.bf16.gmra.mrb[0].mxu0 %v249
  %v661 = vpop.f32.mrb[0].mxu0
  %v662 = vadd.f32 0.0, %v661
  %v663 = vpop.f32.mrb[0].mxu0
  %v664 = vadd.f32 0.0, %v663
  %v665 = vpop.f32.mrb[0].mxu0
  %v666 = vadd.f32 0.0, %v665
  %v667 = vpop.f32.mrb[0].mxu0
  %v668 = vadd.f32 0.0, %v667
  %669 = vmatprep.mubr.bf16.mxu0 0
  %670 = vmatmul.mubr.bf16.gmra.mrb[0].mxu0 %v250
  %v671 = vpop.f32.mrb[0].mxu0
  %v672 = vadd.f32 0.0, %v671
  %v673 = vpop.f32.mrb[0].mxu0
  %v674 = vadd.f32 0.0, %v673
  %v675 = vpop.f32.mrb[0].mxu0
  %v676 = vadd.f32 0.0, %v675
  %v677 = vpop.f32.mrb[0].mxu0
  %v678 = vadd.f32 0.0, %v677
  %679 = vmatprep.mubr.bf16.mxu0 0
  %680 = vmatmul.mubr.bf16.gmra.mrb[0].mxu0 %v251
  %v681 = vpop.f32.mrb[0].mxu0
  %v682 = vadd.f32 0.0, %v681
  %v683 = vpop.f32.mrb[0].mxu0
  %v684 = vadd.f32 0.0, %v683
  %v685 = vpop.f32.mrb[0].mxu0
  %v686 = vadd.f32 0.0, %v685
  %v687 = vpop.f32.mrb[0].mxu0
  %v688 = vadd.f32 0.0, %v687
  %689 = vmatprep.mubr.bf16.mxu0 0
  %690 = vmatmul.mubr.bf16.gmra.mrb[0].mxu0 %v252
  %v691 = vpop.f32.mrb[0].mxu0
  %v692 = vadd.f32 0.0, %v691
  %v693 = vpop.f32.mrb[0].mxu0
  %v694 = vadd.f32 0.0, %v693
  %v695 = vpop.f32.mrb[0].mxu0
  %v696 = vadd.f32 0.0, %v695
  %v697 = vpop.f32.mrb[0].mxu0
  %v698 = vadd.f32 0.0, %v697
  %699 = vmatprep.mubr.bf16.mxu0 0
  %700 = vmatmul.mubr.bf16.gmra.mrb[0].mxu0 %v253
  %v701 = vpop.f32.mrb[0].mxu0
  %v702 = vadd.f32 0.0, %v701
  %v703 = vpop.f32.mrb[0].mxu0
  %v704 = vadd.f32 0.0, %v703
  %v705 = vpop.f32.mrb[0].mxu0
  %v706 = vadd.f32 0.0, %v705
  %v707 = vpop.f32.mrb[0].mxu0
  %v708 = vadd.f32 0.0, %v707
  %709 = vmatprep.mubr.bf16.mxu0 0
  %710 = vmatmul.mubr.bf16.gmra.mrb[0].mxu0 %v254
  %v711 = vpop.f32.mrb[0].mxu0
  %v712 = vadd.f32 0.0, %v711
  %v713 = vpop.f32.mrb[0].mxu0
  %v714 = vadd.f32 0.0, %v713
  %v715 = vpop.f32.mrb[0].mxu0
  %v716 = vadd.f32 0.0, %v715
  %v717 = vpop.f32.mrb[0].mxu0
  %v718 = vadd.f32 0.0, %v717
  %719 = vdwg.mxu0
  %v720 = vpack.c.bf16 %v408, %v404
  %v721 = vpack.c.bf16 %v418, %v414
  %v722 = vpack.c.bf16 %v428, %v424
  %v723 = vpack.c.bf16 %v438, %v434
  %v724 = vpack.c.bf16 %v448, %v444
  %v725 = vpack.c.bf16 %v458, %v454
  %v726 = vpack.c.bf16 %v468, %v464
  %v727 = vpack.c.bf16 %v478, %v474
  %v728 = vpack.c.bf16 %v488, %v484
  %v729 = vpack.c.bf16 %v498, %v494
  %v730 = vpack.c.bf16 %v508, %v504
  %v731 = vpack.c.bf16 %v518, %v514
  %v732 = vpack.c.bf16 %v528, %v524
  %v733 = vpack.c.bf16 %v538, %v534
  %v734 = vpack.c.bf16 %v548, %v544
  %v735 = vpack.c.bf16 %v558, %v554
  %v736 = vpack.c.bf16 %v568, %v564
  %v737 = vpack.c.bf16 %v578, %v574
  %v738 = vpack.c.bf16 %v588, %v584
  %v739 = vpack.c.bf16 %v598, %v594
  %v740 = vpack.c.bf16 %v608, %v604
  %v741 = vpack.c.bf16 %v618, %v614
  %v742 = vpack.c.bf16 %v628, %v624
  %v743 = vpack.c.bf16 %v638, %v634
  %v744 = vpack.c.bf16 %v648, %v644
  %v745 = vpack.c.bf16 %v658, %v654
  %v746 = vpack.c.bf16 %v668, %v664
  %v747 = vpack.c.bf16 %v678, %v674
  %v748 = vpack.c.bf16 %v688, %v684
  %v749 = vpack.c.bf16 %v698, %v694
  %v750 = vpack.c.bf16 %v708, %v704
  %v751 = vpack.c.bf16 %v718, %v714
  %v784 = vunpack.c.l.b16 %v720
  %v785 = vunpack.c.h.b16 %v720
  %v786 = vunpack.c.l.b16 %v721
  %v787 = vunpack.c.h.b16 %v721
  %v788 = vunpack.c.l.b16 %v722
  %v789 = vunpack.c.h.b16 %v722
  %v790 = vunpack.c.l.b16 %v723
  %v791 = vunpack.c.h.b16 %v723
  %v792 = vunpack.c.l.b16 %v724
  %v793 = vunpack.c.h.b16 %v724
  %v794 = vunpack.c.l.b16 %v725
  %v795 = vunpack.c.h.b16 %v725
  %v796 = vunpack.c.l.b16 %v726
  %v797 = vunpack.c.h.b16 %v726
  %v798 = vunpack.c.l.b16 %v727
  %v799 = vunpack.c.h.b16 %v727
  %v800 = vunpack.c.l.b16 %v728
  %v801 = vunpack.c.h.b16 %v728
  %v802 = vunpack.c.l.b16 %v729
  %v803 = vunpack.c.h.b16 %v729
  %v804 = vunpack.c.l.b16 %v730
  %v805 = vunpack.c.h.b16 %v730
  %v806 = vunpack.c.l.b16 %v731
  %v807 = vunpack.c.h.b16 %v731
  %v808 = vunpack.c.l.b16 %v732
  %v809 = vunpack.c.h.b16 %v732
  %v810 = vunpack.c.l.b16 %v733
  %v811 = vunpack.c.h.b16 %v733
  %v812 = vunpack.c.l.b16 %v734
  %v813 = vunpack.c.h.b16 %v734
  %v814 = vunpack.c.l.b16 %v735
  %v815 = vunpack.c.h.b16 %v735
  %v816 = vunpack.c.l.b16 %v736
  %v817 = vunpack.c.h.b16 %v736
  %v818 = vunpack.c.l.b16 %v737
  %v819 = vunpack.c.h.b16 %v737
  %v820 = vunpack.c.l.b16 %v738
  %v821 = vunpack.c.h.b16 %v738
  %v822 = vunpack.c.l.b16 %v739
  %v823 = vunpack.c.h.b16 %v739
  %v824 = vunpack.c.l.b16 %v740
  %v825 = vunpack.c.h.b16 %v740
  %v826 = vunpack.c.l.b16 %v741
  %v827 = vunpack.c.h.b16 %v741
  %v828 = vunpack.c.l.b16 %v742
  %v829 = vunpack.c.h.b16 %v742
  %v830 = vunpack.c.l.b16 %v743
  %v831 = vunpack.c.h.b16 %v743
  %v832 = vunpack.c.l.b16 %v744
  %v833 = vunpack.c.h.b16 %v744
  %v834 = vunpack.c.l.b16 %v745
  %v835 = vunpack.c.h.b16 %v745
  %v836 = vunpack.c.l.b16 %v746
  %v837 = vunpack.c.h.b16 %v746
  %v838 = vunpack.c.l.b16 %v747
  %v839 = vunpack.c.h.b16 %v747
  %v840 = vunpack.c.l.b16 %v748
  %v841 = vunpack.c.h.b16 %v748
  %v842 = vunpack.c.l.b16 %v749
  %v843 = vunpack.c.h.b16 %v749
  %v844 = vunpack.c.l.b16 %v750
  %v845 = vunpack.c.h.b16 %v750
  %v846 = vunpack.c.l.b16 %v751
  %v847 = vunpack.c.h.b16 %v751
  %v848 = vpack.c.b16 %v784, %v784
  %v849 = vpack.c.b16 %v785, %v785
  %v850 = vpack.c.b16 %v786, %v786
  %v851 = vpack.c.b16 %v787, %v787
  %v852 = vpack.c.b16 %v788, %v788
  %v853 = vpack.c.b16 %v789, %v789
  %v854 = vpack.c.b16 %v790, %v790
  %v855 = vpack.c.b16 %v791, %v791
  %v856 = vpack.c.b16 %v792, %v792
  %v857 = vpack.c.b16 %v793, %v793
  %v858 = vpack.c.b16 %v794, %v794
  %v859 = vpack.c.b16 %v795, %v795
  %v860 = vpack.c.b16 %v796, %v796
  %v861 = vpack.c.b16 %v797, %v797
  %v862 = vpack.c.b16 %v798, %v798
  %v863 = vpack.c.b16 %v799, %v799
  %v864 = vpack.c.b16 %v800, %v800
  %v865 = vpack.c.b16 %v801, %v801
  %v866 = vpack.c.b16 %v802, %v802
  %v867 = vpack.c.b16 %v803, %v803
  %v868 = vpack.c.b16 %v804, %v804
  %v869 = vpack.c.b16 %v805, %v805
  %v870 = vpack.c.b16 %v806, %v806
  %v871 = vpack.c.b16 %v807, %v807
  %v872 = vpack.c.b16 %v808, %v808
  %v873 = vpack.c.b16 %v809, %v809
  %v874 = vpack.c.b16 %v810, %v810
  %v875 = vpack.c.b16 %v811, %v811
  %v876 = vpack.c.b16 %v812, %v812
  %v877 = vpack.c.b16 %v813, %v813
  %v878 = vpack.c.b16 %v814, %v814
  %v879 = vpack.c.b16 %v815, %v815
  %v880 = vpack.c.b16 %v816, %v816
  %v881 = vpack.c.b16 %v817, %v817
  %v882 = vpack.c.b16 %v818, %v818
  %v883 = vpack.c.b16 %v819, %v819
  %v884 = vpack.c.b16 %v820, %v820
  %v885 = vpack.c.b16 %v821, %v821
  %v886 = vpack.c.b16 %v822, %v822
  %v887 = vpack.c.b16 %v823, %v823
  %v888 = vpack.c.b16 %v824, %v824
  %v889 = vpack.c.b16 %v825, %v825
  %v890 = vpack.c.b16 %v826, %v826
  %v891 = vpack.c.b16 %v827, %v827
  %v892 = vpack.c.b16 %v828, %v828
  %v893 = vpack.c.b16 %v829, %v829
  %v894 = vpack.c.b16 %v830, %v830
  %v895 = vpack.c.b16 %v831, %v831
  %v896 = vpack.c.b16 %v832, %v832
  %v897 = vpack.c.b16 %v833, %v833
  %v898 = vpack.c.b16 %v834, %v834
  %v899 = vpack.c.b16 %v835, %v835
  %v900 = vpack.c.b16 %v836, %v836
  %v901 = vpack.c.b16 %v837, %v837
  %v902 = vpack.c.b16 %v838, %v838
  %v903 = vpack.c.b16 %v839, %v839
  %v904 = vpack.c.b16 %v840, %v840
  %v905 = vpack.c.b16 %v841, %v841
  %v906 = vpack.c.b16 %v842, %v842
  %v907 = vpack.c.b16 %v843, %v843
  %v908 = vpack.c.b16 %v844, %v844
  %v909 = vpack.c.b16 %v845, %v845
  %v910 = vpack.c.b16 %v846, %v846
  %v911 = vpack.c.b16 %v847, %v847
  %976 = vst [vmem:[%s2] sm:$0xf] %v848
  %977 = vst [vmem:[%s2 + $0x4] sm:$0xf] %v849
  %978 = vst [vmem:[%s2 + $0x8] sm:$0xf] %v850
  %979 = vst [vmem:[%s2 + $0xc] sm:$0xf] %v851
  %980 = vst [vmem:[%s2 + $0x10] sm:$0xf] %v852
  %981 = vst [vmem:[%s2 + $0x14] sm:$0xf] %v853
  %982 = vst [vmem:[%s2 + $0x18] sm:$0xf] %v854
  %983 = vst [vmem:[%s2 + $0x1c] sm:$0xf] %v855
  %984 = vst [vmem:[%s2 + $0x20] sm:$0xf] %v856
  %985 = vst [vmem:[%s2 + $0x24] sm:$0xf] %v857
  %986 = vst [vmem:[%s2 + $0x28] sm:$0xf] %v858
  %987 = vst [vmem:[%s2 + $0x2c] sm:$0xf] %v859
  %988 = vst [vmem:[%s2 + $0x30] sm:$0xf] %v860
  %989 = vst [vmem:[%s2 + $0x34] sm:$0xf] %v861
  %990 = vst [vmem:[%s2 + $0x38] sm:$0xf] %v862
  %991 = vst [vmem:[%s2 + $0x3c] sm:$0xf] %v863
  %992 = vst [vmem:[%s2 + $0x40] sm:$0xf] %v864
  %993 = vst [vmem:[%s2 + $0x44] sm:$0xf] %v865
  %994 = vst [vmem:[%s2 + $0x48] sm:$0xf] %v866
  %995 = vst [vmem:[%s2 + $0x4c] sm:$0xf] %v867
  %996 = vst [vmem:[%s2 + $0x50] sm:$0xf] %v868
  %997 = vst [vmem:[%s2 + $0x54] sm:$0xf] %v869
  %998 = vst [vmem:[%s2 + $0x58] sm:$0xf] %v870
  %999 = vst [vmem:[%s2 + $0x5c] sm:$0xf] %v871
  %1000 = vst [vmem:[%s2 + $0x60] sm:$0xf] %v872
  %1001 = vst [vmem:[%s2 + $0x64] sm:$0xf] %v873
  %1002 = vst [vmem:[%s2 + $0x68] sm:$0xf] %v874
  %1003 = vst [vmem:[%s2 + $0x6c] sm:$0xf] %v875
  %1004 = vst [vmem:[%s2 + $0x70] sm:$0xf] %v876
  %1005 = vst [vmem:[%s2 + $0x74] sm:$0xf] %v877
  %1006 = vst [vmem:[%s2 + $0x78] sm:$0xf] %v878
  %1007 = vst [vmem:[%s2 + $0x7c] sm:$0xf] %v879
  %1008 = vst [vmem:[%s2 + $0x80] sm:$0xf] %v880
  %1009 = vst [vmem:[%s2 + $0x84] sm:$0xf] %v881
  %1010 = vst [vmem:[%s2 + $0x88] sm:$0xf] %v882
  %1011 = vst [vmem:[%s2 + $0x8c] sm:$0xf] %v883
  %1012 = vst [vmem:[%s2 + $0x90] sm:$0xf] %v884
  %1013 = vst [vmem:[%s2 + $0x94] sm:$0xf] %v885
  %1014 = vst [vmem:[%s2 + $0x98] sm:$0xf] %v886
  %1015 = vst [vmem:[%s2 + $0x9c] sm:$0xf] %v887
  %1016 = vst [vmem:[%s2 + $0xa0] sm:$0xf] %v888
  %1017 = vst [vmem:[%s2 + $0xa4] sm:$0xf] %v889
  %1018 = vst [vmem:[%s2 + $0xa8] sm:$0xf] %v890
  %1019 = vst [vmem:[%s2 + $0xac] sm:$0xf] %v891
  %1020 = vst [vmem:[%s2 + $0xb0] sm:$0xf] %v892
  %1021 = vst [vmem:[%s2 + $0xb4] sm:$0xf] %v893
  %1022 = vst [vmem:[%s2 + $0xb8] sm:$0xf] %v894
  %1023 = vst [vmem:[%s2 + $0xbc] sm:$0xf] %v895
  %1024 = vst [vmem:[%s2 + $0xc0] sm:$0xf] %v896
  %1025 = vst [vmem:[%s2 + $0xc4] sm:$0xf] %v897
  %1026 = vst [vmem:[%s2 + $0xc8] sm:$0xf] %v898
  %1027 = vst [vmem:[%s2 + $0xcc] sm:$0xf] %v899
  %1028 = vst [vmem:[%s2 + $0xd0] sm:$0xf] %v900
  %1029 = vst [vmem:[%s2 + $0xd4] sm:$0xf] %v901
  %1030 = vst [vmem:[%s2 + $0xd8] sm:$0xf] %v902
  %1031 = vst [vmem:[%s2 + $0xdc] sm:$0xf] %v903
  %1032 = vst [vmem:[%s2 + $0xe0] sm:$0xf] %v904
  %1033 = vst [vmem:[%s2 + $0xe4] sm:$0xf] %v905
  %1034 = vst [vmem:[%s2 + $0xe8] sm:$0xf] %v906
  %1035 = vst [vmem:[%s2 + $0xec] sm:$0xf] %v907
  %1036 = vst [vmem:[%s2 + $0xf0] sm:$0xf] %v908
  %1037 = vst [vmem:[%s2 + $0xf4] sm:$0xf] %v909
  %1038 = vst [vmem:[%s2 + $0xf8] sm:$0xf] %v910
  %1039 = vst [vmem:[%s2 + $0xfc] sm:$0xf] %v911
  %v1040 = vadd.f32 %v402, %v406
  %v1041 = vadd.f32 %v1040, %v412
  %v1042 = vadd.f32 %v1041, %v416
  %v1043 = vadd.f32 %v1042, %v422
  %v1044 = vadd.f32 %v1043, %v426
  %v1045 = vadd.f32 %v1044, %v432
  %v1046 = vadd.f32 %v1045, %v436
  %v1047 = vadd.f32 %v1046, %v442
  %v1048 = vadd.f32 %v1047, %v446
  %v1049 = vadd.f32 %v1048, %v452
  %v1050 = vadd.f32 %v1049, %v456
  %v1051 = vadd.f32 %v1050, %v462
  %v1052 = vadd.f32 %v1051, %v466
  %v1053 = vadd.f32 %v1052, %v472
  %v1054 = vadd.f32 %v1053, %v476
  %v1055 = vadd.f32 %v1054, %v482
  %v1056 = vadd.f32 %v1055, %v486
  %v1057 = vadd.f32 %v1056, %v492
  %v1058 = vadd.f32 %v1057, %v496
  %v1059 = vadd.f32 %v1058, %v502
  %v1060 = vadd.f32 %v1059, %v506
  %v1061 = vadd.f32 %v1060, %v512
  %v1062 = vadd.f32 %v1061, %v516
  %v1063 = vadd.f32 %v1062, %v522
  %v1064 = vadd.f32 %v1063, %v526
  %v1065 = vadd.f32 %v1064, %v532
  %v1066 = vadd.f32 %v1065, %v536
  %v1067 = vadd.f32 %v1066, %v542
  %v1068 = vadd.f32 %v1067, %v546
  %v1069 = vadd.f32 %v1068, %v552
  %v1070 = vadd.f32 %v1069, %v556
  %v1071 = vadd.f32 %v1070, %v562
  %v1072 = vadd.f32 %v1071, %v566
  %v1073 = vadd.f32 %v1072, %v572
  %v1074 = vadd.f32 %v1073, %v576
  %v1075 = vadd.f32 %v1074, %v582
  %v1076 = vadd.f32 %v1075, %v586
  %v1077 = vadd.f32 %v1076, %v592
  %v1078 = vadd.f32 %v1077, %v596
  %v1079 = vadd.f32 %v1078, %v602
  %v1080 = vadd.f32 %v1079, %v606
  %v1081 = vadd.f32 %v1080, %v612
  %v1082 = vadd.f32 %v1081, %v616
  %v1083 = vadd.f32 %v1082, %v622
  %v1084 = vadd.f32 %v1083, %v626
  %v1085 = vadd.f32 %v1084, %v632
  %v1086 = vadd.f32 %v1085, %v636
  %v1087 = vadd.f32 %v1086, %v642
  %v1088 = vadd.f32 %v1087, %v646
  %v1089 = vadd.f32 %v1088, %v652
  %v1090 = vadd.f32 %v1089, %v656
  %v1091 = vadd.f32 %v1090, %v662
  %v1092 = vadd.f32 %v1091, %v666
  %v1093 = vadd.f32 %v1092, %v672
  %v1094 = vadd.f32 %v1093, %v676
  %v1095 = vadd.f32 %v1094, %v682
  %v1096 = vadd.f32 %v1095, %v686
  %v1097 = vadd.f32 %v1096, %v692
  %v1098 = vadd.f32 %v1097, %v696
  %v1099 = vadd.f32 %v1098, %v702
  %v1100 = vadd.f32 %v1099, %v706
  %v1101 = vadd.f32 %v1100, %v712
  %v1102 = vadd.f32 %v1101, %v716
  %v1103 = vrot.slane %v1102, 4
  %v1104 = vadd.f32 %v1102, %v1103
  %v1105 = vrot.slane %v1104, 2
  %v1106 = vadd.f32 %v1104, %v1105
  %v1107 = vrot.slane %v1106, 1
  %v1108 = vadd.f32 %v1106, %v1107
  %v1109 = vadd.f32 %v404, %v408
  %v1110 = vadd.f32 %v1109, %v414
  %v1111 = vadd.f32 %v1110, %v418
  %v1112 = vadd.f32 %v1111, %v424
  %v1113 = vadd.f32 %v1112, %v428
  %v1114 = vadd.f32 %v1113, %v434
  %v1115 = vadd.f32 %v1114, %v438
  %v1116 = vadd.f32 %v1115, %v444
  %v1117 = vadd.f32 %v1116, %v448
  %v1118 = vadd.f32 %v1117, %v454
  %v1119 = vadd.f32 %v1118, %v458
  %v1120 = vadd.f32 %v1119, %v464
  %v1121 = vadd.f32 %v1120, %v468
  %v1122 = vadd.f32 %v1121, %v474
  %v1123 = vadd.f32 %v1122, %v478
  %v1124 = vadd.f32 %v1123, %v484
  %v1125 = vadd.f32 %v1124, %v488
  %v1126 = vadd.f32 %v1125, %v494
  %v1127 = vadd.f32 %v1126, %v498
  %v1128 = vadd.f32 %v1127, %v504
  %v1129 = vadd.f32 %v1128, %v508
  %v1130 = vadd.f32 %v1129, %v514
  %v1131 = vadd.f32 %v1130, %v518
  %v1132 = vadd.f32 %v1131, %v524
  %v1133 = vadd.f32 %v1132, %v528
  %v1134 = vadd.f32 %v1133, %v534
  %v1135 = vadd.f32 %v1134, %v538
  %v1136 = vadd.f32 %v1135, %v544
  %v1137 = vadd.f32 %v1136, %v548
  %v1138 = vadd.f32 %v1137, %v554
  %v1139 = vadd.f32 %v1138, %v558
  %v1140 = vadd.f32 %v1139, %v564
  %v1141 = vadd.f32 %v1140, %v568
  %v1142 = vadd.f32 %v1141, %v574
  %v1143 = vadd.f32 %v1142, %v578
  %v1144 = vadd.f32 %v1143, %v584
  %v1145 = vadd.f32 %v1144, %v588
  %v1146 = vadd.f32 %v1145, %v594
  %v1147 = vadd.f32 %v1146, %v598
  %v1148 = vadd.f32 %v1147, %v604
  %v1149 = vadd.f32 %v1148, %v608
  %v1150 = vadd.f32 %v1149, %v614
  %v1151 = vadd.f32 %v1150, %v618
  %v1152 = vadd.f32 %v1151, %v624
  %v1153 = vadd.f32 %v1152, %v628
  %v1154 = vadd.f32 %v1153, %v634
  %v1155 = vadd.f32 %v1154, %v638
  %v1156 = vadd.f32 %v1155, %v644
  %v1157 = vadd.f32 %v1156, %v648
  %v1158 = vadd.f32 %v1157, %v654
  %v1159 = vadd.f32 %v1158, %v658
  %v1160 = vadd.f32 %v1159, %v664
  %v1161 = vadd.f32 %v1160, %v668
  %v1162 = vadd.f32 %v1161, %v674
  %v1163 = vadd.f32 %v1162, %v678
  %v1164 = vadd.f32 %v1163, %v684
  %v1165 = vadd.f32 %v1164, %v688
  %v1166 = vadd.f32 %v1165, %v694
  %v1167 = vadd.f32 %v1166, %v698
  %v1168 = vadd.f32 %v1167, %v704
  %v1169 = vadd.f32 %v1168, %v708
  %v1170 = vadd.f32 %v1169, %v714
  %v1171 = vadd.f32 %v1170, %v718
  %v1172 = vrot.slane %v1171, 4
  %v1173 = vadd.f32 %v1171, %v1172
  %v1174 = vrot.slane %v1173, 2
  %v1175 = vadd.f32 %v1173, %v1174
  %v1176 = vrot.slane %v1175, 1
  %v1177 = vadd.f32 %v1175, %v1176
  %v1178 = vmul.f32 %v402, %v402
  %v1179 = vmul.f32 %v404, %v404
  %v1180 = vmul.f32 %v406, %v406
  %v1181 = vmul.f32 %v408, %v408
  %v1182 = vmul.f32 %v412, %v412
  %v1183 = vmul.f32 %v414, %v414
  %v1184 = vmul.f32 %v416, %v416
  %v1185 = vmul.f32 %v418, %v418
  %v1186 = vmul.f32 %v422, %v422
  %v1187 = vmul.f32 %v424, %v424
  %v1188 = vmul.f32 %v426, %v426
  %v1189 = vmul.f32 %v428, %v428
  %v1190 = vmul.f32 %v432, %v432
  %v1191 = vmul.f32 %v434, %v434
  %v1192 = vmul.f32 %v436, %v436
  %v1193 = vmul.f32 %v438, %v438
  %v1194 = vmul.f32 %v442, %v442
  %v1195 = vmul.f32 %v444, %v444
  %v1196 = vmul.f32 %v446, %v446
  %v1197 = vmul.f32 %v448, %v448
  %v1198 = vmul.f32 %v452, %v452
  %v1199 = vmul.f32 %v454, %v454
  %v1200 = vmul.f32 %v456, %v456
  %v1201 = vmul.f32 %v458, %v458
  %v1202 = vmul.f32 %v462, %v462
  %v1203 = vmul.f32 %v464, %v464
  %v1204 = vmul.f32 %v466, %v466
  %v1205 = vmul.f32 %v468, %v468
  %v1206 = vmul.f32 %v472, %v472
  %v1207 = vmul.f32 %v474, %v474
  %v1208 = vmul.f32 %v476, %v476
  %v1209 = vmul.f32 %v478, %v478
  %v1210 = vmul.f32 %v482, %v482
  %v1211 = vmul.f32 %v484, %v484
  %v1212 = vmul.f32 %v486, %v486
  %v1213 = vmul.f32 %v488, %v488
  %v1214 = vmul.f32 %v492, %v492
  %v1215 = vmul.f32 %v494, %v494
  %v1216 = vmul.f32 %v496, %v496
  %v1217 = vmul.f32 %v498, %v498
  %v1218 = vmul.f32 %v502, %v502
  %v1219 = vmul.f32 %v504, %v504
  %v1220 = vmul.f32 %v506, %v506
  %v1221 = vmul.f32 %v508, %v508
  %v1222 = vmul.f32 %v512, %v512
  %v1223 = vmul.f32 %v514, %v514
  %v1224 = vmul.f32 %v516, %v516
  %v1225 = vmul.f32 %v518, %v518
  %v1226 = vmul.f32 %v522, %v522
  %v1227 = vmul.f32 %v524, %v524
  %v1228 = vmul.f32 %v526, %v526
  %v1229 = vmul.f32 %v528, %v528
  %v1230 = vmul.f32 %v532, %v532
  %v1231 = vmul.f32 %v534, %v534
  %v1232 = vmul.f32 %v536, %v536
  %v1233 = vmul.f32 %v538, %v538
  %v1234 = vmul.f32 %v542, %v542
  %v1235 = vmul.f32 %v544, %v544
  %v1236 = vmul.f32 %v546, %v546
  %v1237 = vmul.f32 %v548, %v548
  %v1238 = vmul.f32 %v552, %v552
  %v1239 = vmul.f32 %v554, %v554
  %v1240 = vmul.f32 %v556, %v556
  %v1241 = vmul.f32 %v558, %v558
  %v1242 = vmul.f32 %v562, %v562
  %v1243 = vmul.f32 %v564, %v564
  %v1244 = vmul.f32 %v566, %v566
  %v1245 = vmul.f32 %v568, %v568
  %v1246 = vmul.f32 %v572, %v572
  %v1247 = vmul.f32 %v574, %v574
  %v1248 = vmul.f32 %v576, %v576
  %v1249 = vmul.f32 %v578, %v578
  %v1250 = vmul.f32 %v582, %v582
  %v1251 = vmul.f32 %v584, %v584
  %v1252 = vmul.f32 %v586, %v586
  %v1253 = vmul.f32 %v588, %v588
  %v1254 = vmul.f32 %v592, %v592
  %v1255 = vmul.f32 %v594, %v594
  %v1256 = vmul.f32 %v596, %v596
  %v1257 = vmul.f32 %v598, %v598
  %v1258 = vmul.f32 %v602, %v602
  %v1259 = vmul.f32 %v604, %v604
  %v1260 = vmul.f32 %v606, %v606
  %v1261 = vmul.f32 %v608, %v608
  %v1262 = vmul.f32 %v612, %v612
  %v1263 = vmul.f32 %v614, %v614
  %v1264 = vmul.f32 %v616, %v616
  %v1265 = vmul.f32 %v618, %v618
  %v1266 = vmul.f32 %v622, %v622
  %v1267 = vmul.f32 %v624, %v624
  %v1268 = vmul.f32 %v626, %v626
  %v1269 = vmul.f32 %v628, %v628
  %v1270 = vmul.f32 %v632, %v632
  %v1271 = vmul.f32 %v634, %v634
  %v1272 = vmul.f32 %v636, %v636
  %v1273 = vmul.f32 %v638, %v638
  %v1274 = vmul.f32 %v642, %v642
  %v1275 = vmul.f32 %v644, %v644
  %v1276 = vmul.f32 %v646, %v646
  %v1277 = vmul.f32 %v648, %v648
  %v1278 = vmul.f32 %v652, %v652
  %v1279 = vmul.f32 %v654, %v654
  %v1280 = vmul.f32 %v656, %v656
  %v1281 = vmul.f32 %v658, %v658
  %v1282 = vmul.f32 %v662, %v662
  %v1283 = vmul.f32 %v664, %v664
  %v1284 = vmul.f32 %v666, %v666
  %v1285 = vmul.f32 %v668, %v668
  %v1286 = vmul.f32 %v672, %v672
  %v1287 = vmul.f32 %v674, %v674
  %v1288 = vmul.f32 %v676, %v676
  %v1289 = vmul.f32 %v678, %v678
  %v1290 = vmul.f32 %v682, %v682
  %v1291 = vmul.f32 %v684, %v684
  %v1292 = vmul.f32 %v686, %v686
  %v1293 = vmul.f32 %v688, %v688
  %v1294 = vmul.f32 %v692, %v692
  %v1295 = vmul.f32 %v694, %v694
  %v1296 = vmul.f32 %v696, %v696
  %v1297 = vmul.f32 %v698, %v698
  %v1298 = vmul.f32 %v702, %v702
  %v1299 = vmul.f32 %v704, %v704
  %v1300 = vmul.f32 %v706, %v706
  %v1301 = vmul.f32 %v708, %v708
  %v1302 = vmul.f32 %v712, %v712
  %v1303 = vmul.f32 %v714, %v714
  %v1304 = vmul.f32 %v716, %v716
  %v1305 = vmul.f32 %v718, %v718
  %v1306 = vadd.f32 %v1178, %v1180
  %v1307 = vadd.f32 %v1306, %v1182
  %v1308 = vadd.f32 %v1307, %v1184
  %v1309 = vadd.f32 %v1308, %v1186
  %v1310 = vadd.f32 %v1309, %v1188
  %v1311 = vadd.f32 %v1310, %v1190
  %v1312 = vadd.f32 %v1311, %v1192
  %v1313 = vadd.f32 %v1312, %v1194
  %v1314 = vadd.f32 %v1313, %v1196
  %v1315 = vadd.f32 %v1314, %v1198
  %v1316 = vadd.f32 %v1315, %v1200
  %v1317 = vadd.f32 %v1316, %v1202
  %v1318 = vadd.f32 %v1317, %v1204
  %v1319 = vadd.f32 %v1318, %v1206
  %v1320 = vadd.f32 %v1319, %v1208
  %v1321 = vadd.f32 %v1320, %v1210
  %v1322 = vadd.f32 %v1321, %v1212
  %v1323 = vadd.f32 %v1322, %v1214
  %v1324 = vadd.f32 %v1323, %v1216
  %v1325 = vadd.f32 %v1324, %v1218
  %v1326 = vadd.f32 %v1325, %v1220
  %v1327 = vadd.f32 %v1326, %v1222
  %v1328 = vadd.f32 %v1327, %v1224
  %v1329 = vadd.f32 %v1328, %v1226
  %v1330 = vadd.f32 %v1329, %v1228
  %v1331 = vadd.f32 %v1330, %v1230
  %v1332 = vadd.f32 %v1331, %v1232
  %v1333 = vadd.f32 %v1332, %v1234
  %v1334 = vadd.f32 %v1333, %v1236
  %v1335 = vadd.f32 %v1334, %v1238
  %v1336 = vadd.f32 %v1335, %v1240
  %v1337 = vadd.f32 %v1336, %v1242
  %v1338 = vadd.f32 %v1337, %v1244
  %v1339 = vadd.f32 %v1338, %v1246
  %v1340 = vadd.f32 %v1339, %v1248
  %v1341 = vadd.f32 %v1340, %v1250
  %v1342 = vadd.f32 %v1341, %v1252
  %v1343 = vadd.f32 %v1342, %v1254
  %v1344 = vadd.f32 %v1343, %v1256
  %v1345 = vadd.f32 %v1344, %v1258
  %v1346 = vadd.f32 %v1345, %v1260
  %v1347 = vadd.f32 %v1346, %v1262
  %v1348 = vadd.f32 %v1347, %v1264
  %v1349 = vadd.f32 %v1348, %v1266
  %v1350 = vadd.f32 %v1349, %v1268
  %v1351 = vadd.f32 %v1350, %v1270
  %v1352 = vadd.f32 %v1351, %v1272
  %v1353 = vadd.f32 %v1352, %v1274
  %v1354 = vadd.f32 %v1353, %v1276
  %v1355 = vadd.f32 %v1354, %v1278
  %v1356 = vadd.f32 %v1355, %v1280
  %v1357 = vadd.f32 %v1356, %v1282
  %v1358 = vadd.f32 %v1357, %v1284
  %v1359 = vadd.f32 %v1358, %v1286
  %v1360 = vadd.f32 %v1359, %v1288
  %v1361 = vadd.f32 %v1360, %v1290
  %v1362 = vadd.f32 %v1361, %v1292
  %v1363 = vadd.f32 %v1362, %v1294
  %v1364 = vadd.f32 %v1363, %v1296
  %v1365 = vadd.f32 %v1364, %v1298
  %v1366 = vadd.f32 %v1365, %v1300
  %v1367 = vadd.f32 %v1366, %v1302
  %v1368 = vadd.f32 %v1367, %v1304
  %v1369 = vrot.slane %v1368, 4
  %v1370 = vadd.f32 %v1368, %v1369
  %v1371 = vrot.slane %v1370, 2
  %v1372 = vadd.f32 %v1370, %v1371
  %v1373 = vrot.slane %v1372, 1
  %v1374 = vadd.f32 %v1372, %v1373
  %v1375 = vadd.f32 %v1179, %v1181
  %v1376 = vadd.f32 %v1375, %v1183
  %v1377 = vadd.f32 %v1376, %v1185
  %v1378 = vadd.f32 %v1377, %v1187
  %v1379 = vadd.f32 %v1378, %v1189
  %v1380 = vadd.f32 %v1379, %v1191
  %v1381 = vadd.f32 %v1380, %v1193
  %v1382 = vadd.f32 %v1381, %v1195
  %v1383 = vadd.f32 %v1382, %v1197
  %v1384 = vadd.f32 %v1383, %v1199
  %v1385 = vadd.f32 %v1384, %v1201
  %v1386 = vadd.f32 %v1385, %v1203
  %v1387 = vadd.f32 %v1386, %v1205
  %v1388 = vadd.f32 %v1387, %v1207
  %v1389 = vadd.f32 %v1388, %v1209
  %v1390 = vadd.f32 %v1389, %v1211
  %v1391 = vadd.f32 %v1390, %v1213
  %v1392 = vadd.f32 %v1391, %v1215
  %v1393 = vadd.f32 %v1392, %v1217
  %v1394 = vadd.f32 %v1393, %v1219
  %v1395 = vadd.f32 %v1394, %v1221
  %v1396 = vadd.f32 %v1395, %v1223
  %v1397 = vadd.f32 %v1396, %v1225
  %v1398 = vadd.f32 %v1397, %v1227
  %v1399 = vadd.f32 %v1398, %v1229
  %v1400 = vadd.f32 %v1399, %v1231
  %v1401 = vadd.f32 %v1400, %v1233
  %v1402 = vadd.f32 %v1401, %v1235
  %v1403 = vadd.f32 %v1402, %v1237
  %v1404 = vadd.f32 %v1403, %v1239
  %v1405 = vadd.f32 %v1404, %v1241
  %v1406 = vadd.f32 %v1405, %v1243
  %v1407 = vadd.f32 %v1406, %v1245
  %v1408 = vadd.f32 %v1407, %v1247
  %v1409 = vadd.f32 %v1408, %v1249
  %v1410 = vadd.f32 %v1409, %v1251
  %v1411 = vadd.f32 %v1410, %v1253
  %v1412 = vadd.f32 %v1411, %v1255
  %v1413 = vadd.f32 %v1412, %v1257
  %v1414 = vadd.f32 %v1413, %v1259
  %v1415 = vadd.f32 %v1414, %v1261
  %v1416 = vadd.f32 %v1415, %v1263
  %v1417 = vadd.f32 %v1416, %v1265
  %v1418 = vadd.f32 %v1417, %v1267
  %v1419 = vadd.f32 %v1418, %v1269
  %v1420 = vadd.f32 %v1419, %v1271
  %v1421 = vadd.f32 %v1420, %v1273
  %v1422 = vadd.f32 %v1421, %v1275
  %v1423 = vadd.f32 %v1422, %v1277
  %v1424 = vadd.f32 %v1423, %v1279
  %v1425 = vadd.f32 %v1424, %v1281
  %v1426 = vadd.f32 %v1425, %v1283
  %v1427 = vadd.f32 %v1426, %v1285
  %v1428 = vadd.f32 %v1427, %v1287
  %v1429 = vadd.f32 %v1428, %v1289
  %v1430 = vadd.f32 %v1429, %v1291
  %v1431 = vadd.f32 %v1430, %v1293
  %v1432 = vadd.f32 %v1431, %v1295
  %v1433 = vadd.f32 %v1432, %v1297
  %v1434 = vadd.f32 %v1433, %v1299
  %v1435 = vadd.f32 %v1434, %v1301
  %v1436 = vadd.f32 %v1435, %v1303
  %v1437 = vadd.f32 %v1436, %v1305
  %v1438 = vrot.slane %v1437, 4
  %v1439 = vadd.f32 %v1437, %v1438
  %v1440 = vrot.slane %v1439, 2
  %v1441 = vadd.f32 %v1439, %v1440
  %v1442 = vrot.slane %v1441, 1
  %v1443 = vadd.f32 %v1441, %v1442
  %1444 = vst [vmem:[%s3] sm:$0xff] %v1108
  %1445 = vst [vmem:[%s3 + $0x8] sm:$0xff] %v1177
  %1446 = vst [vmem:[%s4] sm:$0xff] %v1374
  %1447 = vst [vmem:[%s4 + $0x8] sm:$0xff] %v1443
  // Predicated region
  $region10: #{bottleneck_forward.4} parent=0 // pred_check
    _
  $region11: #{bottleneck_forward.4} parent=0 // pred_check_branch
    %1449 = sbr.rel (0) target = $region13
  $region12: #{bottleneck_forward.4} parent=0 // pred_region
    _
  $region13: #{bottleneck_forward.4} parent=0 // pred_fallthru
    _
  // Predicated region
  $region14: #{bottleneck_forward.4} parent=0 // pred_check
    _
  $region15: #{bottleneck_forward.4} parent=0 // pred_check_branch
    %1451 = sbr.rel (0) target = $region17
  $region16: #{bottleneck_forward.4} parent=0 // pred_region
    _
  $region17: #{bottleneck_forward.4} parent=0 // pred_fallthru
    _
  // Predicated region
  $region18: #{bottleneck_forward.4} parent=0 // pred_check
    _
  $region19: #{bottleneck_forward.4} parent=0 // pred_check_branch
    %1453 = sbr.rel (0) target = $region21
  $region20: #{bottleneck_forward.4} parent=0 // pred_region
    _
  $region21: #{bottleneck_forward.4} parent=0 // pred_fallthru
    _
  // Predicated region
  $region22: #{bottleneck_forward.4} parent=0 // pred_check
    _
  $region23: #{bottleneck_forward.4} parent=0 // pred_check_branch
    %1455 = sbr.rel (0) target = $region25
  $region24: #{bottleneck_forward.4} parent=0 // pred_region
    _
  $region25: #{bottleneck_forward.4} parent=0 // pred_fallthru
    _
  // Predicated region
  $region26: #{bottleneck_forward.4} parent=0 // pred_check
    _
  $region27: #{bottleneck_forward.4} parent=0 // pred_check_branch
    %1457 = sbr.rel (0) target = $region29
  $region28: #{bottleneck_forward.4} parent=0 // pred_region
    _
  $region29: #{bottleneck_forward.4} parent=0 // pred_fallthru
    _
  // Predicated region
  $region30: #{bottleneck_forward.4} parent=0 // pred_check
    _
  $region31: #{bottleneck_forward.4} parent=0 // pred_check_branch
    %1459 = sbr.rel (0) target = $region33
  $region32: #{bottleneck_forward.4} parent=0 // pred_region
    _
  $region33: #{bottleneck_forward.4} parent=0 // pred_fallthru
    _

// kernel: bottleneck_forward.6
$region0: #{bottleneck_forward.6}
  #allocation0 [shape = 'u32[]', space=smem, size = 0x4, offset = 0x4, fixed_abs, tag = 'smem constant byte address 0x4 - core index']
  #allocation1 [shape = 'u32[144,128]{1,0:T(1,128)}', space=vmem, size = 0x12000, scoped, tag = 'internal scratch']
  %s0 = inlined_call_operand.vmem [shape: bf16[512,128], index: 0, kind: input, shape index: {}]
  %s1 = inlined_call_operand.vmem [shape: f32[1,128], index: 1, kind: input, shape index: {}]
  %s2 = inlined_call_operand.vmem [shape: f32[1,128], index: 2, kind: input, shape index: {}]
  %s3 = inlined_call_operand.vmem [shape: bf16[128,128], index: 3, kind: input, shape index: {}]
  %s4 = inlined_call_operand.vmem [shape: bf16[512,128], index: 4, kind: output, shape index: {0}]
  %s5 = inlined_call_operand.vmem [shape: f32[8,128], index: 5, kind: output, shape index: {1}]
  %s6 = inlined_call_operand.vmem [shape: f32[8,128], index: 6, kind: output, shape index: {2}]
  %7 = xla_tuple %s4, %s5, %s6
  %s8 = sld [smem:[#allocation0]]
  $region42: #{bottleneck_forward.6} parent=0
    _
  %s10 = ssub.s32 1, %s8
  %s11 = scalar_select 0, %s10, %s8
  // Predicated region
  $region2: #{bottleneck_forward.6} parent=0 // pred_check
    _
  $region3: #{bottleneck_forward.6} parent=0 // pred_check_branch
    %13 = sbr.rel (0) target = $region5
  $region4: #{bottleneck_forward.6} parent=0 // pred_region
    _
  $region5: #{bottleneck_forward.6} parent=0 // pred_fallthru
    _
  // Predicated region
  $region6: #{bottleneck_forward.6} parent=0 // pred_check
    _
  $region7: #{bottleneck_forward.6} parent=0 // pred_check_branch
    %15 = sbr.rel (0) target = $region9
  $region8: #{bottleneck_forward.6} parent=0 // pred_region
    _
  $region9: #{bottleneck_forward.6} parent=0 // pred_fallthru
    _
  // Predicated region
  $region10: #{bottleneck_forward.6} parent=0 // pred_check
    _
  $region11: #{bottleneck_forward.6} parent=0 // pred_check_branch
    %17 = sbr.rel (0) target = $region13
  $region12: #{bottleneck_forward.6} parent=0 // pred_region
    _
  $region13: #{bottleneck_forward.6} parent=0 // pred_fallthru
    _
  // Predicated region
  $region14: #{bottleneck_forward.6} parent=0 // pred_check
    _
  $region15: #{bottleneck_forward.6} parent=0 // pred_check_branch
    %19 = sbr.rel (0) target = $region17
  $region16: #{bottleneck_forward.6} parent=0 // pred_region
    _
  $region17: #{bottleneck_forward.6} parent=0 // pred_fallthru
    _
  %v21 = vld [vmem:[%s0] sm:$0xf]
  %v22 = vld [vmem:[%s0 + $0x4] sm:$0xf]
  %v23 = vld [vmem:[%s0 + $0x8] sm:$0xf]
  %v24 = vld [vmem:[%s0 + $0xc] sm:$0xf]
  %v25 = vld [vmem:[%s0 + $0x10] sm:$0xf]
  %v26 = vld [vmem:[%s0 + $0x14] sm:$0xf]
  %v27 = vld [vmem:[%s0 + $0x18] sm:$0xf]
  %v28 = vld [vmem:[%s0 + $0x1c] sm:$0xf]
  %v29 = vld [vmem:[%s0 + $0x20] sm:$0xf]
  %v30 = vld [vmem:[%s0 + $0x24] sm:$0xf]
  %v31 = vld [vmem:[%s0 + $0x28] sm:$0xf]
  %v32 = vld [vmem:[%s0 + $0x2c] sm:$0xf]
  %v33 = vld [vmem:[%s0 + $0x30] sm:$0xf]
  %v34 = vld [vmem:[%s0 + $0x34] sm:$0xf]
  %v35 = vld [vmem:[%s0 + $0x38] sm:$0xf]
  %v36 = vld [vmem:[%s0 + $0x3c] sm:$0xf]
  %v37 = vld [vmem:[%s0 + $0x40] sm:$0xf]
  %v38 = vld [vmem:[%s0 + $0x44] sm:$0xf]
  %v39 = vld [vmem:[%s0 + $0x48] sm:$0xf]
  %v40 = vld [vmem:[%s0 + $0x4c] sm:$0xf]
  %v41 = vld [vmem:[%s0 + $0x50] sm:$0xf]
  %v42 = vld [vmem:[%s0 + $0x54] sm:$0xf]
  %v43 = vld [vmem:[%s0 + $0x58] sm:$0xf]
  %v44 = vld [vmem:[%s0 + $0x5c] sm:$0xf]
  %v45 = vld [vmem:[%s0 + $0x60] sm:$0xf]
  %v46 = vld [vmem:[%s0 + $0x64] sm:$0xf]
  %v47 = vld [vmem:[%s0 + $0x68] sm:$0xf]
  %v48 = vld [vmem:[%s0 + $0x6c] sm:$0xf]
  %v49 = vld [vmem:[%s0 + $0x70] sm:$0xf]
  %v50 = vld [vmem:[%s0 + $0x74] sm:$0xf]
  %v51 = vld [vmem:[%s0 + $0x78] sm:$0xf]
  %v52 = vld [vmem:[%s0 + $0x7c] sm:$0xf]
  %v53 = vld [vmem:[%s0 + $0x80] sm:$0xf]
  %v54 = vld [vmem:[%s0 + $0x84] sm:$0xf]
  %v55 = vld [vmem:[%s0 + $0x88] sm:$0xf]
  %v56 = vld [vmem:[%s0 + $0x8c] sm:$0xf]
  %v57 = vld [vmem:[%s0 + $0x90] sm:$0xf]
  %v58 = vld [vmem:[%s0 + $0x94] sm:$0xf]
  %v59 = vld [vmem:[%s0 + $0x98] sm:$0xf]
  %v60 = vld [vmem:[%s0 + $0x9c] sm:$0xf]
  %v61 = vld [vmem:[%s0 + $0xa0] sm:$0xf]
  %v62 = vld [vmem:[%s0 + $0xa4] sm:$0xf]
  %v63 = vld [vmem:[%s0 + $0xa8] sm:$0xf]
  %v64 = vld [vmem:[%s0 + $0xac] sm:$0xf]
  %v65 = vld [vmem:[%s0 + $0xb0] sm:$0xf]
  %v66 = vld [vmem:[%s0 + $0xb4] sm:$0xf]
  %v67 = vld [vmem:[%s0 + $0xb8] sm:$0xf]
  %v68 = vld [vmem:[%s0 + $0xbc] sm:$0xf]
  %v69 = vld [vmem:[%s0 + $0xc0] sm:$0xf]
  %v70 = vld [vmem:[%s0 + $0xc4] sm:$0xf]
  %v71 = vld [vmem:[%s0 + $0xc8] sm:$0xf]
  %v72 = vld [vmem:[%s0 + $0xcc] sm:$0xf]
  %v73 = vld [vmem:[%s0 + $0xd0] sm:$0xf]
  %v74 = vld [vmem:[%s0 + $0xd4] sm:$0xf]
  %v75 = vld [vmem:[%s0 + $0xd8] sm:$0xf]
  %v76 = vld [vmem:[%s0 + $0xdc] sm:$0xf]
  %v77 = vld [vmem:[%s0 + $0xe0] sm:$0xf]
  %v78 = vld [vmem:[%s0 + $0xe4] sm:$0xf]
  %v79 = vld [vmem:[%s0 + $0xe8] sm:$0xf]
  %v80 = vld [vmem:[%s0 + $0xec] sm:$0xf]
  %v81 = vld [vmem:[%s0 + $0xf0] sm:$0xf]
  %v82 = vld [vmem:[%s0 + $0xf4] sm:$0xf]
  %v83 = vld [vmem:[%s0 + $0xf8] sm:$0xf]
  %v84 = vld [vmem:[%s0 + $0xfc] sm:$0xf]
  %v85 = vunpack.c.l.bf16 %v21
  %v86 = vunpack.c.l.bf16 %v22
  %v87 = vunpack.c.l.bf16 %v23
  %v88 = vunpack.c.l.bf16 %v24
  %v89 = vunpack.c.l.bf16 %v25
  %v90 = vunpack.c.l.bf16 %v26
  %v91 = vunpack.c.l.bf16 %v27
  %v92 = vunpack.c.l.bf16 %v28
  %v93 = vunpack.c.l.bf16 %v29
  %v94 = vunpack.c.l.bf16 %v30
  %v95 = vunpack.c.l.bf16 %v31
  %v96 = vunpack.c.l.bf16 %v32
  %v97 = vunpack.c.l.bf16 %v33
  %v98 = vunpack.c.l.bf16 %v34
  %v99 = vunpack.c.l.bf16 %v35
  %v100 = vunpack.c.l.bf16 %v36
  %v101 = vunpack.c.l.bf16 %v37
  %v102 = vunpack.c.l.bf16 %v38
  %v103 = vunpack.c.l.bf16 %v39
  %v104 = vunpack.c.l.bf16 %v40
  %v105 = vunpack.c.l.bf16 %v41
  %v106 = vunpack.c.l.bf16 %v42
  %v107 = vunpack.c.l.bf16 %v43
  %v108 = vunpack.c.l.bf16 %v44
  %v109 = vunpack.c.l.bf16 %v45
  %v110 = vunpack.c.l.bf16 %v46
  %v111 = vunpack.c.l.bf16 %v47
  %v112 = vunpack.c.l.bf16 %v48
  %v113 = vunpack.c.l.bf16 %v49
  %v114 = vunpack.c.l.bf16 %v50
  %v115 = vunpack.c.l.bf16 %v51
  %v116 = vunpack.c.l.bf16 %v52
  %v117 = vunpack.c.l.bf16 %v53
  %v118 = vunpack.c.l.bf16 %v54
  %v119 = vunpack.c.l.bf16 %v55
  %v120 = vunpack.c.l.bf16 %v56
  %v121 = vunpack.c.l.bf16 %v57
  %v122 = vunpack.c.l.bf16 %v58
  %v123 = vunpack.c.l.bf16 %v59
  %v124 = vunpack.c.l.bf16 %v60
  %v125 = vunpack.c.l.bf16 %v61
  %v126 = vunpack.c.l.bf16 %v62
  %v127 = vunpack.c.l.bf16 %v63
  %v128 = vunpack.c.l.bf16 %v64
  %v129 = vunpack.c.l.bf16 %v65
  %v130 = vunpack.c.l.bf16 %v66
  %v131 = vunpack.c.l.bf16 %v67
  %v132 = vunpack.c.l.bf16 %v68
  %v133 = vunpack.c.l.bf16 %v69
  %v134 = vunpack.c.l.bf16 %v70
  %v135 = vunpack.c.l.bf16 %v71
  %v136 = vunpack.c.l.bf16 %v72
  %v137 = vunpack.c.l.bf16 %v73
  %v138 = vunpack.c.l.bf16 %v74
  %v139 = vunpack.c.l.bf16 %v75
  %v140 = vunpack.c.l.bf16 %v76
  %v141 = vunpack.c.l.bf16 %v77
  %v142 = vunpack.c.l.bf16 %v78
  %v143 = vunpack.c.l.bf16 %v79
  %v144 = vunpack.c.l.bf16 %v80
  %v145 = vunpack.c.l.bf16 %v81
  %v146 = vunpack.c.l.bf16 %v82
  %v147 = vunpack.c.l.bf16 %v83
  %v148 = vunpack.c.l.bf16 %v84
  %v149 = vld [vmem:[%s1] sm:$0x1]
  %v151 = vlaneseq
  %v152 = vshrl.u32 %v151, 7
  %v153 = vsub.s32 0, %v152
  %v154 = vrot.slane %v149, %v153
  %v156 = vmul.f32 %v85, %v154
  %v157 = vmul.f32 %v86, %v154
  %v158 = vmul.f32 %v87, %v154
  %v159 = vmul.f32 %v88, %v154
  %v160 = vmul.f32 %v89, %v154
  %v161 = vmul.f32 %v90, %v154
  %v162 = vmul.f32 %v91, %v154
  %v163 = vmul.f32 %v92, %v154
  %v164 = vmul.f32 %v93, %v154
  %v165 = vmul.f32 %v94, %v154
  %v166 = vmul.f32 %v95, %v154
  %v167 = vmul.f32 %v96, %v154
  %v168 = vmul.f32 %v97, %v154
  %v169 = vmul.f32 %v98, %v154
  %v170 = vmul.f32 %v99, %v154
  %v171 = vmul.f32 %v100, %v154
  %v172 = vmul.f32 %v101, %v154
  %v173 = vmul.f32 %v102, %v154
  %v174 = vmul.f32 %v103, %v154
  %v175 = vmul.f32 %v104, %v154
  %v176 = vmul.f32 %v105, %v154
  %v177 = vmul.f32 %v106, %v154
  %v178 = vmul.f32 %v107, %v154
  %v179 = vmul.f32 %v108, %v154
  %v180 = vmul.f32 %v109, %v154
  %v181 = vmul.f32 %v110, %v154
  %v182 = vmul.f32 %v111, %v154
  %v183 = vmul.f32 %v112, %v154
  %v184 = vmul.f32 %v113, %v154
  %v185 = vmul.f32 %v114, %v154
  %v186 = vmul.f32 %v115, %v154
  %v187 = vmul.f32 %v116, %v154
  %v188 = vmul.f32 %v117, %v154
  %v189 = vmul.f32 %v118, %v154
  %v190 = vmul.f32 %v119, %v154
  %v191 = vmul.f32 %v120, %v154
  %v192 = vmul.f32 %v121, %v154
  %v193 = vmul.f32 %v122, %v154
  %v194 = vmul.f32 %v123, %v154
  %v195 = vmul.f32 %v124, %v154
  %v196 = vmul.f32 %v125, %v154
  %v197 = vmul.f32 %v126, %v154
  %v198 = vmul.f32 %v127, %v154
  %v199 = vmul.f32 %v128, %v154
  %v200 = vmul.f32 %v129, %v154
  %v201 = vmul.f32 %v130, %v154
  %v202 = vmul.f32 %v131, %v154
  %v203 = vmul.f32 %v132, %v154
  %v204 = vmul.f32 %v133, %v154
  %v205 = vmul.f32 %v134, %v154
  %v206 = vmul.f32 %v135, %v154
  %v207 = vmul.f32 %v136, %v154
  %v208 = vmul.f32 %v137, %v154
  %v209 = vmul.f32 %v138, %v154
  %v210 = vmul.f32 %v139, %v154
  %v211 = vmul.f32 %v140, %v154
  %v212 = vmul.f32 %v141, %v154
  %v213 = vmul.f32 %v142, %v154
  %v214 = vmul.f32 %v143, %v154
  %v215 = vmul.f32 %v144, %v154
  %v216 = vmul.f32 %v145, %v154
  %v217 = vmul.f32 %v146, %v154
  %v218 = vmul.f32 %v147, %v154
  %v219 = vmul.f32 %v148, %v154
  %v220 = vld [vmem:[%s2] sm:$0x1]
  %v222 = vlaneseq
  %v223 = vshrl.u32 %v222, 7
  %v224 = vsub.s32 0, %v223
  %v225 = vrot.slane %v220, %v224
  %v227 = vadd.f32 %v156, %v225
  %v228 = vadd.f32 %v157, %v225
  %v229 = vadd.f32 %v158, %v225
  %v230 = vadd.f32 %v159, %v225
  %v231 = vadd.f32 %v160, %v225
  %v232 = vadd.f32 %v161, %v225
  %v233 = vadd.f32 %v162, %v225
  %v234 = vadd.f32 %v163, %v225
  %v235 = vadd.f32 %v164, %v225
  %v236 = vadd.f32 %v165, %v225
  %v237 = vadd.f32 %v166, %v225
  %v238 = vadd.f32 %v167, %v225
  %v239 = vadd.f32 %v168, %v225
  %v240 = vadd.f32 %v169, %v225
  %v241 = vadd.f32 %v170, %v225
  %v242 = vadd.f32 %v171, %v225
  %v243 = vadd.f32 %v172, %v225
  %v244 = vadd.f32 %v173, %v225
  %v245 = vadd.f32 %v174, %v225
  %v246 = vadd.f32 %v175, %v225
  %v247 = vadd.f32 %v176, %v225
  %v248 = vadd.f32 %v177, %v225
  %v249 = vadd.f32 %v178, %v225
  %v250 = vadd.f32 %v179, %v225
  %v251 = vadd.f32 %v180, %v225
  %v252 = vadd.f32 %v181, %v225
  %v253 = vadd.f32 %v182, %v225
  %v254 = vadd.f32 %v183, %v225
  %v255 = vadd.f32 %v184, %v225
  %v256 = vadd.f32 %v185, %v225
  %v257 = vadd.f32 %v186, %v225
  %v258 = vadd.f32 %v187, %v225
  %v259 = vadd.f32 %v188, %v225
  %v260 = vadd.f32 %v189, %v225
  %v261 = vadd.f32 %v190, %v225
  %v262 = vadd.f32 %v191, %v225
  %v263 = vadd.f32 %v192, %v225
  %v264 = vadd.f32 %v193, %v225
  %v265 = vadd.f32 %v194, %v225
  %v266 = vadd.f32 %v195, %v225
  %v267 = vadd.f32 %v196, %v225
  %v268 = vadd.f32 %v197, %v225
  %v269 = vadd.f32 %v198, %v225
  %v270 = vadd.f32 %v199, %v225
  %v271 = vadd.f32 %v200, %v225
  %v272 = vadd.f32 %v201, %v225
  %v273 = vadd.f32 %v202, %v225
  %v274 = vadd.f32 %v203, %v225
  %v275 = vadd.f32 %v204, %v225
  %v276 = vadd.f32 %v205, %v225
  %v277 = vadd.f32 %v206, %v225
  %v278 = vadd.f32 %v207, %v225
  %v279 = vadd.f32 %v208, %v225
  %v280 = vadd.f32 %v209, %v225
  %v281 = vadd.f32 %v210, %v225
  %v282 = vadd.f32 %v211, %v225
  %v283 = vadd.f32 %v212, %v225
  %v284 = vadd.f32 %v213, %v225
  %v285 = vadd.f32 %v214, %v225
  %v286 = vadd.f32 %v215, %v225
  %v287 = vadd.f32 %v216, %v225
  %v288 = vadd.f32 %v217, %v225
  %v289 = vadd.f32 %v218, %v225
  %v290 = vadd.f32 %v219, %v225
  %v291 = vpack.c.bf16 %v228, %v227
  %v292 = vpack.c.bf16 %v230, %v229
  %v293 = vpack.c.bf16 %v232, %v231
  %v294 = vpack.c.bf16 %v234, %v233
  %v295 = vpack.c.bf16 %v236, %v235
  %v296 = vpack.c.bf16 %v238, %v237
  %v297 = vpack.c.bf16 %v240, %v239
  %v298 = vpack.c.bf16 %v242, %v241
  %v299 = vpack.c.bf16 %v244, %v243
  %v300 = vpack.c.bf16 %v246, %v245
  %v301 = vpack.c.bf16 %v248, %v247
  %v302 = vpack.c.bf16 %v250, %v249
  %v303 = vpack.c.bf16 %v252, %v251
  %v304 = vpack.c.bf16 %v254, %v253
  %v305 = vpack.c.bf16 %v256, %v255
  %v306 = vpack.c.bf16 %v258, %v257
  %v307 = vpack.c.bf16 %v260, %v259
  %v308 = vpack.c.bf16 %v262, %v261
  %v309 = vpack.c.bf16 %v264, %v263
  %v310 = vpack.c.bf16 %v266, %v265
  %v311 = vpack.c.bf16 %v268, %v267
  %v312 = vpack.c.bf16 %v270, %v269
  %v313 = vpack.c.bf16 %v272, %v271
  %v314 = vpack.c.bf16 %v274, %v273
  %v315 = vpack.c.bf16 %v276, %v275
  %v316 = vpack.c.bf16 %v278, %v277
  %v317 = vpack.c.bf16 %v280, %v279
  %v318 = vpack.c.bf16 %v282, %v281
  %v319 = vpack.c.bf16 %v284, %v283
  %v320 = vpack.c.bf16 %v286, %v285
  %v321 = vpack.c.bf16 %v288, %v287
  %v322 = vpack.c.bf16 %v290, %v289
  %v323 = vld [vmem:[%s3] sm:$0xf]
  %v324 = vld [vmem:[%s3 + $0x4] sm:$0xf]
  %v325 = vld [vmem:[%s3 + $0x8] sm:$0xf]
  %v326 = vld [vmem:[%s3 + $0xc] sm:$0xf]
  %v327 = vld [vmem:[%s3 + $0x10] sm:$0xf]
  %v328 = vld [vmem:[%s3 + $0x14] sm:$0xf]
  %v329 = vld [vmem:[%s3 + $0x18] sm:$0xf]
  %v330 = vld [vmem:[%s3 + $0x1c] sm:$0xf]
  %v331 = vld [vmem:[%s3 + $0x20] sm:$0xf]
  %v332 = vld [vmem:[%s3 + $0x24] sm:$0xf]
  %v333 = vld [vmem:[%s3 + $0x28] sm:$0xf]
  %v334 = vld [vmem:[%s3 + $0x2c] sm:$0xf]
  %v335 = vld [vmem:[%s3 + $0x30] sm:$0xf]
  %v336 = vld [vmem:[%s3 + $0x34] sm:$0xf]
  %v337 = vld [vmem:[%s3 + $0x38] sm:$0xf]
  %v338 = vld [vmem:[%s3 + $0x3c] sm:$0xf]
  %v355 = vunpack.c.l.b16 %v323
  %v356 = vunpack.c.l.b16 %v324
  %v357 = vunpack.c.l.b16 %v325
  %v358 = vunpack.c.l.b16 %v326
  %v359 = vunpack.c.l.b16 %v327
  %v360 = vunpack.c.l.b16 %v328
  %v361 = vunpack.c.l.b16 %v329
  %v362 = vunpack.c.l.b16 %v330
  %v363 = vunpack.c.l.b16 %v331
  %v364 = vunpack.c.l.b16 %v332
  %v365 = vunpack.c.l.b16 %v333
  %v366 = vunpack.c.l.b16 %v334
  %v367 = vunpack.c.l.b16 %v335
  %v368 = vunpack.c.l.b16 %v336
  %v369 = vunpack.c.l.b16 %v337
  %v370 = vunpack.c.l.b16 %v338
  %v371 = vpack.c.b16 %v356, %v355
  %v372 = vpack.c.b16 %v358, %v357
  %v373 = vpack.c.b16 %v360, %v359
  %v374 = vpack.c.b16 %v362, %v361
  %v375 = vpack.c.b16 %v364, %v363
  %v376 = vpack.c.b16 %v366, %v365
  %v377 = vpack.c.b16 %v368, %v367
  %v378 = vpack.c.b16 %v370, %v369
  %387 = vmatprep.subr.bf16.mxu0 0
  %388 = vmatpush1.bf16.msra.mxu0 %v371
  %389 = vmatprep.subr.bf16.mxu0 0
  %390 = vmatpush1.bf16.msra.mxu0 %v372
  %391 = vmatprep.subr.bf16.mxu0 0
  %392 = vmatpush1.bf16.msra.mxu0 %v373
  %393 = vmatprep.subr.bf16.mxu0 0
  %394 = vmatpush1.bf16.msra.mxu0 %v374
  %395 = vmatprep.subr.bf16.mxu0 0
  %396 = vmatpush1.bf16.msra.mxu0 %v375
  %397 = vmatprep.subr.bf16.mxu0 0
  %398 = vmatpush1.bf16.msra.mxu0 %v376
  %399 = vmatprep.subr.bf16.mxu0 0
  %400 = vmatpush1.bf16.msra.mxu0 %v377
  %401 = vmatprep.subr.bf16.mxu0 0
  %402 = vmatpush1.bf16.msra.mxu0 %v378
  %403 = vmatprep.subr.bf16.mxu0 0
  %404 = vmatpush1.bf16.msra.mxu0 0
  %405 = vmatprep.subr.bf16.mxu0 0
  %406 = vmatpush1.bf16.msra.mxu0 0
  %407 = vmatprep.subr.bf16.mxu0 0
  %408 = vmatpush1.bf16.msra.mxu0 0
  %409 = vmatprep.subr.bf16.mxu0 0
  %410 = vmatpush1.bf16.msra.mxu0 0
  %411 = vmatprep.subr.bf16.mxu0 0
  %412 = vmatpush1.bf16.msra.mxu0 0
  %413 = vmatprep.subr.bf16.mxu0 0
  %414 = vmatpush1.bf16.msra.mxu0 0
  %415 = vmatprep.subr.bf16.mxu0 0
  %416 = vmatpush1.bf16.msra.mxu0 0
  %417 = vmatprep.subr.bf16.mxu0 0
  %418 = vmatpush1.bf16.msra.mxu0 0
  %419 = vmatprep.mubr.bf16.mxu0 0
  %420 = vmatmul.mubr.bf16.gmra.mrb[0].mxu0 %v291
  %v421 = vpop.f32.mrb[0].mxu0
  %v422 = vadd.f32 0.0, %v421
  %v423 = vpop.f32.mrb[0].mxu0
  %v424 = vpop.f32.mrb[0].mxu0
  %v425 = vadd.f32 0.0, %v424
  %v426 = vpop.f32.mrb[0].mxu0
  %427 = vmatprep.mubr.bf16.mxu0 0
  %428 = vmatmul.mubr.bf16.gmra.mrb[0].mxu0 %v292
  %v429 = vpop.f32.mrb[0].mxu0
  %v430 = vadd.f32 0.0, %v429
  %v431 = vpop.f32.mrb[0].mxu0
  %v432 = vpop.f32.mrb[0].mxu0
  %v433 = vadd.f32 0.0, %v432
  %v434 = vpop.f32.mrb[0].mxu0
  %435 = vmatprep.mubr.bf16.mxu0 0
  %436 = vmatmul.mubr.bf16.gmra.mrb[0].mxu0 %v293
  %v437 = vpop.f32.mrb[0].mxu0
  %v438 = vadd.f32 0.0, %v437
  %v439 = vpop.f32.mrb[0].mxu0
  %v440 = vpop.f32.mrb[0].mxu0
  %v441 = vadd.f32 0.0, %v440
  %v442 = vpop.f32.mrb[0].mxu0
  %443 = vmatprep.mubr.bf16.mxu0 0
  %444 = vmatmul.mubr.bf16.gmra.mrb[0].mxu0 %v294
  %v445 = vpop.f32.mrb[0].mxu0
  %v446 = vadd.f32 0.0, %v445
  %v447 = vpop.f32.mrb[0].mxu0
  %v448 = vpop.f32.mrb[0].mxu0
  %v449 = vadd.f32 0.0, %v448
  %v450 = vpop.f32.mrb[0].mxu0
  %451 = vmatprep.mubr.bf16.mxu0 0
  %452 = vmatmul.mubr.bf16.gmra.mrb[0].mxu0 %v295
  %v453 = vpop.f32.mrb[0].mxu0
  %v454 = vadd.f32 0.0, %v453
  %v455 = vpop.f32.mrb[0].mxu0
  %v456 = vpop.f32.mrb[0].mxu0
  %v457 = vadd.f32 0.0, %v456
  %v458 = vpop.f32.mrb[0].mxu0
  %459 = vmatprep.mubr.bf16.mxu0 0
  %460 = vmatmul.mubr.bf16.gmra.mrb[0].mxu0 %v296
  %v461 = vpop.f32.mrb[0].mxu0
  %v462 = vadd.f32 0.0, %v461
  %v463 = vpop.f32.mrb[0].mxu0
  %v464 = vpop.f32.mrb[0].mxu0
  %v465 = vadd.f32 0.0, %v464
  %v466 = vpop.f32.mrb[0].mxu0
  %467 = vmatprep.mubr.bf16.mxu0 0
  %468 = vmatmul.mubr.bf16.gmra.mrb[0].mxu0 %v297
  %v469 = vpop.f32.mrb[0].mxu0
  %v470 = vadd.f32 0.0, %v469
  %v471 = vpop.f32.mrb[0].mxu0
  %v472 = vpop.f32.mrb[0].mxu0
  %v473 = vadd.f32 0.0, %v472
  %v474 = vpop.f32.mrb[0].mxu0
  %475 = vmatprep.mubr.bf16.mxu0 0
  %476 = vmatmul.mubr.bf16.gmra.mrb[0].mxu0 %v298
  %v477 = vpop.f32.mrb[0].mxu0
  %v478 = vadd.f32 0.0, %v477
  %v479 = vpop.f32.mrb[0].mxu0
  %v480 = vpop.f32.mrb[0].mxu0
  %v481 = vadd.f32 0.0, %v480
  %v482 = vpop.f32.mrb[0].mxu0
  %483 = vmatprep.mubr.bf16.mxu0 0
  %484 = vmatmul.mubr.bf16.gmra.mrb[0].mxu0 %v299
  %v485 = vpop.f32.mrb[0].mxu0
  %v486 = vadd.f32 0.0, %v485
  %v487 = vpop.f32.mrb[0].mxu0
  %v488 = vpop.f32.mrb[0].mxu0
  %v489 = vadd.f32 0.0, %v488
  %v490 = vpop.f32.mrb[0].mxu0
  %491 = vmatprep.mubr.bf16.mxu0 0
  %492 = vmatmul.mubr.bf16.gmra.mrb[0].mxu0 %v300
  %v493 = vpop.f32.mrb[0].mxu0
  %v494 = vadd.f32 0.0, %v493
  %v495 = vpop.f32.mrb[0].mxu0
  %v496 = vpop.f32.mrb[0].mxu0
  %v497 = vadd.f32 0.0, %v496
  %v498 = vpop.f32.mrb[0].mxu0
  %499 = vmatprep.mubr.bf16.mxu0 0
  %500 = vmatmul.mubr.bf16.gmra.mrb[0].mxu0 %v301
  %v501 = vpop.f32.mrb[0].mxu0
  %v502 = vadd.f32 0.0, %v501
  %v503 = vpop.f32.mrb[0].mxu0
  %v504 = vpop.f32.mrb[0].mxu0
  %v505 = vadd.f32 0.0, %v504
  %v506 = vpop.f32.mrb[0].mxu0
  %507 = vmatprep.mubr.bf16.mxu0 0
  %508 = vmatmul.mubr.bf16.gmra.mrb[0].mxu0 %v302
  %v509 = vpop.f32.mrb[0].mxu0
  %v510 = vadd.f32 0.0, %v509
  %v511 = vpop.f32.mrb[0].mxu0
  %v512 = vpop.f32.mrb[0].mxu0
  %v513 = vadd.f32 0.0, %v512
  %v514 = vpop.f32.mrb[0].mxu0
  %515 = vmatprep.mubr.bf16.mxu0 0
  %516 = vmatmul.mubr.bf16.gmra.mrb[0].mxu0 %v303
  %v517 = vpop.f32.mrb[0].mxu0
  %v518 = vadd.f32 0.0, %v517
  %v519 = vpop.f32.mrb[0].mxu0
  %v520 = vpop.f32.mrb[0].mxu0
  %v521 = vadd.f32 0.0, %v520
  %v522 = vpop.f32.mrb[0].mxu0
  %523 = vmatprep.mubr.bf16.mxu0 0
  %524 = vmatmul.mubr.bf16.gmra.mrb[0].mxu0 %v304
  %v525 = vpop.f32.mrb[0].mxu0
  %v526 = vadd.f32 0.0, %v525
  %v527 = vpop.f32.mrb[0].mxu0
  %v528 = vpop.f32.mrb[0].mxu0
  %v529 = vadd.f32 0.0, %v528
  %v530 = vpop.f32.mrb[0].mxu0
  %531 = vmatprep.mubr.bf16.mxu0 0
  %532 = vmatmul.mubr.bf16.gmra.mrb[0].mxu0 %v305
  %v533 = vpop.f32.mrb[0].mxu0
  %v534 = vadd.f32 0.0, %v533
  %v535 = vpop.f32.mrb[0].mxu0
  %v536 = vpop.f32.mrb[0].mxu0
  %v537 = vadd.f32 0.0, %v536
  %v538 = vpop.f32.mrb[0].mxu0
  %539 = vmatprep.mubr.bf16.mxu0 0
  %540 = vmatmul.mubr.bf16.gmra.mrb[0].mxu0 %v306
  %v541 = vpop.f32.mrb[0].mxu0
  %v542 = vadd.f32 0.0, %v541
  %v543 = vpop.f32.mrb[0].mxu0
  %v544 = vpop.f32.mrb[0].mxu0
  %v545 = vadd.f32 0.0, %v544
  %v546 = vpop.f32.mrb[0].mxu0
  %547 = vmatprep.mubr.bf16.mxu0 0
  %548 = vmatmul.mubr.bf16.gmra.mrb[0].mxu0 %v307
  %v549 = vpop.f32.mrb[0].mxu0
  %v550 = vadd.f32 0.0, %v549
  %v551 = vpop.f32.mrb[0].mxu0
  %v552 = vpop.f32.mrb[0].mxu0
  %v553 = vadd.f32 0.0, %v552
  %v554 = vpop.f32.mrb[0].mxu0
  %555 = vmatprep.mubr.bf16.mxu0 0
  %556 = vmatmul.mubr.bf16.gmra.mrb[0].mxu0 %v308
  %v557 = vpop.f32.mrb[0].mxu0
  %v558 = vadd.f32 0.0, %v557
  %v559 = vpop.f32.mrb[0].mxu0
  %v560 = vpop.f32.mrb[0].mxu0
  %v561 = vadd.f32 0.0, %v560
  %v562 = vpop.f32.mrb[0].mxu0
  %563 = vmatprep.mubr.bf16.mxu0 0
  %564 = vmatmul.mubr.bf16.gmra.mrb[0].mxu0 %v309
  %v565 = vpop.f32.mrb[0].mxu0
  %v566 = vadd.f32 0.0, %v565
  %v567 = vpop.f32.mrb[0].mxu0
  %v568 = vpop.f32.mrb[0].mxu0
  %v569 = vadd.f32 0.0, %v568
  %v570 = vpop.f32.mrb[0].mxu0
  %571 = vmatprep.mubr.bf16.mxu0 0
  %572 = vmatmul.mubr.bf16.gmra.mrb[0].mxu0 %v310
  %v573 = vpop.f32.mrb[0].mxu0
  %v574 = vadd.f32 0.0, %v573
  %v575 = vpop.f32.mrb[0].mxu0
  %v576 = vpop.f32.mrb[0].mxu0
  %v577 = vadd.f32 0.0, %v576
  %v578 = vpop.f32.mrb[0].mxu0
  %579 = vmatprep.mubr.bf16.mxu0 0
  %580 = vmatmul.mubr.bf16.gmra.mrb[0].mxu0 %v311
  %v581 = vpop.f32.mrb[0].mxu0
  %v582 = vadd.f32 0.0, %v581
  %v583 = vpop.f32.mrb[0].mxu0
  %v584 = vpop.f32.mrb[0].mxu0
  %v585 = vadd.f32 0.0, %v584
  %v586 = vpop.f32.mrb[0].mxu0
  %587 = vmatprep.mubr.bf16.mxu0 0
  %588 = vmatmul.mubr.bf16.gmra.mrb[0].mxu0 %v312
  %v589 = vpop.f32.mrb[0].mxu0
  %v590 = vadd.f32 0.0, %v589
  %v591 = vpop.f32.mrb[0].mxu0
  %v592 = vpop.f32.mrb[0].mxu0
  %v593 = vadd.f32 0.0, %v592
  %v594 = vpop.f32.mrb[0].mxu0
  %595 = vmatprep.mubr.bf16.mxu0 0
  %596 = vmatmul.mubr.bf16.gmra.mrb[0].mxu0 %v313
  %v597 = vpop.f32.mrb[0].mxu0
  %v598 = vadd.f32 0.0, %v597
  %v599 = vpop.f32.mrb[0].mxu0
  %v600 = vpop.f32.mrb[0].mxu0
  %v601 = vadd.f32 0.0, %v600
  %v602 = vpop.f32.mrb[0].mxu0
  %603 = vmatprep.mubr.bf16.mxu0 0
  %604 = vmatmul.mubr.bf16.gmra.mrb[0].mxu0 %v314
  %v605 = vpop.f32.mrb[0].mxu0
  %v606 = vadd.f32 0.0, %v605
  %v607 = vpop.f32.mrb[0].mxu0
  %v608 = vpop.f32.mrb[0].mxu0
  %v609 = vadd.f32 0.0, %v608
  %v610 = vpop.f32.mrb[0].mxu0
  %611 = vmatprep.mubr.bf16.mxu0 0
  %612 = vmatmul.mubr.bf16.gmra.mrb[0].mxu0 %v315
  %v613 = vpop.f32.mrb[0].mxu0
  %v614 = vadd.f32 0.0, %v613
  %v615 = vpop.f32.mrb[0].mxu0
  %v616 = vpop.f32.mrb[0].mxu0
  %v617 = vadd.f32 0.0, %v616
  %v618 = vpop.f32.mrb[0].mxu0
  %619 = vmatprep.mubr.bf16.mxu0 0
  %620 = vmatmul.mubr.bf16.gmra.mrb[0].mxu0 %v316
  %v621 = vpop.f32.mrb[0].mxu0
  %v622 = vadd.f32 0.0, %v621
  %v623 = vpop.f32.mrb[0].mxu0
  %v624 = vpop.f32.mrb[0].mxu0
  %v625 = vadd.f32 0.0, %v624
  %v626 = vpop.f32.mrb[0].mxu0
  %627 = vmatprep.mubr.bf16.mxu0 0
  %628 = vmatmul.mubr.bf16.gmra.mrb[0].mxu0 %v317
  %v629 = vpop.f32.mrb[0].mxu0
  %v630 = vadd.f32 0.0, %v629
  %v631 = vpop.f32.mrb[0].mxu0
  %v632 = vpop.f32.mrb[0].mxu0
  %v633 = vadd.f32 0.0, %v632
  %v634 = vpop.f32.mrb[0].mxu0
  %635 = vmatprep.mubr.bf16.mxu0 0
  %636 = vmatmul.mubr.bf16.gmra.mrb[0].mxu0 %v318
  %v637 = vpop.f32.mrb[0].mxu0
  %v638 = vadd.f32 0.0, %v637
  %v639 = vpop.f32.mrb[0].mxu0
  %v640 = vpop.f32.mrb[0].mxu0
  %v641 = vadd.f32 0.0, %v640
  %v642 = vpop.f32.mrb[0].mxu0
  %643 = vmatprep.mubr.bf16.mxu0 0
  %644 = vmatmul.mubr.bf16.gmra.mrb[0].mxu0 %v319
  %v645 = vpop.f32.mrb[0].mxu0
  %v646 = vadd.f32 0.0, %v645
  %v647 = vpop.f32.mrb[0].mxu0
  %v648 = vpop.f32.mrb[0].mxu0
  %v649 = vadd.f32 0.0, %v648
  %v650 = vpop.f32.mrb[0].mxu0
  %651 = vmatprep.mubr.bf16.mxu0 0
  %652 = vmatmul.mubr.bf16.gmra.mrb[0].mxu0 %v320
  %v653 = vpop.f32.mrb[0].mxu0
  %v654 = vadd.f32 0.0, %v653
  %v655 = vpop.f32.mrb[0].mxu0
  %v656 = vpop.f32.mrb[0].mxu0
  %v657 = vadd.f32 0.0, %v656
  %v658 = vpop.f32.mrb[0].mxu0
  %659 = vmatprep.mubr.bf16.mxu0 0
  %660 = vmatmul.mubr.bf16.gmra.mrb[0].mxu0 %v321
  %v661 = vpop.f32.mrb[0].mxu0
  %v662 = vadd.f32 0.0, %v661
  %v663 = vpop.f32.mrb[0].mxu0
  %v664 = vpop.f32.mrb[0].mxu0
  %v665 = vadd.f32 0.0, %v664
  %v666 = vpop.f32.mrb[0].mxu0
  %667 = vmatprep.mubr.bf16.mxu0 0
  %668 = vmatmul.mubr.bf16.gmra.mrb[0].mxu0 %v322
  %v669 = vpop.f32.mrb[0].mxu0
  %v670 = vadd.f32 0.0, %v669
  %v671 = vpop.f32.mrb[0].mxu0
  %v672 = vpop.f32.mrb[0].mxu0
  %v673 = vadd.f32 0.0, %v672
  %v674 = vpop.f32.mrb[0].mxu0
  %675 = vdwg.mxu0
  %v676 = vpack.c.bf16 %v425, %v422
  %v677 = vpack.c.bf16 %v433, %v430
  %v678 = vpack.c.bf16 %v441, %v438
  %v679 = vpack.c.bf16 %v449, %v446
  %v680 = vpack.c.bf16 %v457, %v454
  %v681 = vpack.c.bf16 %v465, %v462
  %v682 = vpack.c.bf16 %v473, %v470
  %v683 = vpack.c.bf16 %v481, %v478
  %v684 = vpack.c.bf16 %v489, %v486
  %v685 = vpack.c.bf16 %v497, %v494
  %v686 = vpack.c.bf16 %v505, %v502
  %v687 = vpack.c.bf16 %v513, %v510
  %v688 = vpack.c.bf16 %v521, %v518
  %v689 = vpack.c.bf16 %v529, %v526
  %v690 = vpack.c.bf16 %v537, %v534
  %v691 = vpack.c.bf16 %v545, %v542
  %v692 = vpack.c.bf16 %v553, %v550
  %v693 = vpack.c.bf16 %v561, %v558
  %v694 = vpack.c.bf16 %v569, %v566
  %v695 = vpack.c.bf16 %v577, %v574
  %v696 = vpack.c.bf16 %v585, %v582
  %v697 = vpack.c.bf16 %v593, %v590
  %v698 = vpack.c.bf16 %v601, %v598
  %v699 = vpack.c.bf16 %v609, %v606
  %v700 = vpack.c.bf16 %v617, %v614
  %v701 = vpack.c.bf16 %v625, %v622
  %v702 = vpack.c.bf16 %v633, %v630
  %v703 = vpack.c.bf16 %v641, %v638
  %v704 = vpack.c.bf16 %v649, %v646
  %v705 = vpack.c.bf16 %v657, %v654
  %v706 = vpack.c.bf16 %v665, %v662
  %v707 = vpack.c.bf16 %v673, %v670
  %v740 = vunpack.c.l.b16 %v676
  %v741 = vunpack.c.h.b16 %v676
  %v742 = vunpack.c.l.b16 %v677
  %v743 = vunpack.c.h.b16 %v677
  %v744 = vunpack.c.l.b16 %v678
  %v745 = vunpack.c.h.b16 %v678
  %v746 = vunpack.c.l.b16 %v679
  %v747 = vunpack.c.h.b16 %v679
  %v748 = vunpack.c.l.b16 %v680
  %v749 = vunpack.c.h.b16 %v680
  %v750 = vunpack.c.l.b16 %v681
  %v751 = vunpack.c.h.b16 %v681
  %v752 = vunpack.c.l.b16 %v682
  %v753 = vunpack.c.h.b16 %v682
  %v754 = vunpack.c.l.b16 %v683
  %v755 = vunpack.c.h.b16 %v683
  %v756 = vunpack.c.l.b16 %v684
  %v757 = vunpack.c.h.b16 %v684
  %v758 = vunpack.c.l.b16 %v685
  %v759 = vunpack.c.h.b16 %v685
  %v760 = vunpack.c.l.b16 %v686
  %v761 = vunpack.c.h.b16 %v686
  %v762 = vunpack.c.l.b16 %v687
  %v763 = vunpack.c.h.b16 %v687
  %v764 = vunpack.c.l.b16 %v688
  %v765 = vunpack.c.h.b16 %v688
  %v766 = vunpack.c.l.b16 %v689
  %v767 = vunpack.c.h.b16 %v689
  %v768 = vunpack.c.l.b16 %v690
  %v769 = vunpack.c.h.b16 %v690
  %v770 = vunpack.c.l.b16 %v691
  %v771 = vunpack.c.h.b16 %v691
  %v772 = vunpack.c.l.b16 %v692
  %v773 = vunpack.c.h.b16 %v692
  %v774 = vunpack.c.l.b16 %v693
  %v775 = vunpack.c.h.b16 %v693
  %v776 = vunpack.c.l.b16 %v694
  %v777 = vunpack.c.h.b16 %v694
  %v778 = vunpack.c.l.b16 %v695
  %v779 = vunpack.c.h.b16 %v695
  %v780 = vunpack.c.l.b16 %v696
  %v781 = vunpack.c.h.b16 %v696
  %v782 = vunpack.c.l.b16 %v697
  %v783 = vunpack.c.h.b16 %v697
  %v784 = vunpack.c.l.b16 %v698
  %v785 = vunpack.c.h.b16 %v698
  %v786 = vunpack.c.l.b16 %v699
  %v787 = vunpack.c.h.b16 %v699
  %v788 = vunpack.c.l.b16 %v700
  %v789 = vunpack.c.h.b16 %v700
  %v790 = vunpack.c.l.b16 %v701
  %v791 = vunpack.c.h.b16 %v701
  %v792 = vunpack.c.l.b16 %v702
  %v793 = vunpack.c.h.b16 %v702
  %v794 = vunpack.c.l.b16 %v703
  %v795 = vunpack.c.h.b16 %v703
  %v796 = vunpack.c.l.b16 %v704
  %v797 = vunpack.c.h.b16 %v704
  %v798 = vunpack.c.l.b16 %v705
  %v799 = vunpack.c.h.b16 %v705
  %v800 = vunpack.c.l.b16 %v706
  %v801 = vunpack.c.h.b16 %v706
  %v802 = vunpack.c.l.b16 %v707
  %v803 = vunpack.c.h.b16 %v707
  %v804 = vpack.c.b16 %v740, %v740
  %v805 = vpack.c.b16 %v741, %v741
  %v806 = vpack.c.b16 %v742, %v742
  %v807 = vpack.c.b16 %v743, %v743
  %v808 = vpack.c.b16 %v744, %v744
  %v809 = vpack.c.b16 %v745, %v745
  %v810 = vpack.c.b16 %v746, %v746
  %v811 = vpack.c.b16 %v747, %v747
  %v812 = vpack.c.b16 %v748, %v748
  %v813 = vpack.c.b16 %v749, %v749
  %v814 = vpack.c.b16 %v750, %v750
  %v815 = vpack.c.b16 %v751, %v751
  %v816 = vpack.c.b16 %v752, %v752
  %v817 = vpack.c.b16 %v753, %v753
  %v818 = vpack.c.b16 %v754, %v754
  %v819 = vpack.c.b16 %v755, %v755
  %v820 = vpack.c.b16 %v756, %v756
  %v821 = vpack.c.b16 %v757, %v757
  %v822 = vpack.c.b16 %v758, %v758
  %v823 = vpack.c.b16 %v759, %v759
  %v824 = vpack.c.b16 %v760, %v760
  %v825 = vpack.c.b16 %v761, %v761
  %v826 = vpack.c.b16 %v762, %v762
  %v827 = vpack.c.b16 %v763, %v763
  %v828 = vpack.c.b16 %v764, %v764
  %v829 = vpack.c.b16 %v765, %v765
  %v830 = vpack.c.b16 %v766, %v766
  %v831 = vpack.c.b16 %v767, %v767
  %v832 = vpack.c.b16 %v768, %v768
  %v833 = vpack.c.b16 %v769, %v769
  %v834 = vpack.c.b16 %v770, %v770
  %v835 = vpack.c.b16 %v771, %v771
  %v836 = vpack.c.b16 %v772, %v772
  %v837 = vpack.c.b16 %v773, %v773
  %v838 = vpack.c.b16 %v774, %v774
  %v839 = vpack.c.b16 %v775, %v775
  %v840 = vpack.c.b16 %v776, %v776
  %v841 = vpack.c.b16 %v777, %v777
  %v842 = vpack.c.b16 %v778, %v778
  %v843 = vpack.c.b16 %v779, %v779
  %v844 = vpack.c.b16 %v780, %v780
  %v845 = vpack.c.b16 %v781, %v781
  %v846 = vpack.c.b16 %v782, %v782
  %v847 = vpack.c.b16 %v783, %v783
  %v848 = vpack.c.b16 %v784, %v784
  %v849 = vpack.c.b16 %v785, %v785
  %v850 = vpack.c.b16 %v786, %v786
  %v851 = vpack.c.b16 %v787, %v787
  %v852 = vpack.c.b16 %v788, %v788
  %v853 = vpack.c.b16 %v789, %v789
  %v854 = vpack.c.b16 %v790, %v790
  %v855 = vpack.c.b16 %v791, %v791
  %v856 = vpack.c.b16 %v792, %v792
  %v857 = vpack.c.b16 %v793, %v793
  %v858 = vpack.c.b16 %v794, %v794
  %v859 = vpack.c.b16 %v795, %v795
  %v860 = vpack.c.b16 %v796, %v796
  %v861 = vpack.c.b16 %v797, %v797
  %v862 = vpack.c.b16 %v798, %v798
  %v863 = vpack.c.b16 %v799, %v799
  %v864 = vpack.c.b16 %v800, %v800
  %v865 = vpack.c.b16 %v801, %v801
  %v866 = vpack.c.b16 %v802, %v802
  %v867 = vpack.c.b16 %v803, %v803
  %932 = vst [vmem:[%s4] sm:$0xf] %v804
  %933 = vst [vmem:[%s4 + $0x4] sm:$0xf] %v805
  %934 = vst [vmem:[%s4 + $0x8] sm:$0xf] %v806
  %935 = vst [vmem:[%s4 + $0xc] sm:$0xf] %v807
  %936 = vst [vmem:[%s4 + $0x10] sm:$0xf] %v808
  %937 = vst [vmem:[%s4 + $0x14] sm:$0xf] %v809
  %938 = vst [vmem:[%s4 + $0x18] sm:$0xf] %v810
  %939 = vst [vmem:[%s4 + $0x1c] sm:$0xf] %v811
  %940 = vst [vmem:[%s4 + $0x20] sm:$0xf] %v812
  %941 = vst [vmem:[%s4 + $0x24] sm:$0xf] %v813
  %942 = vst [vmem:[%s4 + $0x28] sm:$0xf] %v814
  %943 = vst [vmem:[%s4 + $0x2c] sm:$0xf] %v815
  %944 = vst [vmem:[%s4 + $0x30] sm:$0xf] %v816
  %945 = vst [vmem:[%s4 + $0x34] sm:$0xf] %v817
  %946 = vst [vmem:[%s4 + $0x38] sm:$0xf] %v818
  %947 = vst [vmem:[%s4 + $0x3c] sm:$0xf] %v819
  %948 = vst [vmem:[%s4 + $0x40] sm:$0xf] %v820
  %949 = vst [vmem:[%s4 + $0x44] sm:$0xf] %v821
  %950 = vst [vmem:[%s4 + $0x48] sm:$0xf] %v822
  %951 = vst [vmem:[%s4 + $0x4c] sm:$0xf] %v823
  %952 = vst [vmem:[%s4 + $0x50] sm:$0xf] %v824
  %953 = vst [vmem:[%s4 + $0x54] sm:$0xf] %v825
  %954 = vst [vmem:[%s4 + $0x58] sm:$0xf] %v826
  %955 = vst [vmem:[%s4 + $0x5c] sm:$0xf] %v827
  %956 = vst [vmem:[%s4 + $0x60] sm:$0xf] %v828
  %957 = vst [vmem:[%s4 + $0x64] sm:$0xf] %v829
  %958 = vst [vmem:[%s4 + $0x68] sm:$0xf] %v830
  %959 = vst [vmem:[%s4 + $0x6c] sm:$0xf] %v831
  %960 = vst [vmem:[%s4 + $0x70] sm:$0xf] %v832
  %961 = vst [vmem:[%s4 + $0x74] sm:$0xf] %v833
  %962 = vst [vmem:[%s4 + $0x78] sm:$0xf] %v834
  %963 = vst [vmem:[%s4 + $0x7c] sm:$0xf] %v835
  %964 = vst [vmem:[%s4 + $0x80] sm:$0xf] %v836
  %965 = vst [vmem:[%s4 + $0x84] sm:$0xf] %v837
  %966 = vst [vmem:[%s4 + $0x88] sm:$0xf] %v838
  %967 = vst [vmem:[%s4 + $0x8c] sm:$0xf] %v839
  %968 = vst [vmem:[%s4 + $0x90] sm:$0xf] %v840
  %969 = vst [vmem:[%s4 + $0x94] sm:$0xf] %v841
  %970 = vst [vmem:[%s4 + $0x98] sm:$0xf] %v842
  %971 = vst [vmem:[%s4 + $0x9c] sm:$0xf] %v843
  %972 = vst [vmem:[%s4 + $0xa0] sm:$0xf] %v844
  %973 = vst [vmem:[%s4 + $0xa4] sm:$0xf] %v845
  %974 = vst [vmem:[%s4 + $0xa8] sm:$0xf] %v846
  %975 = vst [vmem:[%s4 + $0xac] sm:$0xf] %v847
  %976 = vst [vmem:[%s4 + $0xb0] sm:$0xf] %v848
  %977 = vst [vmem:[%s4 + $0xb4] sm:$0xf] %v849
  %978 = vst [vmem:[%s4 + $0xb8] sm:$0xf] %v850
  %979 = vst [vmem:[%s4 + $0xbc] sm:$0xf] %v851
  %980 = vst [vmem:[%s4 + $0xc0] sm:$0xf] %v852
  %981 = vst [vmem:[%s4 + $0xc4] sm:$0xf] %v853
  %982 = vst [vmem:[%s4 + $0xc8] sm:$0xf] %v854
  %983 = vst [vmem:[%s4 + $0xcc] sm:$0xf] %v855
  %984 = vst [vmem:[%s4 + $0xd0] sm:$0xf] %v856
  %985 = vst [vmem:[%s4 + $0xd4] sm:$0xf] %v857
  %986 = vst [vmem:[%s4 + $0xd8] sm:$0xf] %v858
  %987 = vst [vmem:[%s4 + $0xdc] sm:$0xf] %v859
  %988 = vst [vmem:[%s4 + $0xe0] sm:$0xf] %v860
  %989 = vst [vmem:[%s4 + $0xe4] sm:$0xf] %v861
  %990 = vst [vmem:[%s4 + $0xe8] sm:$0xf] %v862
  %991 = vst [vmem:[%s4 + $0xec] sm:$0xf] %v863
  %992 = vst [vmem:[%s4 + $0xf0] sm:$0xf] %v864
  %993 = vst [vmem:[%s4 + $0xf4] sm:$0xf] %v865
  %994 = vst [vmem:[%s4 + $0xf8] sm:$0xf] %v866
  %995 = vst [vmem:[%s4 + $0xfc] sm:$0xf] %v867
  %v996 = vadd.f32 %v422, %v425
  %v997 = vadd.f32 %v996, %v430
  %v998 = vadd.f32 %v997, %v433
  %v999 = vadd.f32 %v998, %v438
  %v1000 = vadd.f32 %v999, %v441
  %v1001 = vadd.f32 %v1000, %v446
  %v1002 = vadd.f32 %v1001, %v449
  %v1003 = vadd.f32 %v1002, %v454
  %v1004 = vadd.f32 %v1003, %v457
  %v1005 = vadd.f32 %v1004, %v462
  %v1006 = vadd.f32 %v1005, %v465
  %v1007 = vadd.f32 %v1006, %v470
  %v1008 = vadd.f32 %v1007, %v473
  %v1009 = vadd.f32 %v1008, %v478
  %v1010 = vadd.f32 %v1009, %v481
  %v1011 = vadd.f32 %v1010, %v486
  %v1012 = vadd.f32 %v1011, %v489
  %v1013 = vadd.f32 %v1012, %v494
  %v1014 = vadd.f32 %v1013, %v497
  %v1015 = vadd.f32 %v1014, %v502
  %v1016 = vadd.f32 %v1015, %v505
  %v1017 = vadd.f32 %v1016, %v510
  %v1018 = vadd.f32 %v1017, %v513
  %v1019 = vadd.f32 %v1018, %v518
  %v1020 = vadd.f32 %v1019, %v521
  %v1021 = vadd.f32 %v1020, %v526
  %v1022 = vadd.f32 %v1021, %v529
  %v1023 = vadd.f32 %v1022, %v534
  %v1024 = vadd.f32 %v1023, %v537
  %v1025 = vadd.f32 %v1024, %v542
  %v1026 = vadd.f32 %v1025, %v545
  %v1027 = vadd.f32 %v1026, %v550
  %v1028 = vadd.f32 %v1027, %v553
  %v1029 = vadd.f32 %v1028, %v558
  %v1030 = vadd.f32 %v1029, %v561
  %v1031 = vadd.f32 %v1030, %v566
  %v1032 = vadd.f32 %v1031, %v569
  %v1033 = vadd.f32 %v1032, %v574
  %v1034 = vadd.f32 %v1033, %v577
  %v1035 = vadd.f32 %v1034, %v582
  %v1036 = vadd.f32 %v1035, %v585
  %v1037 = vadd.f32 %v1036, %v590
  %v1038 = vadd.f32 %v1037, %v593
  %v1039 = vadd.f32 %v1038, %v598
  %v1040 = vadd.f32 %v1039, %v601
  %v1041 = vadd.f32 %v1040, %v606
  %v1042 = vadd.f32 %v1041, %v609
  %v1043 = vadd.f32 %v1042, %v614
  %v1044 = vadd.f32 %v1043, %v617
  %v1045 = vadd.f32 %v1044, %v622
  %v1046 = vadd.f32 %v1045, %v625
  %v1047 = vadd.f32 %v1046, %v630
  %v1048 = vadd.f32 %v1047, %v633
  %v1049 = vadd.f32 %v1048, %v638
  %v1050 = vadd.f32 %v1049, %v641
  %v1051 = vadd.f32 %v1050, %v646
  %v1052 = vadd.f32 %v1051, %v649
  %v1053 = vadd.f32 %v1052, %v654
  %v1054 = vadd.f32 %v1053, %v657
  %v1055 = vadd.f32 %v1054, %v662
  %v1056 = vadd.f32 %v1055, %v665
  %v1057 = vadd.f32 %v1056, %v670
  %v1058 = vadd.f32 %v1057, %v673
  %v1059 = vrot.slane %v1058, 4
  %v1060 = vadd.f32 %v1058, %v1059
  %v1061 = vrot.slane %v1060, 2
  %v1062 = vadd.f32 %v1060, %v1061
  %v1063 = vrot.slane %v1062, 1
  %v1064 = vadd.f32 %v1062, %v1063
  %v1065 = vmul.f32 %v422, %v422
  %v1066 = vmul.f32 %v425, %v425
  %v1067 = vmul.f32 %v430, %v430
  %v1068 = vmul.f32 %v433, %v433
  %v1069 = vmul.f32 %v438, %v438
  %v1070 = vmul.f32 %v441, %v441
  %v1071 = vmul.f32 %v446, %v446
  %v1072 = vmul.f32 %v449, %v449
  %v1073 = vmul.f32 %v454, %v454
  %v1074 = vmul.f32 %v457, %v457
  %v1075 = vmul.f32 %v462, %v462
  %v1076 = vmul.f32 %v465, %v465
  %v1077 = vmul.f32 %v470, %v470
  %v1078 = vmul.f32 %v473, %v473
  %v1079 = vmul.f32 %v478, %v478
  %v1080 = vmul.f32 %v481, %v481
  %v1081 = vmul.f32 %v486, %v486
  %v1082 = vmul.f32 %v489, %v489
  %v1083 = vmul.f32 %v494, %v494
  %v1084 = vmul.f32 %v497, %v497
  %v1085 = vmul.f32 %v502, %v502
  %v1086 = vmul.f32 %v505, %v505
  %v1087 = vmul.f32 %v510, %v510
  %v1088 = vmul.f32 %v513, %v513
  %v1089 = vmul.f32 %v518, %v518
  %v1090 = vmul.f32 %v521, %v521
  %v1091 = vmul.f32 %v526, %v526
  %v1092 = vmul.f32 %v529, %v529
  %v1093 = vmul.f32 %v534, %v534
  %v1094 = vmul.f32 %v537, %v537
  %v1095 = vmul.f32 %v542, %v542
  %v1096 = vmul.f32 %v545, %v545
  %v1097 = vmul.f32 %v550, %v550
  %v1098 = vmul.f32 %v553, %v553
  %v1099 = vmul.f32 %v558, %v558
  %v1100 = vmul.f32 %v561, %v561
  %v1101 = vmul.f32 %v566, %v566
  %v1102 = vmul.f32 %v569, %v569
  %v1103 = vmul.f32 %v574, %v574
  %v1104 = vmul.f32 %v577, %v577
  %v1105 = vmul.f32 %v582, %v582
  %v1106 = vmul.f32 %v585, %v585
  %v1107 = vmul.f32 %v590, %v590
  %v1108 = vmul.f32 %v593, %v593
  %v1109 = vmul.f32 %v598, %v598
  %v1110 = vmul.f32 %v601, %v601
  %v1111 = vmul.f32 %v606, %v606
  %v1112 = vmul.f32 %v609, %v609
  %v1113 = vmul.f32 %v614, %v614
  %v1114 = vmul.f32 %v617, %v617
  %v1115 = vmul.f32 %v622, %v622
  %v1116 = vmul.f32 %v625, %v625
  %v1117 = vmul.f32 %v630, %v630
  %v1118 = vmul.f32 %v633, %v633
  %v1119 = vmul.f32 %v638, %v638
  %v1120 = vmul.f32 %v641, %v641
  %v1121 = vmul.f32 %v646, %v646
  %v1122 = vmul.f32 %v649, %v649
  %v1123 = vmul.f32 %v654, %v654
  %v1124 = vmul.f32 %v657, %v657
  %v1125 = vmul.f32 %v662, %v662
  %v1126 = vmul.f32 %v665, %v665
  %v1127 = vmul.f32 %v670, %v670
  %v1128 = vmul.f32 %v673, %v673
  %v1129 = vadd.f32 %v1065, %v1066
  %v1130 = vadd.f32 %v1129, %v1067
  %v1131 = vadd.f32 %v1130, %v1068
  %v1132 = vadd.f32 %v1131, %v1069
  %v1133 = vadd.f32 %v1132, %v1070
  %v1134 = vadd.f32 %v1133, %v1071
  %v1135 = vadd.f32 %v1134, %v1072
  %v1136 = vadd.f32 %v1135, %v1073
  %v1137 = vadd.f32 %v1136, %v1074
  %v1138 = vadd.f32 %v1137, %v1075
  %v1139 = vadd.f32 %v1138, %v1076
  %v1140 = vadd.f32 %v1139, %v1077
  %v1141 = vadd.f32 %v1140, %v1078
  %v1142 = vadd.f32 %v1141, %v1079
  %v1143 = vadd.f32 %v1142, %v1080
  %v1144 = vadd.f32 %v1143, %v1081
  %v1145 = vadd.f32 %v1144, %v1082
  %v1146 = vadd.f32 %v1145, %v1083
  %v1147 = vadd.f32 %v1146, %v1084
  %v1148 = vadd.f32 %v1147, %v1085
  %v1149 = vadd.f32 %v1148, %v1086
  %v1150 = vadd.f32 %v1149, %v1087
  %v1151 = vadd.f32 %v1150, %v1088
  %v1152 = vadd.f32 %v1151, %v1089
  %v1153 = vadd.f32 %v1152, %v1090
  %v1154 = vadd.f32 %v1153, %v1091
  %v1155 = vadd.f32 %v1154, %v1092
  %v1156 = vadd.f32 %v1155, %v1093
  %v1157 = vadd.f32 %v1156, %v1094
  %v1158 = vadd.f32 %v1157, %v1095
  %v1159 = vadd.f32 %v1158, %v1096
  %v1160 = vadd.f32 %v1159, %v1097
  %v1161 = vadd.f32 %v1160, %v1098
  %v1162 = vadd.f32 %v1161, %v1099
  %v1163 = vadd.f32 %v1162, %v1100
  %v1164 = vadd.f32 %v1163, %v1101
  %v1165 = vadd.f32 %v1164, %v1102
  %v1166 = vadd.f32 %v1165, %v1103
  %v1167 = vadd.f32 %v1166, %v1104
  %v1168 = vadd.f32 %v1167, %v1105
  %v1169 = vadd.f32 %v1168, %v1106
  %v1170 = vadd.f32 %v1169, %v1107
  %v1171 = vadd.f32 %v1170, %v1108
  %v1172 = vadd.f32 %v1171, %v1109
  %v1173 = vadd.f32 %v1172, %v1110
  %v1174 = vadd.f32 %v1173, %v1111
  %v1175 = vadd.f32 %v1174, %v1112
  %v1176 = vadd.f32 %v1175, %v1113
  %v1177 = vadd.f32 %v1176, %v1114
  %v1178 = vadd.f32 %v1177, %v1115
  %v1179 = vadd.f32 %v1178, %v1116
  %v1180 = vadd.f32 %v1179, %v1117
  %v1181 = vadd.f32 %v1180, %v1118
  %v1182 = vadd.f32 %v1181, %v1119
  %v1183 = vadd.f32 %v1182, %v1120
  %v1184 = vadd.f32 %v1183, %v1121
  %v1185 = vadd.f32 %v1184, %v1122
  %v1186 = vadd.f32 %v1185, %v1123
  %v1187 = vadd.f32 %v1186, %v1124
  %v1188 = vadd.f32 %v1187, %v1125
  %v1189 = vadd.f32 %v1188, %v1126
  %v1190 = vadd.f32 %v1189, %v1127
  %v1191 = vadd.f32 %v1190, %v1128
  %v1192 = vrot.slane %v1191, 4
  %v1193 = vadd.f32 %v1191, %v1192
  %v1194 = vrot.slane %v1193, 2
  %v1195 = vadd.f32 %v1193, %v1194
  %v1196 = vrot.slane %v1195, 1
  %v1197 = vadd.f32 %v1195, %v1196
  %1198 = vst [vmem:[%s5] sm:$0xff] %v1064
  %1199 = vst [vmem:[%s6] sm:$0xff] %v1197
  // Predicated region
  $region18: #{bottleneck_forward.6} parent=0 // pred_check
    _
  $region19: #{bottleneck_forward.6} parent=0 // pred_check_branch
    %1201 = sbr.rel (0) target = $region21
  $region20: #{bottleneck_forward.6} parent=0 // pred_region
    _
  $region21: #{bottleneck_forward.6} parent=0 // pred_fallthru
    _
  // Predicated region
  $region22: #{bottleneck_forward.6} parent=0 // pred_check
    _
  $region23: #{bottleneck_forward.6} parent=0 // pred_check_branch
    %1203 = sbr.rel (0) target = $region25
  $region24: #{bottleneck_forward.6} parent=0 // pred_region
    _
  $region25: #{bottleneck_forward.6} parent=0 // pred_fallthru
    _
  // Predicated region
  $region26: #{bottleneck_forward.6} parent=0 // pred_check
    _
  $region27: #{bottleneck_forward.6} parent=0 // pred_check_branch
    %1205 = sbr.rel (0) target = $region29
  $region28: #{bottleneck_forward.6} parent=0 // pred_region
    _
  $region29: #{bottleneck_forward.6} parent=0 // pred_fallthru
    _
  // Predicated region
  $region30: #{bottleneck_forward.6} parent=0 // pred_check
    _
  $region31: #{bottleneck_forward.6} parent=0 // pred_check_branch
    %1207 = sbr.rel (0) target = $region33
  $region32: #{bottleneck_forward.6} parent=0 // pred_region
    _
  $region33: #{bottleneck_forward.6} parent=0 // pred_fallthru
    _
  // Predicated region
  $region34: #{bottleneck_forward.6} parent=0 // pred_check
    _
  $region35: #{bottleneck_forward.6} parent=0 // pred_check_branch
    %1209 = sbr.rel (0) target = $region37
  $region36: #{bottleneck_forward.6} parent=0 // pred_region
    _
  $region37: #{bottleneck_forward.6} parent=0 // pred_fallthru
    _
  // Predicated region
  $region38: #{bottleneck_forward.6} parent=0 // pred_check
    _
  $region39: #{bottleneck_forward.6} parent=0 // pred_check_branch
    %1211 = sbr.rel (0) target = $region41
  $region40: #{bottleneck_forward.6} parent=0 // pred_region
    _
  $region41: #{bottleneck_forward.6} parent=0 // pred_fallthru
    _

// kernel: bottleneck_forward.5
$region0: #{bottleneck_forward.5}
  #allocation0 [shape = 'u32[]', space=smem, size = 0x4, offset = 0x4, fixed_abs, tag = 'smem constant byte address 0x4 - core index']
  #allocation1 [shape = 'u32[144,128]{1,0:T(1,128)}', space=vmem, size = 0x12000, scoped, tag = 'internal scratch']
  %s0 = inlined_call_operand.vmem [shape: bf16[512,128], index: 0, kind: input, shape index: {}]
  %s1 = inlined_call_operand.vmem [shape: bf16[128,128], index: 1, kind: input, shape index: {}]
  %s2 = inlined_call_operand.vmem [shape: f32[1,128], index: 2, kind: input, shape index: {}]
  %s3 = inlined_call_operand.vmem [shape: f32[1,128], index: 3, kind: input, shape index: {}]
  %s4 = inlined_call_operand.vmem [shape: bf16[3,384,128], index: 4, kind: input, shape index: {}]
  %s5 = inlined_call_operand.vmem [shape: bf16[512,128], index: 5, kind: output, shape index: {0}]
  %s6 = inlined_call_operand.vmem [shape: f32[16,128], index: 6, kind: output, shape index: {1}]
  %s7 = inlined_call_operand.vmem [shape: f32[16,128], index: 7, kind: output, shape index: {2}]
  %8 = xla_tuple %s5, %s6, %s7
  %s9 = sld [smem:[#allocation0]]
  $region69: #{bottleneck_forward.5} parent=0
    _
  %s11 = ssub.s32 1, %s9
  %s12 = scalar_select 0, %s11, %s9
  loop: start=0, step=1, limit=4
  $region2: #{bottleneck_forward.5} parent=0 // loop_pre_header
    _
  $region3: #{bottleneck_forward.5} parent=0 // loop_header
    %s14 = sphi 0, %s18
    %p15 = scmp.ge.s32.totalorder %s14, 4
    %s24 = sphi 0, %s26
    %s27 = sphi 0, %s24
    %s28 = sphi 0, %s27
    %s44 = sphi 0, %s28
    %s48 = sphi 0, %s48
    %s50 = sphi 0, %s48
    %s51 = sphi 0, %s50
    %s65 = sphi 0, %s51
    %s69 = sphi 0, %s69
    %s71 = sphi 0, %s69
    %s72 = sphi 0, %s71
    %s86 = sphi 0, %s72
    %s90 = sphi 0, %s90
    %s92 = sphi 0, %s90
    %s93 = sphi 0, %s92
    %s107 = sphi 0, %s93
    %s111 = sphi 0, %s111
    %s113 = sphi 0, %s111
    %s114 = sphi 0, %s113
    %s128 = sphi 0, %s114
    %s134 = sphi 0, %s136
    %s137 = sphi 0, %s134
    %s138 = sphi 0, %s137
    %s154 = sphi 0, %s138
    %s160 = sphi 0, %s162
    %s163 = sphi 0, %s160
    %s164 = sphi 0, %s163
    %s180 = sphi 0, %s164
    %s186 = sphi 0, %s188
    %s189 = sphi 0, %s186
    %s190 = sphi 0, %s189
    %s206 = sphi 0, %s190
  $region4: #{bottleneck_forward.5} parent=0 // loop_header_branch
    %17 = sbr.rel (%p15) target = $region8
  $region5: #{bottleneck_forward.5} parent=0 // loop_body
    %s19 = ssub.s32 %s14, 1
    %s20 = ssub.s32 %s14, 2
    %s21 = sadd.s32 %s14, 1
    %s22 = ssub.s32 %s14, %s21
    %p23 = scmp.eq.s32.totalorder %s22, 0
    %s25 = sadd.s32 %s24, 1
    %s26 = scalar_select %p23, %s24, %s25
    %p29 = pneg %p23
    %p30 = scmp.eq.s32.totalorder %s14, 1
    %p31 = por %p29, %p30
    %p32 = scmp.ne.s32.totalorder %s24, %s27
    %p33 = scmp.eq.s32.totalorder %s14, 0
    %p34 = por %p32, %p33
    %p35 = scmp.ne.s32.totalorder %s24, %s27
    %p36 = scmp.eq.s32.totalorder %s19, 1
    %p37 = por %p35, %p36
    %p38 = scmp.ne.s32.totalorder %s27, %s28
    %p39 = scmp.eq.s32.totalorder %s19, 0
    %p40 = por %p38, %p39
    %p41 = scmp.ne.s32.totalorder %s27, %s28
    %p42 = scmp.eq.s32.totalorder %s20, 1
    %p43 = por %p41, %p42
    %p45 = scmp.ne.s32.totalorder %s28, %s44
    %p46 = scmp.eq.s32.totalorder %s20, 0
    %p47 = por %p45, %p46
    %s49 = sadd.s32 %s48, 1
    %p52 = scmp.eq.s32.totalorder %s14, 1
    %p53 = scmp.ne.s32.totalorder %s48, %s50
    %p54 = scmp.eq.s32.totalorder %s14, 0
    %p55 = por %p53, %p54
    %p56 = scmp.ne.s32.totalorder %s48, %s50
    %p57 = scmp.eq.s32.totalorder %s19, 1
    %p58 = por %p56, %p57
    %p59 = scmp.ne.s32.totalorder %s50, %s51
    %p60 = scmp.eq.s32.totalorder %s19, 0
    %p61 = por %p59, %p60
    %p62 = scmp.ne.s32.totalorder %s50, %s51
    %p63 = scmp.eq.s32.totalorder %s20, 1
    %p64 = por %p62, %p63
    %p66 = scmp.ne.s32.totalorder %s51, %s65
    %p67 = scmp.eq.s32.totalorder %s20, 0
    %p68 = por %p66, %p67
    %s70 = sadd.s32 %s69, 1
    %p73 = scmp.eq.s32.totalorder %s14, 1
    %p74 = scmp.ne.s32.totalorder %s69, %s71
    %p75 = scmp.eq.s32.totalorder %s14, 0
    %p76 = por %p74, %p75
    %p77 = scmp.ne.s32.totalorder %s69, %s71
    %p78 = scmp.eq.s32.totalorder %s19, 1
    %p79 = por %p77, %p78
    %p80 = scmp.ne.s32.totalorder %s71, %s72
    %p81 = scmp.eq.s32.totalorder %s19, 0
    %p82 = por %p80, %p81
    %p83 = scmp.ne.s32.totalorder %s71, %s72
    %p84 = scmp.eq.s32.totalorder %s20, 1
    %p85 = por %p83, %p84
    %p87 = scmp.ne.s32.totalorder %s72, %s86
    %p88 = scmp.eq.s32.totalorder %s20, 0
    %p89 = por %p87, %p88
    %s91 = sadd.s32 %s90, 1
    %p94 = scmp.eq.s32.totalorder %s14, 1
    %p95 = scmp.ne.s32.totalorder %s90, %s92
    %p96 = scmp.eq.s32.totalorder %s14, 0
    %p97 = por %p95, %p96
    %p98 = scmp.ne.s32.totalorder %s90, %s92
    %p99 = scmp.eq.s32.totalorder %s19, 1
    %p100 = por %p98, %p99
    %p101 = scmp.ne.s32.totalorder %s92, %s93
    %p102 = scmp.eq.s32.totalorder %s19, 0
    %p103 = por %p101, %p102
    %p104 = scmp.ne.s32.totalorder %s92, %s93
    %p105 = scmp.eq.s32.totalorder %s20, 1
    %p106 = por %p104, %p105
    %p108 = scmp.ne.s32.totalorder %s93, %s107
    %p109 = scmp.eq.s32.totalorder %s20, 0
    %p110 = por %p108, %p109
    %s112 = sadd.s32 %s111, 1
    %p115 = scmp.eq.s32.totalorder %s14, 1
    %p116 = scmp.ne.s32.totalorder %s111, %s113
    %p117 = scmp.eq.s32.totalorder %s14, 0
    %p118 = por %p116, %p117
    %p119 = scmp.ne.s32.totalorder %s111, %s113
    %p120 = scmp.eq.s32.totalorder %s19, 1
    %p121 = por %p119, %p120
    %p122 = scmp.ne.s32.totalorder %s113, %s114
    %p123 = scmp.eq.s32.totalorder %s19, 0
    %p124 = por %p122, %p123
    %p125 = scmp.ne.s32.totalorder %s113, %s114
    %p126 = scmp.eq.s32.totalorder %s20, 1
    %p127 = por %p125, %p126
    %p129 = scmp.ne.s32.totalorder %s114, %s128
    %p130 = scmp.eq.s32.totalorder %s20, 0
    %p131 = por %p129, %p130
    %s132 = ssub.s32 %s14, %s21
    %p133 = scmp.eq.s32.totalorder %s132, 0
    %s135 = sadd.s32 %s134, 1
    %s136 = scalar_select %p133, %s134, %s135
    %p139 = pneg %p133
    %p140 = scmp.eq.s32.totalorder %s14, 1
    %p141 = por %p139, %p140
    %p142 = scmp.ne.s32.totalorder %s134, %s137
    %p143 = scmp.eq.s32.totalorder %s14, 0
    %p144 = por %p142, %p143
    %p145 = scmp.ne.s32.totalorder %s134, %s137
    %p146 = scmp.eq.s32.totalorder %s19, 1
    %p147 = por %p145, %p146
    %p148 = scmp.ne.s32.totalorder %s137, %s138
    %p149 = scmp.eq.s32.totalorder %s19, 0
    %p150 = por %p148, %p149
    %p151 = scmp.ne.s32.totalorder %s137, %s138
    %p152 = scmp.eq.s32.totalorder %s20, 1
    %p153 = por %p151, %p152
    %p155 = scmp.ne.s32.totalorder %s138, %s154
    %p156 = scmp.eq.s32.totalorder %s20, 0
    %p157 = por %p155, %p156
    %s158 = ssub.s32 %s14, %s21
    %p159 = scmp.eq.s32.totalorder %s158, 0
    %s161 = sadd.s32 %s160, 1
    %s162 = scalar_select %p159, %s160, %s161
    %p165 = pneg %p159
    %p166 = scmp.eq.s32.totalorder %s14, 1
    %p167 = por %p165, %p166
    %p168 = scmp.ne.s32.totalorder %s160, %s163
    %p169 = scmp.eq.s32.totalorder %s14, 0
    %p170 = por %p168, %p169
    %p171 = scmp.ne.s32.totalorder %s160, %s163
    %p172 = scmp.eq.s32.totalorder %s19, 1
    %p173 = por %p171, %p172
    %p174 = scmp.ne.s32.totalorder %s163, %s164
    %p175 = scmp.eq.s32.totalorder %s19, 0
    %p176 = por %p174, %p175
    %p177 = scmp.ne.s32.totalorder %s163, %s164
    %p178 = scmp.eq.s32.totalorder %s20, 1
    %p179 = por %p177, %p178
    %p181 = scmp.ne.s32.totalorder %s164, %s180
    %p182 = scmp.eq.s32.totalorder %s20, 0
    %p183 = por %p181, %p182
    %s184 = ssub.s32 %s14, %s21
    %p185 = scmp.eq.s32.totalorder %s184, 0
    %s187 = sadd.s32 %s186, 1
    %s188 = scalar_select %p185, %s186, %s187
    %p191 = pneg %p185
    %p192 = scmp.eq.s32.totalorder %s14, 1
    %p193 = por %p191, %p192
    %p194 = scmp.ne.s32.totalorder %s186, %s189
    %p195 = scmp.eq.s32.totalorder %s14, 0
    %p196 = por %p194, %p195
    %p197 = scmp.ne.s32.totalorder %s186, %s189
    %p198 = scmp.eq.s32.totalorder %s19, 1
    %p199 = por %p197, %p198
    %p200 = scmp.ne.s32.totalorder %s189, %s190
    %p201 = scmp.eq.s32.totalorder %s19, 0
    %p202 = por %p200, %p201
    %p203 = scmp.ne.s32.totalorder %s189, %s190
    %p204 = scmp.eq.s32.totalorder %s20, 1
    %p205 = por %p203, %p204
    %p207 = scmp.ne.s32.totalorder %s190, %s206
    %p208 = scmp.eq.s32.totalorder %s20, 0
    %p209 = por %p207, %p208
    %p210 = scmp.le.s32.totalorder 1, %s14
    %p211 = scmp.lt.s32.totalorder %s14, 3
    %p212 = pnand %p210, %p211
    %p213 = pneg %p212
    // Predicated region
    $region9: #{bottleneck_forward.5} parent=5 // pred_check
      _
    $region10: #{bottleneck_forward.5} parent=5 // pred_check_branch
      %215 = sbr.rel (%p212) target = $region12
    $region11: #{bottleneck_forward.5} parent=5 // pred_region
      %s216 = ssub.s32 %s14, 1
      // Predicated region
      $region13: #{bottleneck_forward.5} parent=11 // pred_check
        %p217 = pneg %p61
      $region14: #{bottleneck_forward.5} parent=11 // pred_check_branch
        %219 = sbr.rel (%p217) target = $region16
      $region15: #{bottleneck_forward.5} parent=11 // pred_region
        _
      $region16: #{bottleneck_forward.5} parent=11 // pred_fallthru
        _
      // Predicated region
      $region17: #{bottleneck_forward.5} parent=11 // pred_check
        %p220 = pneg %p82
      $region18: #{bottleneck_forward.5} parent=11 // pred_check_branch
        %222 = sbr.rel (%p220) target = $region20
      $region19: #{bottleneck_forward.5} parent=11 // pred_region
        _
      $region20: #{bottleneck_forward.5} parent=11 // pred_fallthru
        _
      // Predicated region
      $region21: #{bottleneck_forward.5} parent=11 // pred_check
        %p223 = pneg %p103
      $region22: #{bottleneck_forward.5} parent=11 // pred_check_branch
        %225 = sbr.rel (%p223) target = $region24
      $region23: #{bottleneck_forward.5} parent=11 // pred_region
        _
      $region24: #{bottleneck_forward.5} parent=11 // pred_fallthru
        _
      // Predicated region
      $region25: #{bottleneck_forward.5} parent=11 // pred_check
        %p226 = pneg %p124
      $region26: #{bottleneck_forward.5} parent=11 // pred_check_branch
        %228 = sbr.rel (%p226) target = $region28
      $region27: #{bottleneck_forward.5} parent=11 // pred_region
        _
      $region28: #{bottleneck_forward.5} parent=11 // pred_fallthru
        _
    $region12: #{bottleneck_forward.5} parent=5 // pred_fallthru
      _
    %p229 = scmp.lt.s32.totalorder %s14, 2
    // Predicated region
    $region29: #{bottleneck_forward.5} parent=5 // pred_check
      %p230 = pneg %p229
    $region30: #{bottleneck_forward.5} parent=5 // pred_check_branch
      %232 = sbr.rel (%p230) target = $region32
    $region31: #{bottleneck_forward.5} parent=5 // pred_region
      // Predicated region
      $region33: #{bottleneck_forward.5} parent=31 // pred_check
        %p233 = pneg %p34
      $region34: #{bottleneck_forward.5} parent=31 // pred_check_branch
        %235 = sbr.rel (%p233) target = $region36
      $region35: #{bottleneck_forward.5} parent=31 // pred_region
        %s236 = smul.u32 32, %s14
        %p237 = scmp.lt.s32.totalorder %s236, 63
        %s238 = scalar_select %p237, %s236, 63
        %s239 = smul.addr %s238, 4
        %s240 = scalar_lea.vmem %s0, %s239
        %s241 = smul.u32 32, %s14
      $region36: #{bottleneck_forward.5} parent=31 // pred_fallthru
        _
    $region32: #{bottleneck_forward.5} parent=5 // pred_fallthru
      _
    %p242 = scmp.le.s32.totalorder 1, %s14
    %p243 = scmp.lt.s32.totalorder %s14, 3
    %p244 = pnand %p242, %p243
    %p245 = pneg %p244
    // Predicated region
    $region37: #{bottleneck_forward.5} parent=5 // pred_check
      _
    $region38: #{bottleneck_forward.5} parent=5 // pred_check_branch
      %247 = sbr.rel (%p244) target = $region40
    $region39: #{bottleneck_forward.5} parent=5 // pred_region
      %s248 = ssub.s32 %s14, 1
      %s249 = smul.u32 32, %s19
      %p250 = scmp.lt.s32.totalorder %s249, 63
      %s251 = scalar_select %p250, %s249, 63
      %s252 = smul.addr %s251, 4
      %s253 = scalar_lea.vmem %s0, %s252
      %p254 = pneg %p40
      %p255 = pneg %p37
      %p256 = pneg %p61
      %p257 = pneg %p58
      %p258 = pneg %p82
      %p259 = pneg %p79
      %p260 = pneg %p103
      %p261 = pneg %p100
      %p262 = pneg %p124
      %p263 = pneg %p121
      %p264 = pneg %p150
      %p265 = pneg %p147
      %s266 = smul.u32 32, %s19
      %p267 = scmp.lt.s32.totalorder %s266, 63
      %s268 = scalar_select %p267, %s266, 63
      %s269 = smul.addr %s268, 4
      %s270 = scalar_lea.vmem %s5, %s269
      %p271 = pneg %p176
      %p272 = pneg %p173
      %p273 = scmp.lt.s32.totalorder %s19, 1
      %s274 = scalar_select %p273, %s19, 1
      %s275 = smul.addr %s274, 8
      %s276 = scalar_lea.vmem %s6, %s275
      %p277 = pneg %p202
      %p278 = pneg %p199
      %p279 = scmp.lt.s32.totalorder %s19, 1
      %s280 = scalar_select %p279, %s19, 1
      %s281 = smul.addr %s280, 8
      %s282 = scalar_lea.vmem %s7, %s281
      %s283 = smul.u32 32, %s19
      %p284 = scmp.lt.s32.totalorder %s283, 63
      %s285 = scalar_select %p284, %s283, 63
      %s286 = smul.addr %s285, 4
      %s287 = scalar_lea.vmem %s0, %s286
      %s288 = smul.u32 32, %s19
      %s289 = smul.u32 32, %s19
      %p290 = scmp.lt.s32.totalorder %s289, 63
      %s291 = scalar_select %p290, %s289, 63
      %s292 = smul.addr %s291, 4
      %s293 = scalar_lea.vmem %s5, %s292
      %s294 = smul.u32 32, %s19
      %p295 = scmp.lt.s32.totalorder %s19, 1
      %s296 = scalar_select %p295, %s19, 1
      %s297 = smul.addr %s296, 8
      %s298 = scalar_lea.vmem %s6, %s297
      %p299 = scmp.lt.s32.totalorder %s19, 1
      %s300 = scalar_select %p299, %s19, 1
      %s301 = smul.addr %s300, 8
      %s302 = scalar_lea.vmem %s7, %s301
      %v304 = vld [vmem:[%s287] sm:$0xf]
      %v305 = vld [vmem:[%s287 + $0x4] sm:$0xf]
      %v306 = vld [vmem:[%s287 + $0x8] sm:$0xf]
      %v307 = vld [vmem:[%s287 + $0xc] sm:$0xf]
      %v308 = vld [vmem:[%s287 + $0x10] sm:$0xf]
      %v309 = vld [vmem:[%s287 + $0x14] sm:$0xf]
      %v310 = vld [vmem:[%s287 + $0x18] sm:$0xf]
      %v311 = vld [vmem:[%s287 + $0x1c] sm:$0xf]
      %v312 = vld [vmem:[%s287 + $0x20] sm:$0xf]
      %v313 = vld [vmem:[%s287 + $0x24] sm:$0xf]
      %v314 = vld [vmem:[%s287 + $0x28] sm:$0xf]
      %v315 = vld [vmem:[%s287 + $0x2c] sm:$0xf]
      %v316 = vld [vmem:[%s287 + $0x30] sm:$0xf]
      %v317 = vld [vmem:[%s287 + $0x34] sm:$0xf]
      %v318 = vld [vmem:[%s287 + $0x38] sm:$0xf]
      %v319 = vld [vmem:[%s287 + $0x3c] sm:$0xf]
      %v320 = vld [vmem:[%s287 + $0x40] sm:$0xf]
      %v321 = vld [vmem:[%s287 + $0x44] sm:$0xf]
      %v322 = vld [vmem:[%s287 + $0x48] sm:$0xf]
      %v323 = vld [vmem:[%s287 + $0x4c] sm:$0xf]
      %v324 = vld [vmem:[%s287 + $0x50] sm:$0xf]
      %v325 = vld [vmem:[%s287 + $0x54] sm:$0xf]
      %v326 = vld [vmem:[%s287 + $0x58] sm:$0xf]
      %v327 = vld [vmem:[%s287 + $0x5c] sm:$0xf]
      %v328 = vld [vmem:[%s287 + $0x60] sm:$0xf]
      %v329 = vld [vmem:[%s287 + $0x64] sm:$0xf]
      %v330 = vld [vmem:[%s287 + $0x68] sm:$0xf]
      %v331 = vld [vmem:[%s287 + $0x6c] sm:$0xf]
      %v332 = vld [vmem:[%s287 + $0x70] sm:$0xf]
      %v333 = vld [vmem:[%s287 + $0x74] sm:$0xf]
      %v334 = vld [vmem:[%s287 + $0x78] sm:$0xf]
      %v335 = vld [vmem:[%s287 + $0x7c] sm:$0xf]
      %v336 = vld [vmem:[%s1] sm:$0xf]
      %v337 = vld [vmem:[%s1 + $0x4] sm:$0xf]
      %v338 = vld [vmem:[%s1 + $0x8] sm:$0xf]
      %v339 = vld [vmem:[%s1 + $0xc] sm:$0xf]
      %v340 = vld [vmem:[%s1 + $0x10] sm:$0xf]
      %v341 = vld [vmem:[%s1 + $0x14] sm:$0xf]
      %v342 = vld [vmem:[%s1 + $0x18] sm:$0xf]
      %v343 = vld [vmem:[%s1 + $0x1c] sm:$0xf]
      %v344 = vld [vmem:[%s1 + $0x20] sm:$0xf]
      %v345 = vld [vmem:[%s1 + $0x24] sm:$0xf]
      %v346 = vld [vmem:[%s1 + $0x28] sm:$0xf]
      %v347 = vld [vmem:[%s1 + $0x2c] sm:$0xf]
      %v348 = vld [vmem:[%s1 + $0x30] sm:$0xf]
      %v349 = vld [vmem:[%s1 + $0x34] sm:$0xf]
      %v350 = vld [vmem:[%s1 + $0x38] sm:$0xf]
      %v351 = vld [vmem:[%s1 + $0x3c] sm:$0xf]
      %v384 = vunpack.c.l.b16 %v304
      %v385 = vunpack.c.l.b16 %v305
      %v386 = vunpack.c.l.b16 %v306
      %v387 = vunpack.c.l.b16 %v307
      %v388 = vunpack.c.l.b16 %v308
      %v389 = vunpack.c.l.b16 %v309
      %v390 = vunpack.c.l.b16 %v310
      %v391 = vunpack.c.l.b16 %v311
      %v392 = vunpack.c.l.b16 %v312
      %v393 = vunpack.c.l.b16 %v313
      %v394 = vunpack.c.l.b16 %v314
      %v395 = vunpack.c.l.b16 %v315
      %v396 = vunpack.c.l.b16 %v316
      %v397 = vunpack.c.l.b16 %v317
      %v398 = vunpack.c.l.b16 %v318
      %v399 = vunpack.c.l.b16 %v319
      %v400 = vunpack.c.l.b16 %v320
      %v401 = vunpack.c.l.b16 %v321
      %v402 = vunpack.c.l.b16 %v322
      %v403 = vunpack.c.l.b16 %v323
      %v404 = vunpack.c.l.b16 %v324
      %v405 = vunpack.c.l.b16 %v325
      %v406 = vunpack.c.l.b16 %v326
      %v407 = vunpack.c.l.b16 %v327
      %v408 = vunpack.c.l.b16 %v328
      %v409 = vunpack.c.l.b16 %v329
      %v410 = vunpack.c.l.b16 %v330
      %v411 = vunpack.c.l.b16 %v331
      %v412 = vunpack.c.l.b16 %v332
      %v413 = vunpack.c.l.b16 %v333
      %v414 = vunpack.c.l.b16 %v334
      %v415 = vunpack.c.l.b16 %v335
      %v416 = vpack.c.b16 %v385, %v384
      %v417 = vpack.c.b16 %v387, %v386
      %v418 = vpack.c.b16 %v389, %v388
      %v419 = vpack.c.b16 %v391, %v390
      %v420 = vpack.c.b16 %v393, %v392
      %v421 = vpack.c.b16 %v395, %v394
      %v422 = vpack.c.b16 %v397, %v396
      %v423 = vpack.c.b16 %v399, %v398
      %v424 = vpack.c.b16 %v401, %v400
      %v425 = vpack.c.b16 %v403, %v402
      %v426 = vpack.c.b16 %v405, %v404
      %v427 = vpack.c.b16 %v407, %v406
      %v428 = vpack.c.b16 %v409, %v408
      %v429 = vpack.c.b16 %v411, %v410
      %v430 = vpack.c.b16 %v413, %v412
      %v431 = vpack.c.b16 %v415, %v414
      %v464 = vunpack.c.l.b16 %v336
      %v465 = vunpack.c.l.b16 %v337
      %v466 = vunpack.c.l.b16 %v338
      %v467 = vunpack.c.l.b16 %v339
      %v468 = vunpack.c.l.b16 %v340
      %v469 = vunpack.c.l.b16 %v341
      %v470 = vunpack.c.l.b16 %v342
      %v471 = vunpack.c.l.b16 %v343
      %v472 = vunpack.c.l.b16 %v344
      %v473 = vunpack.c.l.b16 %v345
      %v474 = vunpack.c.l.b16 %v346
      %v475 = vunpack.c.l.b16 %v347
      %v476 = vunpack.c.l.b16 %v348
      %v477 = vunpack.c.l.b16 %v349
      %v478 = vunpack.c.l.b16 %v350
      %v479 = vunpack.c.l.b16 %v351
      %v480 = vpack.c.b16 %v465, %v464
      %v481 = vpack.c.b16 %v467, %v466
      %v482 = vpack.c.b16 %v469, %v468
      %v483 = vpack.c.b16 %v471, %v470
      %v484 = vpack.c.b16 %v473, %v472
      %v485 = vpack.c.b16 %v475, %v474
      %v486 = vpack.c.b16 %v477, %v476
      %v487 = vpack.c.b16 %v479, %v478
      %496 = vmatprep.subr.bf16.mxu0 0
      %497 = vmatpush1.bf16.msra.mxu0 %v480
      %498 = vmatprep.subr.bf16.mxu0 0
      %499 = vmatpush1.bf16.msra.mxu0 %v481
      %500 = vmatprep.subr.bf16.mxu0 0
      %501 = vmatpush1.bf16.msra.mxu0 %v482
      %502 = vmatprep.subr.bf16.mxu0 0
      %503 = vmatpush1.bf16.msra.mxu0 %v483
      %504 = vmatprep.subr.bf16.mxu0 0
      %505 = vmatpush1.bf16.msra.mxu0 %v484
      %506 = vmatprep.subr.bf16.mxu0 0
      %507 = vmatpush1.bf16.msra.mxu0 %v485
      %508 = vmatprep.subr.bf16.mxu0 0
      %509 = vmatpush1.bf16.msra.mxu0 %v486
      %510 = vmatprep.subr.bf16.mxu0 0
      %511 = vmatpush1.bf16.msra.mxu0 %v487
      %512 = vmatprep.subr.bf16.mxu0 0
      %513 = vmatpush1.bf16.msra.mxu0 0
      %514 = vmatprep.subr.bf16.mxu0 0
      %515 = vmatpush1.bf16.msra.mxu0 0
      %516 = vmatprep.subr.bf16.mxu0 0
      %517 = vmatpush1.bf16.msra.mxu0 0
      %518 = vmatprep.subr.bf16.mxu0 0
      %519 = vmatpush1.bf16.msra.mxu0 0
      %520 = vmatprep.subr.bf16.mxu0 0
      %521 = vmatpush1.bf16.msra.mxu0 0
      %522 = vmatprep.subr.bf16.mxu0 0
      %523 = vmatpush1.bf16.msra.mxu0 0
      %524 = vmatprep.subr.bf16.mxu0 0
      %525 = vmatpush1.bf16.msra.mxu0 0
      %526 = vmatprep.subr.bf16.mxu0 0
      %527 = vmatpush1.bf16.msra.mxu0 0
      %528 = vmatprep.mubr.bf16.mxu0 0
      %529 = vmatmul.mubr.bf16.gmra.mrb[0].mxu0 %v416
      %v530 = vpop.f32.mrb[0].mxu0
      %v531 = vadd.f32 0.0, %v530
      %v532 = vpop.f32.mrb[0].mxu0
      %v533 = vpop.f32.mrb[0].mxu0
      %v534 = vadd.f32 0.0, %v533
      %v535 = vpop.f32.mrb[0].mxu0
      %536 = vmatprep.mubr.bf16.mxu0 0
      %537 = vmatmul.mubr.bf16.gmra.mrb[0].mxu0 %v417
      %v538 = vpop.f32.mrb[0].mxu0
      %v539 = vadd.f32 0.0, %v538
      %v540 = vpop.f32.mrb[0].mxu0
      %v541 = vpop.f32.mrb[0].mxu0
      %v542 = vadd.f32 0.0, %v541
      %v543 = vpop.f32.mrb[0].mxu0
      %544 = vmatprep.mubr.bf16.mxu0 0
      %545 = vmatmul.mubr.bf16.gmra.mrb[0].mxu0 %v418
      %v546 = vpop.f32.mrb[0].mxu0
      %v547 = vadd.f32 0.0, %v546
      %v548 = vpop.f32.mrb[0].mxu0
      %v549 = vpop.f32.mrb[0].mxu0
      %v550 = vadd.f32 0.0, %v549
      %v551 = vpop.f32.mrb[0].mxu0
      %552 = vmatprep.mubr.bf16.mxu0 0
      %553 = vmatmul.mubr.bf16.gmra.mrb[0].mxu0 %v419
      %v554 = vpop.f32.mrb[0].mxu0
      %v555 = vadd.f32 0.0, %v554
      %v556 = vpop.f32.mrb[0].mxu0
      %v557 = vpop.f32.mrb[0].mxu0
      %v558 = vadd.f32 0.0, %v557
      %v559 = vpop.f32.mrb[0].mxu0
      %560 = vmatprep.mubr.bf16.mxu0 0
      %561 = vmatmul.mubr.bf16.gmra.mrb[0].mxu0 %v420
      %v562 = vpop.f32.mrb[0].mxu0
      %v563 = vadd.f32 0.0, %v562
      %v564 = vpop.f32.mrb[0].mxu0
      %v565 = vpop.f32.mrb[0].mxu0
      %v566 = vadd.f32 0.0, %v565
      %v567 = vpop.f32.mrb[0].mxu0
      %568 = vmatprep.mubr.bf16.mxu0 0
      %569 = vmatmul.mubr.bf16.gmra.mrb[0].mxu0 %v421
      %v570 = vpop.f32.mrb[0].mxu0
      %v571 = vadd.f32 0.0, %v570
      %v572 = vpop.f32.mrb[0].mxu0
      %v573 = vpop.f32.mrb[0].mxu0
      %v574 = vadd.f32 0.0, %v573
      %v575 = vpop.f32.mrb[0].mxu0
      %576 = vmatprep.mubr.bf16.mxu0 0
      %577 = vmatmul.mubr.bf16.gmra.mrb[0].mxu0 %v422
      %v578 = vpop.f32.mrb[0].mxu0
      %v579 = vadd.f32 0.0, %v578
      %v580 = vpop.f32.mrb[0].mxu0
      %v581 = vpop.f32.mrb[0].mxu0
      %v582 = vadd.f32 0.0, %v581
      %v583 = vpop.f32.mrb[0].mxu0
      %584 = vmatprep.mubr.bf16.mxu0 0
      %585 = vmatmul.mubr.bf16.gmra.mrb[0].mxu0 %v423
      %v586 = vpop.f32.mrb[0].mxu0
      %v587 = vadd.f32 0.0, %v586
      %v588 = vpop.f32.mrb[0].mxu0
      %v589 = vpop.f32.mrb[0].mxu0
      %v590 = vadd.f32 0.0, %v589
      %v591 = vpop.f32.mrb[0].mxu0
      %592 = vmatprep.mubr.bf16.mxu0 0
      %593 = vmatmul.mubr.bf16.gmra.mrb[0].mxu0 %v424
      %v594 = vpop.f32.mrb[0].mxu0
      %v595 = vadd.f32 0.0, %v594
      %v596 = vpop.f32.mrb[0].mxu0
      %v597 = vpop.f32.mrb[0].mxu0
      %v598 = vadd.f32 0.0, %v597
      %v599 = vpop.f32.mrb[0].mxu0
      %600 = vmatprep.mubr.bf16.mxu0 0
      %601 = vmatmul.mubr.bf16.gmra.mrb[0].mxu0 %v425
      %v602 = vpop.f32.mrb[0].mxu0
      %v603 = vadd.f32 0.0, %v602
      %v604 = vpop.f32.mrb[0].mxu0
      %v605 = vpop.f32.mrb[0].mxu0
      %v606 = vadd.f32 0.0, %v605
      %v607 = vpop.f32.mrb[0].mxu0
      %608 = vmatprep.mubr.bf16.mxu0 0
      %609 = vmatmul.mubr.bf16.gmra.mrb[0].mxu0 %v426
      %v610 = vpop.f32.mrb[0].mxu0
      %v611 = vadd.f32 0.0, %v610
      %v612 = vpop.f32.mrb[0].mxu0
      %v613 = vpop.f32.mrb[0].mxu0
      %v614 = vadd.f32 0.0, %v613
      %v615 = vpop.f32.mrb[0].mxu0
      %616 = vmatprep.mubr.bf16.mxu0 0
      %617 = vmatmul.mubr.bf16.gmra.mrb[0].mxu0 %v427
      %v618 = vpop.f32.mrb[0].mxu0
      %v619 = vadd.f32 0.0, %v618
      %v620 = vpop.f32.mrb[0].mxu0
      %v621 = vpop.f32.mrb[0].mxu0
      %v622 = vadd.f32 0.0, %v621
      %v623 = vpop.f32.mrb[0].mxu0
      %624 = vmatprep.mubr.bf16.mxu0 0
      %625 = vmatmul.mubr.bf16.gmra.mrb[0].mxu0 %v428
      %v626 = vpop.f32.mrb[0].mxu0
      %v627 = vadd.f32 0.0, %v626
      %v628 = vpop.f32.mrb[0].mxu0
      %v629 = vpop.f32.mrb[0].mxu0
      %v630 = vadd.f32 0.0, %v629
      %v631 = vpop.f32.mrb[0].mxu0
      %632 = vmatprep.mubr.bf16.mxu0 0
      %633 = vmatmul.mubr.bf16.gmra.mrb[0].mxu0 %v429
      %v634 = vpop.f32.mrb[0].mxu0
      %v635 = vadd.f32 0.0, %v634
      %v636 = vpop.f32.mrb[0].mxu0
      %v637 = vpop.f32.mrb[0].mxu0
      %v638 = vadd.f32 0.0, %v637
      %v639 = vpop.f32.mrb[0].mxu0
      %640 = vmatprep.mubr.bf16.mxu0 0
      %641 = vmatmul.mubr.bf16.gmra.mrb[0].mxu0 %v430
      %v642 = vpop.f32.mrb[0].mxu0
      %v643 = vadd.f32 0.0, %v642
      %v644 = vpop.f32.mrb[0].mxu0
      %v645 = vpop.f32.mrb[0].mxu0
      %v646 = vadd.f32 0.0, %v645
      %v647 = vpop.f32.mrb[0].mxu0
      %648 = vmatprep.mubr.bf16.mxu0 0
      %649 = vmatmul.mubr.bf16.gmra.mrb[0].mxu0 %v431
      %v650 = vpop.f32.mrb[0].mxu0
      %v651 = vadd.f32 0.0, %v650
      %v652 = vpop.f32.mrb[0].mxu0
      %v653 = vpop.f32.mrb[0].mxu0
      %v654 = vadd.f32 0.0, %v653
      %v655 = vpop.f32.mrb[0].mxu0
      %656 = vdwg.mxu0
      %v657 = vld [vmem:[%s2] sm:$0x1]
      %v659 = vlaneseq
      %v660 = vshrl.u32 %v659, 7
      %v661 = vsub.s32 0, %v660
      %v662 = vrot.slane %v657, %v661
      %v664 = vmul.f32 %v531, %v662
      %v665 = vmul.f32 %v534, %v662
      %v666 = vmul.f32 %v539, %v662
      %v667 = vmul.f32 %v542, %v662
      %v668 = vmul.f32 %v547, %v662
      %v669 = vmul.f32 %v550, %v662
      %v670 = vmul.f32 %v555, %v662
      %v671 = vmul.f32 %v558, %v662
      %v672 = vmul.f32 %v563, %v662
      %v673 = vmul.f32 %v566, %v662
      %v674 = vmul.f32 %v571, %v662
      %v675 = vmul.f32 %v574, %v662
      %v676 = vmul.f32 %v579, %v662
      %v677 = vmul.f32 %v582, %v662
      %v678 = vmul.f32 %v587, %v662
      %v679 = vmul.f32 %v590, %v662
      %v680 = vmul.f32 %v595, %v662
      %v681 = vmul.f32 %v598, %v662
      %v682 = vmul.f32 %v603, %v662
      %v683 = vmul.f32 %v606, %v662
      %v684 = vmul.f32 %v611, %v662
      %v685 = vmul.f32 %v614, %v662
      %v686 = vmul.f32 %v619, %v662
      %v687 = vmul.f32 %v622, %v662
      %v688 = vmul.f32 %v627, %v662
      %v689 = vmul.f32 %v630, %v662
      %v690 = vmul.f32 %v635, %v662
      %v691 = vmul.f32 %v638, %v662
      %v692 = vmul.f32 %v643, %v662
      %v693 = vmul.f32 %v646, %v662
      %v694 = vmul.f32 %v651, %v662
      %v695 = vmul.f32 %v654, %v662
      %v696 = vld [vmem:[%s3] sm:$0x1]
      %v698 = vlaneseq
      %v699 = vshrl.u32 %v698, 7
      %v700 = vsub.s32 0, %v699
      %v701 = vrot.slane %v696, %v700
      %v703 = vadd.f32 %v664, %v701
      %v704 = vadd.f32 %v665, %v701
      %v705 = vadd.f32 %v666, %v701
      %v706 = vadd.f32 %v667, %v701
      %v707 = vadd.f32 %v668, %v701
      %v708 = vadd.f32 %v669, %v701
      %v709 = vadd.f32 %v670, %v701
      %v710 = vadd.f32 %v671, %v701
      %v711 = vadd.f32 %v672, %v701
      %v712 = vadd.f32 %v673, %v701
      %v713 = vadd.f32 %v674, %v701
      %v714 = vadd.f32 %v675, %v701
      %v715 = vadd.f32 %v676, %v701
      %v716 = vadd.f32 %v677, %v701
      %v717 = vadd.f32 %v678, %v701
      %v718 = vadd.f32 %v679, %v701
      %v719 = vadd.f32 %v680, %v701
      %v720 = vadd.f32 %v681, %v701
      %v721 = vadd.f32 %v682, %v701
      %v722 = vadd.f32 %v683, %v701
      %v723 = vadd.f32 %v684, %v701
      %v724 = vadd.f32 %v685, %v701
      %v725 = vadd.f32 %v686, %v701
      %v726 = vadd.f32 %v687, %v701
      %v727 = vadd.f32 %v688, %v701
      %v728 = vadd.f32 %v689, %v701
      %v729 = vadd.f32 %v690, %v701
      %v730 = vadd.f32 %v691, %v701
      %v731 = vadd.f32 %v692, %v701
      %v732 = vadd.f32 %v693, %v701
      %v733 = vadd.f32 %v694, %v701
      %v734 = vadd.f32 %v695, %v701
      %v735 = vpack.c.bf16 %v704, %v703
      %v736 = vpack.c.bf16 %v706, %v705
      %v737 = vpack.c.bf16 %v708, %v707
      %v738 = vpack.c.bf16 %v710, %v709
      %v739 = vpack.c.bf16 %v712, %v711
      %v740 = vpack.c.bf16 %v714, %v713
      %v741 = vpack.c.bf16 %v716, %v715
      %v742 = vpack.c.bf16 %v718, %v717
      %v743 = vpack.c.bf16 %v720, %v719
      %v744 = vpack.c.bf16 %v722, %v721
      %v745 = vpack.c.bf16 %v724, %v723
      %v746 = vpack.c.bf16 %v726, %v725
      %v747 = vpack.c.bf16 %v728, %v727
      %v748 = vpack.c.bf16 %v730, %v729
      %v749 = vpack.c.bf16 %v732, %v731
      %v750 = vpack.c.bf16 %v734, %v733
      %v752 = vshrl.u32 %v735, 16
      %v754 = vrot.slane %v752, 7
      %v755 = vshll.u32 %v735, 16
      %v757 = vor.u32 %v754, %v755
      %v759 = vshrl.u32 %v736, 16
      %v761 = vrot.slane %v759, 7
      %v762 = vshll.u32 %v736, 16
      %v764 = vor.u32 %v761, %v762
      %v766 = vshrl.u32 %v737, 16
      %v768 = vrot.slane %v766, 7
      %v769 = vshll.u32 %v737, 16
      %v771 = vor.u32 %v768, %v769
      %v773 = vshrl.u32 %v738, 16
      %v775 = vrot.slane %v773, 7
      %v776 = vshll.u32 %v738, 16
      %v778 = vor.u32 %v775, %v776
      %v780 = vshrl.u32 %v739, 16
      %v782 = vrot.slane %v780, 7
      %v783 = vshll.u32 %v739, 16
      %v785 = vor.u32 %v782, %v783
      %v787 = vshrl.u32 %v740, 16
      %v789 = vrot.slane %v787, 7
      %v790 = vshll.u32 %v740, 16
      %v792 = vor.u32 %v789, %v790
      %v794 = vshrl.u32 %v741, 16
      %v796 = vrot.slane %v794, 7
      %v797 = vshll.u32 %v741, 16
      %v799 = vor.u32 %v796, %v797
      %v801 = vshrl.u32 %v742, 16
      %v803 = vrot.slane %v801, 7
      %v804 = vshll.u32 %v742, 16
      %v806 = vor.u32 %v803, %v804
      %v808 = vshrl.u32 %v743, 16
      %v810 = vrot.slane %v808, 7
      %v811 = vshll.u32 %v743, 16
      %v813 = vor.u32 %v810, %v811
      %v815 = vshrl.u32 %v744, 16
      %v817 = vrot.slane %v815, 7
      %v818 = vshll.u32 %v744, 16
      %v820 = vor.u32 %v817, %v818
      %v822 = vshrl.u32 %v745, 16
      %v824 = vrot.slane %v822, 7
      %v825 = vshll.u32 %v745, 16
      %v827 = vor.u32 %v824, %v825
      %v829 = vshrl.u32 %v746, 16
      %v831 = vrot.slane %v829, 7
      %v832 = vshll.u32 %v746, 16
      %v834 = vor.u32 %v831, %v832
      %v836 = vshrl.u32 %v747, 16
      %v838 = vrot.slane %v836, 7
      %v839 = vshll.u32 %v747, 16
      %v841 = vor.u32 %v838, %v839
      %v843 = vshrl.u32 %v748, 16
      %v845 = vrot.slane %v843, 7
      %v846 = vshll.u32 %v748, 16
      %v848 = vor.u32 %v845, %v846
      %v850 = vshrl.u32 %v749, 16
      %v852 = vrot.slane %v850, 7
      %v853 = vshll.u32 %v749, 16
      %v855 = vor.u32 %v852, %v853
      %v857 = vshrl.u32 %v750, 16
      %v859 = vrot.slane %v857, 7
      %v860 = vshll.u32 %v750, 16
      %v862 = vor.u32 %v859, %v860
      %vm895 = vcmask 1040384
      %vm896 = vsmask.f32 256
      %vm897 = vmand %vm895, %vm896
      %v898 = vsel %vm897, 0, %v757
      %v899 = vsel %vm897, 0, %v764
      %v900 = vsel %vm897, 0, %v771
      %v901 = vsel %vm897, 0, %v778
      %v902 = vsel %vm897, 0, %v785
      %v903 = vsel %vm897, 0, %v792
      %v904 = vsel %vm897, 0, %v799
      %v905 = vsel %vm897, 0, %v806
      %v906 = vsel %vm897, 0, %v813
      %v907 = vsel %vm897, 0, %v820
      %v908 = vsel %vm897, 0, %v827
      %v909 = vsel %vm897, 0, %v834
      %v910 = vsel %vm897, 0, %v841
      %v911 = vsel %vm897, 0, %v848
      %v912 = vsel %vm897, 0, %v855
      %v913 = vsel %vm897, 0, %v862
      %v914 = vsel %vm897, %v754, 0
      %v915 = vsel %vm897, %v761, 0
      %v916 = vsel %vm897, %v768, 0
      %v917 = vsel %vm897, %v775, 0
      %v918 = vsel %vm897, %v782, 0
      %v919 = vsel %vm897, %v789, 0
      %v920 = vsel %vm897, %v796, 0
      %v921 = vsel %vm897, %v803, 0
      %v922 = vsel %vm897, %v810, 0
      %v923 = vsel %vm897, %v817, 0
      %v924 = vsel %vm897, %v824, 0
      %v925 = vsel %vm897, %v831, 0
      %v926 = vsel %vm897, %v838, 0
      %v927 = vsel %vm897, %v845, 0
      %v928 = vsel %vm897, %v852, 0
      %v929 = vsel %vm897, %v859, 0
      %vm930 = vsmask.f32 7424
      %v932 = vshrl.u32 0, 16
      %v934 = vshll.u32 0, 16
      %v936 = vrot.slane %v934, 1
      %v937 = vor.u32 %v932, %v936
      %v938 = vsel %vm930, %v937, %v936
      %v940 = vshrl.u32 %v898, 16
      %v942 = vshll.u32 %v898, 16
      %v944 = vrot.slane %v942, 1
      %v945 = vor.u32 %v940, %v944
      %v947 = vshll.u32 %v914, 16
      %v949 = vrot.slane %v947, 1
      %v950 = vsel %vm930, %v945, %v949
      %v952 = vshrl.u32 %v899, 16
      %v954 = vshll.u32 %v899, 16
      %v956 = vrot.slane %v954, 1
      %v957 = vor.u32 %v952, %v956
      %v959 = vshll.u32 %v915, 16
      %v961 = vrot.slane %v959, 1
      %v962 = vsel %vm930, %v957, %v961
      %v964 = vshrl.u32 %v900, 16
      %v966 = vshll.u32 %v900, 16
      %v968 = vrot.slane %v966, 1
      %v969 = vor.u32 %v964, %v968
      %v971 = vshll.u32 %v916, 16
      %v973 = vrot.slane %v971, 1
      %v974 = vsel %vm930, %v969, %v973
      %v976 = vshrl.u32 %v901, 16
      %v978 = vshll.u32 %v901, 16
      %v980 = vrot.slane %v978, 1
      %v981 = vor.u32 %v976, %v980
      %v983 = vshll.u32 %v917, 16
      %v985 = vrot.slane %v983, 1
      %v986 = vsel %vm930, %v981, %v985
      %v988 = vshrl.u32 %v902, 16
      %v990 = vshll.u32 %v902, 16
      %v992 = vrot.slane %v990, 1
      %v993 = vor.u32 %v988, %v992
      %v995 = vshll.u32 %v918, 16
      %v997 = vrot.slane %v995, 1
      %v998 = vsel %vm930, %v993, %v997
      %v1000 = vshrl.u32 %v903, 16
      %v1002 = vshll.u32 %v903, 16
      %v1004 = vrot.slane %v1002, 1
      %v1005 = vor.u32 %v1000, %v1004
      %v1007 = vshll.u32 %v919, 16
      %v1009 = vrot.slane %v1007, 1
      %v1010 = vsel %vm930, %v1005, %v1009
      %v1012 = vshrl.u32 %v904, 16
      %v1014 = vshll.u32 %v904, 16
      %v1016 = vrot.slane %v1014, 1
      %v1017 = vor.u32 %v1012, %v1016
      %v1019 = vshll.u32 %v920, 16
      %v1021 = vrot.slane %v1019, 1
      %v1022 = vsel %vm930, %v1017, %v1021
      %v1024 = vshrl.u32 %v905, 16
      %v1026 = vshll.u32 %v905, 16
      %v1028 = vrot.slane %v1026, 1
      %v1029 = vor.u32 %v1024, %v1028
      %v1031 = vshll.u32 %v921, 16
      %v1033 = vrot.slane %v1031, 1
      %v1034 = vsel %vm930, %v1029, %v1033
      %v1036 = vshrl.u32 %v906, 16
      %v1038 = vshll.u32 %v906, 16
      %v1040 = vrot.slane %v1038, 1
      %v1041 = vor.u32 %v1036, %v1040
      %v1043 = vshll.u32 %v922, 16
      %v1045 = vrot.slane %v1043, 1
      %v1046 = vsel %vm930, %v1041, %v1045
      %v1048 = vshrl.u32 %v907, 16
      %v1050 = vshll.u32 %v907, 16
      %v1052 = vrot.slane %v1050, 1
      %v1053 = vor.u32 %v1048, %v1052
      %v1055 = vshll.u32 %v923, 16
      %v1057 = vrot.slane %v1055, 1
      %v1058 = vsel %vm930, %v1053, %v1057
      %v1060 = vshrl.u32 %v908, 16
      %v1062 = vshll.u32 %v908, 16
      %v1064 = vrot.slane %v1062, 1
      %v1065 = vor.u32 %v1060, %v1064
      %v1067 = vshll.u32 %v924, 16
      %v1069 = vrot.slane %v1067, 1
      %v1070 = vsel %vm930, %v1065, %v1069
      %v1072 = vshrl.u32 %v909, 16
      %v1074 = vshll.u32 %v909, 16
      %v1076 = vrot.slane %v1074, 1
      %v1077 = vor.u32 %v1072, %v1076
      %v1079 = vshll.u32 %v925, 16
      %v1081 = vrot.slane %v1079, 1
      %v1082 = vsel %vm930, %v1077, %v1081
      %v1084 = vshrl.u32 %v910, 16
      %v1086 = vshll.u32 %v910, 16
      %v1088 = vrot.slane %v1086, 1
      %v1089 = vor.u32 %v1084, %v1088
      %v1091 = vshll.u32 %v926, 16
      %v1093 = vrot.slane %v1091, 1
      %v1094 = vsel %vm930, %v1089, %v1093
      %v1096 = vshrl.u32 %v911, 16
      %v1098 = vshll.u32 %v911, 16
      %v1100 = vrot.slane %v1098, 1
      %v1101 = vor.u32 %v1096, %v1100
      %v1103 = vshll.u32 %v927, 16
      %v1105 = vrot.slane %v1103, 1
      %v1106 = vsel %vm930, %v1101, %v1105
      %v1108 = vshrl.u32 %v912, 16
      %v1110 = vshll.u32 %v912, 16
      %v1112 = vrot.slane %v1110, 1
      %v1113 = vor.u32 %v1108, %v1112
      %v1115 = vshll.u32 %v928, 16
      %v1117 = vrot.slane %v1115, 1
      %v1118 = vsel %vm930, %v1113, %v1117
      %vm1166 = vcmask 1046528
      %v1167 = vrot.slane 0, 1
      %v1168 = vsel %vm1166, %v1167, %v1167
      %v1169 = vrot.slane %v898, 1
      %v1170 = vrot.slane %v914, 1
      %v1171 = vsel %vm1166, %v1169, %v1170
      %v1172 = vrot.slane %v899, 1
      %v1173 = vrot.slane %v915, 1
      %v1174 = vsel %vm1166, %v1172, %v1173
      %v1175 = vrot.slane %v900, 1
      %v1176 = vrot.slane %v916, 1
      %v1177 = vsel %vm1166, %v1175, %v1176
      %v1178 = vrot.slane %v901, 1
      %v1179 = vrot.slane %v917, 1
      %v1180 = vsel %vm1166, %v1178, %v1179
      %v1181 = vrot.slane %v902, 1
      %v1182 = vrot.slane %v918, 1
      %v1183 = vsel %vm1166, %v1181, %v1182
      %v1184 = vrot.slane %v903, 1
      %v1185 = vrot.slane %v919, 1
      %v1186 = vsel %vm1166, %v1184, %v1185
      %v1187 = vrot.slane %v904, 1
      %v1188 = vrot.slane %v920, 1
      %v1189 = vsel %vm1166, %v1187, %v1188
      %v1190 = vrot.slane %v905, 1
      %v1191 = vrot.slane %v921, 1
      %v1192 = vsel %vm1166, %v1190, %v1191
      %v1193 = vrot.slane %v906, 1
      %v1194 = vrot.slane %v922, 1
      %v1195 = vsel %vm1166, %v1193, %v1194
      %v1196 = vrot.slane %v907, 1
      %v1197 = vrot.slane %v923, 1
      %v1198 = vsel %vm1166, %v1196, %v1197
      %v1199 = vrot.slane %v908, 1
      %v1200 = vrot.slane %v924, 1
      %v1201 = vsel %vm1166, %v1199, %v1200
      %v1202 = vrot.slane %v909, 1
      %v1203 = vrot.slane %v925, 1
      %v1204 = vsel %vm1166, %v1202, %v1203
      %v1205 = vrot.slane %v910, 1
      %v1206 = vrot.slane %v926, 1
      %v1207 = vsel %vm1166, %v1205, %v1206
      %v1208 = vrot.slane %v911, 1
      %v1209 = vrot.slane %v927, 1
      %v1210 = vsel %vm1166, %v1208, %v1209
      %v1211 = vrot.slane %v912, 1
      %v1212 = vrot.slane %v928, 1
      %v1213 = vsel %vm1166, %v1211, %v1212
      %v1230 = vld [vmem:[%s4] sm:$0xf]
      %v1231 = vld [vmem:[%s4 + $0x4] sm:$0xf]
      %v1232 = vld [vmem:[%s4 + $0x8] sm:$0xf]
      %v1233 = vld [vmem:[%s4 + $0xc] sm:$0xf]
      %v1234 = vld [vmem:[%s4 + $0x10] sm:$0xf]
      %v1235 = vld [vmem:[%s4 + $0x14] sm:$0xf]
      %v1236 = vld [vmem:[%s4 + $0x18] sm:$0xf]
      %v1237 = vld [vmem:[%s4 + $0x1c] sm:$0xf]
      %v1238 = vld [vmem:[%s4 + $0x20] sm:$0xf]
      %v1239 = vld [vmem:[%s4 + $0x24] sm:$0xf]
      %v1240 = vld [vmem:[%s4 + $0x28] sm:$0xf]
      %v1241 = vld [vmem:[%s4 + $0x2c] sm:$0xf]
      %v1242 = vld [vmem:[%s4 + $0x30] sm:$0xf]
      %v1243 = vld [vmem:[%s4 + $0x34] sm:$0xf]
      %v1244 = vld [vmem:[%s4 + $0x38] sm:$0xf]
      %v1245 = vld [vmem:[%s4 + $0x3c] sm:$0xf]
      %v1246 = vld [vmem:[%s4 + $0x40] sm:$0xf]
      %v1247 = vld [vmem:[%s4 + $0x44] sm:$0xf]
      %v1248 = vld [vmem:[%s4 + $0x48] sm:$0xf]
      %v1249 = vld [vmem:[%s4 + $0x4c] sm:$0xf]
      %v1250 = vld [vmem:[%s4 + $0x50] sm:$0xf]
      %v1251 = vld [vmem:[%s4 + $0x54] sm:$0xf]
      %v1252 = vld [vmem:[%s4 + $0x58] sm:$0xf]
      %v1253 = vld [vmem:[%s4 + $0x5c] sm:$0xf]
      %v1254 = vld [vmem:[%s4 + $0x60] sm:$0xf]
      %v1255 = vld [vmem:[%s4 + $0x64] sm:$0xf]
      %v1256 = vld [vmem:[%s4 + $0x68] sm:$0xf]
      %v1257 = vld [vmem:[%s4 + $0x6c] sm:$0xf]
      %v1258 = vld [vmem:[%s4 + $0x70] sm:$0xf]
      %v1259 = vld [vmem:[%s4 + $0x74] sm:$0xf]
      %v1260 = vld [vmem:[%s4 + $0x78] sm:$0xf]
      %v1261 = vld [vmem:[%s4 + $0x7c] sm:$0xf]
      %v1262 = vld [vmem:[%s4 + $0x80] sm:$0xf]
      %v1263 = vld [vmem:[%s4 + $0x84] sm:$0xf]
      %v1264 = vld [vmem:[%s4 + $0x88] sm:$0xf]
      %v1265 = vld [vmem:[%s4 + $0x8c] sm:$0xf]
      %v1266 = vld [vmem:[%s4 + $0x90] sm:$0xf]
      %v1267 = vld [vmem:[%s4 + $0x94] sm:$0xf]
      %v1268 = vld [vmem:[%s4 + $0x98] sm:$0xf]
      %v1269 = vld [vmem:[%s4 + $0x9c] sm:$0xf]
      %v1270 = vld [vmem:[%s4 + $0xa0] sm:$0xf]
      %v1271 = vld [vmem:[%s4 + $0xa4] sm:$0xf]
      %v1272 = vld [vmem:[%s4 + $0xa8] sm:$0xf]
      %v1273 = vld [vmem:[%s4 + $0xac] sm:$0xf]
      %v1274 = vld [vmem:[%s4 + $0xb0] sm:$0xf]
      %v1275 = vld [vmem:[%s4 + $0xb4] sm:$0xf]
      %v1276 = vld [vmem:[%s4 + $0xb8] sm:$0xf]
      %v1277 = vld [vmem:[%s4 + $0xbc] sm:$0xf]
      %v1279 = vshrl.u32 %v913, 16
      %v1281 = vshll.u32 %v913, 16
      %v1283 = vrot.slane %v1281, 1
      %v1284 = vor.u32 %v1279, %v1283
      %v1286 = vshll.u32 %v929, 16
      %v1288 = vrot.slane %v1286, 1
      %v1289 = vsel %vm930, %v1284, %v1288
      %v1293 = vrot.slane %v913, 1
      %v1294 = vrot.slane %v929, 1
      %v1295 = vsel %vm1166, %v1293, %v1294
      %s1297 = scalar_lea.vmem %s4, 192
      %v1298 = vld [vmem:[%s1297] sm:$0xf]
      %v1299 = vld [vmem:[%s1297 + $0x4] sm:$0xf]
      %v1300 = vld [vmem:[%s1297 + $0x8] sm:$0xf]
      %v1301 = vld [vmem:[%s1297 + $0xc] sm:$0xf]
      %v1302 = vld [vmem:[%s1297 + $0x10] sm:$0xf]
      %v1303 = vld [vmem:[%s1297 + $0x14] sm:$0xf]
      %v1304 = vld [vmem:[%s1297 + $0x18] sm:$0xf]
      %v1305 = vld [vmem:[%s1297 + $0x1c] sm:$0xf]
      %v1306 = vld [vmem:[%s1297 + $0x20] sm:$0xf]
      %v1307 = vld [vmem:[%s1297 + $0x24] sm:$0xf]
      %v1308 = vld [vmem:[%s1297 + $0x28] sm:$0xf]
      %v1309 = vld [vmem:[%s1297 + $0x2c] sm:$0xf]
      %v1310 = vld [vmem:[%s1297 + $0x30] sm:$0xf]
      %v1311 = vld [vmem:[%s1297 + $0x34] sm:$0xf]
      %v1312 = vld [vmem:[%s1297 + $0x38] sm:$0xf]
      %v1313 = vld [vmem:[%s1297 + $0x3c] sm:$0xf]
      %v1314 = vld [vmem:[%s1297 + $0x40] sm:$0xf]
      %v1315 = vld [vmem:[%s1297 + $0x44] sm:$0xf]
      %v1316 = vld [vmem:[%s1297 + $0x48] sm:$0xf]
      %v1317 = vld [vmem:[%s1297 + $0x4c] sm:$0xf]
      %v1318 = vld [vmem:[%s1297 + $0x50] sm:$0xf]
      %v1319 = vld [vmem:[%s1297 + $0x54] sm:$0xf]
      %v1320 = vld [vmem:[%s1297 + $0x58] sm:$0xf]
      %v1321 = vld [vmem:[%s1297 + $0x5c] sm:$0xf]
      %v1322 = vld [vmem:[%s1297 + $0x60] sm:$0xf]
      %v1323 = vld [vmem:[%s1297 + $0x64] sm:$0xf]
      %v1324 = vld [vmem:[%s1297 + $0x68] sm:$0xf]
      %v1325 = vld [vmem:[%s1297 + $0x6c] sm:$0xf]
      %v1326 = vld [vmem:[%s1297 + $0x70] sm:$0xf]
      %v1327 = vld [vmem:[%s1297 + $0x74] sm:$0xf]
      %v1328 = vld [vmem:[%s1297 + $0x78] sm:$0xf]
      %v1329 = vld [vmem:[%s1297 + $0x7c] sm:$0xf]
      %v1330 = vld [vmem:[%s1297 + $0x80] sm:$0xf]
      %v1331 = vld [vmem:[%s1297 + $0x84] sm:$0xf]
      %v1332 = vld [vmem:[%s1297 + $0x88] sm:$0xf]
      %v1333 = vld [vmem:[%s1297 + $0x8c] sm:$0xf]
      %v1334 = vld [vmem:[%s1297 + $0x90] sm:$0xf]
      %v1335 = vld [vmem:[%s1297 + $0x94] sm:$0xf]
      %v1336 = vld [vmem:[%s1297 + $0x98] sm:$0xf]
      %v1337 = vld [vmem:[%s1297 + $0x9c] sm:$0xf]
      %v1338 = vld [vmem:[%s1297 + $0xa0] sm:$0xf]
      %v1339 = vld [vmem:[%s1297 + $0xa4] sm:$0xf]
      %v1340 = vld [vmem:[%s1297 + $0xa8] sm:$0xf]
      %v1341 = vld [vmem:[%s1297 + $0xac] sm:$0xf]
      %v1342 = vld [vmem:[%s1297 + $0xb0] sm:$0xf]
      %v1343 = vld [vmem:[%s1297 + $0xb4] sm:$0xf]
      %v1344 = vld [vmem:[%s1297 + $0xb8] sm:$0xf]
      %v1345 = vld [vmem:[%s1297 + $0xbc] sm:$0xf]
      %v1394 = vunpack.c.l.b16 %v1298
      %v1395 = vunpack.c.l.b16 %v1299
      %v1396 = vunpack.c.l.b16 %v1300
      %v1397 = vunpack.c.l.b16 %v1301
      %v1398 = vunpack.c.l.b16 %v1302
      %v1399 = vunpack.c.l.b16 %v1303
      %v1400 = vunpack.c.l.b16 %v1304
      %v1401 = vunpack.c.l.b16 %v1305
      %v1402 = vunpack.c.l.b16 %v1306
      %v1403 = vunpack.c.l.b16 %v1307
      %v1404 = vunpack.c.l.b16 %v1308
      %v1405 = vunpack.c.l.b16 %v1309
      %v1406 = vunpack.c.l.b16 %v1310
      %v1407 = vunpack.c.l.b16 %v1311
      %v1408 = vunpack.c.l.b16 %v1312
      %v1409 = vunpack.c.l.b16 %v1313
      %v1410 = vunpack.c.l.b16 %v1314
      %v1411 = vunpack.c.l.b16 %v1315
      %v1412 = vunpack.c.l.b16 %v1316
      %v1413 = vunpack.c.l.b16 %v1317
      %v1414 = vunpack.c.l.b16 %v1318
      %v1415 = vunpack.c.l.b16 %v1319
      %v1416 = vunpack.c.l.b16 %v1320
      %v1417 = vunpack.c.l.b16 %v1321
      %v1418 = vunpack.c.l.b16 %v1322
      %v1419 = vunpack.c.l.b16 %v1323
      %v1420 = vunpack.c.l.b16 %v1324
      %v1421 = vunpack.c.l.b16 %v1325
      %v1422 = vunpack.c.l.b16 %v1326
      %v1423 = vunpack.c.l.b16 %v1327
      %v1424 = vunpack.c.l.b16 %v1328
      %v1425 = vunpack.c.l.b16 %v1329
      %v1426 = vunpack.c.l.b16 %v1330
      %v1427 = vunpack.c.l.b16 %v1331
      %v1428 = vunpack.c.l.b16 %v1332
      %v1429 = vunpack.c.l.b16 %v1333
      %v1430 = vunpack.c.l.b16 %v1334
      %v1431 = vunpack.c.l.b16 %v1335
      %v1432 = vunpack.c.l.b16 %v1336
      %v1433 = vunpack.c.l.b16 %v1337
      %v1434 = vunpack.c.l.b16 %v1338
      %v1435 = vunpack.c.l.b16 %v1339
      %v1436 = vunpack.c.l.b16 %v1340
      %v1437 = vunpack.c.l.b16 %v1341
      %v1438 = vunpack.c.l.b16 %v1342
      %v1439 = vunpack.c.l.b16 %v1343
      %v1440 = vunpack.c.l.b16 %v1344
      %v1441 = vunpack.c.l.b16 %v1345
      %v1442 = vpack.c.b16 %v1395, %v1394
      %v1443 = vpack.c.b16 %v1397, %v1396
      %v1444 = vpack.c.b16 %v1399, %v1398
      %v1445 = vpack.c.b16 %v1401, %v1400
      %v1446 = vpack.c.b16 %v1403, %v1402
      %v1447 = vpack.c.b16 %v1405, %v1404
      %v1448 = vpack.c.b16 %v1407, %v1406
      %v1449 = vpack.c.b16 %v1409, %v1408
      %v1450 = vpack.c.b16 %v1411, %v1410
      %v1451 = vpack.c.b16 %v1413, %v1412
      %v1452 = vpack.c.b16 %v1415, %v1414
      %v1453 = vpack.c.b16 %v1417, %v1416
      %v1454 = vpack.c.b16 %v1419, %v1418
      %v1455 = vpack.c.b16 %v1421, %v1420
      %v1456 = vpack.c.b16 %v1423, %v1422
      %v1457 = vpack.c.b16 %v1425, %v1424
      %v1458 = vpack.c.b16 %v1427, %v1426
      %v1459 = vpack.c.b16 %v1429, %v1428
      %v1460 = vpack.c.b16 %v1431, %v1430
      %v1461 = vpack.c.b16 %v1433, %v1432
      %v1462 = vpack.c.b16 %v1435, %v1434
      %v1463 = vpack.c.b16 %v1437, %v1436
      %v1464 = vpack.c.b16 %v1439, %v1438
      %v1465 = vpack.c.b16 %v1441, %v1440
      %1490 = vmatprep.subr.bf16.mxu0 0
      %1491 = vmatpush1.bf16.msra.mxu0 %v1442
      %1492 = vmatprep.subr.bf16.mxu0 0
      %1493 = vmatpush1.bf16.msra.mxu0 %v1443
      %1494 = vmatprep.subr.bf16.mxu0 0
      %1495 = vmatpush1.bf16.msra.mxu0 %v1444
      %1496 = vmatprep.subr.bf16.mxu0 0
      %1497 = vmatpush1.bf16.msra.mxu0 %v1445
      %1498 = vmatprep.subr.bf16.mxu0 0
      %1499 = vmatpush1.bf16.msra.mxu0 %v1446
      %1500 = vmatprep.subr.bf16.mxu0 0
      %1501 = vmatpush1.bf16.msra.mxu0 %v1447
      %1502 = vmatprep.subr.bf16.mxu0 0
      %1503 = vmatpush1.bf16.msra.mxu0 %v1448
      %1504 = vmatprep.subr.bf16.mxu0 0
      %1505 = vmatpush1.bf16.msra.mxu0 %v1449
      %1506 = vmatprep.subr.bf16.mxu0 0
      %1507 = vmatpush1.bf16.msra.mxu0 %v1450
      %1508 = vmatprep.subr.bf16.mxu0 0
      %1509 = vmatpush1.bf16.msra.mxu0 %v1451
      %1510 = vmatprep.subr.bf16.mxu0 0
      %1511 = vmatpush1.bf16.msra.mxu0 %v1452
      %1512 = vmatprep.subr.bf16.mxu0 0
      %1513 = vmatpush1.bf16.msra.mxu0 %v1453
      %1514 = vmatprep.subr.bf16.mxu0 0
      %1515 = vmatpush1.bf16.msra.mxu0 %v1454
      %1516 = vmatprep.subr.bf16.mxu0 0
      %1517 = vmatpush1.bf16.msra.mxu0 %v1455
      %1518 = vmatprep.subr.bf16.mxu0 0
      %1519 = vmatpush1.bf16.msra.mxu0 %v1456
      %1520 = vmatprep.subr.bf16.mxu0 0
      %1521 = vmatpush1.bf16.msra.mxu0 %v1457
      %1522 = vmatprep.mubr.bf16.mxu0 %v950
      %1523 = vmatmul.mubr.bf16.gmra.mrb[0].mxu0 %v898
      %v1524 = vpop.f32.mrb[0].mxu0
      %v1525 = vadd.f32 0.0, %v1524
      %v1526 = vpop.f32.mrb[0].mxu0
      %v1527 = vpop.f32.mrb[0].mxu0
      %v1528 = vadd.f32 0.0, %v1527
      %v1529 = vpop.f32.mrb[0].mxu0
      %1530 = vmatprep.mubr.bf16.mxu0 %v962
      %1531 = vmatmul.mubr.bf16.gmra.mrb[0].mxu0 %v899
      %v1532 = vpop.f32.mrb[0].mxu0
      %v1533 = vadd.f32 0.0, %v1532
      %v1534 = vpop.f32.mrb[0].mxu0
      %v1535 = vpop.f32.mrb[0].mxu0
      %v1536 = vadd.f32 0.0, %v1535
      %v1537 = vpop.f32.mrb[0].mxu0
      %1538 = vmatprep.mubr.bf16.mxu0 %v974
      %1539 = vmatmul.mubr.bf16.gmra.mrb[0].mxu0 %v900
      %v1540 = vpop.f32.mrb[0].mxu0
      %v1541 = vadd.f32 0.0, %v1540
      %v1542 = vpop.f32.mrb[0].mxu0
      %v1543 = vpop.f32.mrb[0].mxu0
      %v1544 = vadd.f32 0.0, %v1543
      %v1545 = vpop.f32.mrb[0].mxu0
      %1546 = vmatprep.mubr.bf16.mxu0 %v986
      %1547 = vmatmul.mubr.bf16.gmra.mrb[0].mxu0 %v901
      %v1548 = vpop.f32.mrb[0].mxu0
      %v1549 = vadd.f32 0.0, %v1548
      %v1550 = vpop.f32.mrb[0].mxu0
      %v1551 = vpop.f32.mrb[0].mxu0
      %v1552 = vadd.f32 0.0, %v1551
      %v1553 = vpop.f32.mrb[0].mxu0
      %1554 = vmatprep.mubr.bf16.mxu0 %v998
      %1555 = vmatmul.mubr.bf16.gmra.mrb[0].mxu0 %v902
      %v1556 = vpop.f32.mrb[0].mxu0
      %v1557 = vadd.f32 0.0, %v1556
      %v1558 = vpop.f32.mrb[0].mxu0
      %v1559 = vpop.f32.mrb[0].mxu0
      %v1560 = vadd.f32 0.0, %v1559
      %v1561 = vpop.f32.mrb[0].mxu0
      %1562 = vmatprep.mubr.bf16.mxu0 %v1010
      %1563 = vmatmul.mubr.bf16.gmra.mrb[0].mxu0 %v903
      %v1564 = vpop.f32.mrb[0].mxu0
      %v1565 = vadd.f32 0.0, %v1564
      %v1566 = vpop.f32.mrb[0].mxu0
      %v1567 = vpop.f32.mrb[0].mxu0
      %v1568 = vadd.f32 0.0, %v1567
      %v1569 = vpop.f32.mrb[0].mxu0
      %1570 = vmatprep.mubr.bf16.mxu0 %v1022
      %1571 = vmatmul.mubr.bf16.gmra.mrb[0].mxu0 %v904
      %v1572 = vpop.f32.mrb[0].mxu0
      %v1573 = vadd.f32 0.0, %v1572
      %v1574 = vpop.f32.mrb[0].mxu0
      %v1575 = vpop.f32.mrb[0].mxu0
      %v1576 = vadd.f32 0.0, %v1575
      %v1577 = vpop.f32.mrb[0].mxu0
      %1578 = vmatprep.mubr.bf16.mxu0 %v1034
      %1579 = vmatmul.mubr.bf16.gmra.mrb[0].mxu0 %v905
      %v1580 = vpop.f32.mrb[0].mxu0
      %v1581 = vadd.f32 0.0, %v1580
      %v1582 = vpop.f32.mrb[0].mxu0
      %v1583 = vpop.f32.mrb[0].mxu0
      %v1584 = vadd.f32 0.0, %v1583
      %v1585 = vpop.f32.mrb[0].mxu0
      %1586 = vmatprep.mubr.bf16.mxu0 %v1046
      %1587 = vmatmul.mubr.bf16.gmra.mrb[0].mxu0 %v906
      %v1588 = vpop.f32.mrb[0].mxu0
      %v1589 = vadd.f32 0.0, %v1588
      %v1590 = vpop.f32.mrb[0].mxu0
      %v1591 = vpop.f32.mrb[0].mxu0
      %v1592 = vadd.f32 0.0, %v1591
      %v1593 = vpop.f32.mrb[0].mxu0
      %1594 = vmatprep.mubr.bf16.mxu0 %v1058
      %1595 = vmatmul.mubr.bf16.gmra.mrb[0].mxu0 %v907
      %v1596 = vpop.f32.mrb[0].mxu0
      %v1597 = vadd.f32 0.0, %v1596
      %v1598 = vpop.f32.mrb[0].mxu0
      %v1599 = vpop.f32.mrb[0].mxu0
      %v1600 = vadd.f32 0.0, %v1599
      %v1601 = vpop.f32.mrb[0].mxu0
      %1602 = vmatprep.mubr.bf16.mxu0 %v1070
      %1603 = vmatmul.mubr.bf16.gmra.mrb[0].mxu0 %v908
      %v1604 = vpop.f32.mrb[0].mxu0
      %v1605 = vadd.f32 0.0, %v1604
      %v1606 = vpop.f32.mrb[0].mxu0
      %v1607 = vpop.f32.mrb[0].mxu0
      %v1608 = vadd.f32 0.0, %v1607
      %v1609 = vpop.f32.mrb[0].mxu0
      %1610 = vmatprep.mubr.bf16.mxu0 %v1082
      %1611 = vmatmul.mubr.bf16.gmra.mrb[0].mxu0 %v909
      %v1612 = vpop.f32.mrb[0].mxu0
      %v1613 = vadd.f32 0.0, %v1612
      %v1614 = vpop.f32.mrb[0].mxu0
      %v1615 = vpop.f32.mrb[0].mxu0
      %v1616 = vadd.f32 0.0, %v1615
      %v1617 = vpop.f32.mrb[0].mxu0
      %1618 = vmatprep.mubr.bf16.mxu0 %v1094
      %1619 = vmatmul.mubr.bf16.gmra.mrb[0].mxu0 %v910
      %v1620 = vpop.f32.mrb[0].mxu0
      %v1621 = vadd.f32 0.0, %v1620
      %v1622 = vpop.f32.mrb[0].mxu0
      %v1623 = vpop.f32.mrb[0].mxu0
      %v1624 = vadd.f32 0.0, %v1623
      %v1625 = vpop.f32.mrb[0].mxu0
      %1626 = vmatprep.mubr.bf16.mxu0 %v1106
      %1627 = vmatmul.mubr.bf16.gmra.mrb[0].mxu0 %v911
      %v1628 = vpop.f32.mrb[0].mxu0
      %v1629 = vadd.f32 0.0, %v1628
      %v1630 = vpop.f32.mrb[0].mxu0
      %v1631 = vpop.f32.mrb[0].mxu0
      %v1632 = vadd.f32 0.0, %v1631
      %v1633 = vpop.f32.mrb[0].mxu0
      %1634 = vmatprep.mubr.bf16.mxu0 %v1118
      %1635 = vmatmul.mubr.bf16.gmra.mrb[0].mxu0 %v912
      %v1636 = vpop.f32.mrb[0].mxu0
      %v1637 = vadd.f32 0.0, %v1636
      %v1638 = vpop.f32.mrb[0].mxu0
      %v1639 = vpop.f32.mrb[0].mxu0
      %v1640 = vadd.f32 0.0, %v1639
      %v1641 = vpop.f32.mrb[0].mxu0
      %1642 = vmatprep.mubr.bf16.mxu0 %v1289
      %1643 = vmatmul.mubr.bf16.gmra.mrb[0].mxu0 %v913
      %v1644 = vpop.f32.mrb[0].mxu0
      %v1645 = vadd.f32 0.0, %v1644
      %v1646 = vpop.f32.mrb[0].mxu0
      %v1647 = vpop.f32.mrb[0].mxu0
      %v1648 = vadd.f32 0.0, %v1647
      %v1649 = vpop.f32.mrb[0].mxu0
      %1650 = vdwg.mxu0
      %1651 = vmatprep.subr.bf16.mxu0 0
      %1652 = vmatpush1.bf16.msra.mxu0 %v1458
      %1653 = vmatprep.subr.bf16.mxu0 0
      %1654 = vmatpush1.bf16.msra.mxu0 %v1459
      %1655 = vmatprep.subr.bf16.mxu0 0
      %1656 = vmatpush1.bf16.msra.mxu0 %v1460
      %1657 = vmatprep.subr.bf16.mxu0 0
      %1658 = vmatpush1.bf16.msra.mxu0 %v1461
      %1659 = vmatprep.subr.bf16.mxu0 0
      %1660 = vmatpush1.bf16.msra.mxu0 %v1462
      %1661 = vmatprep.subr.bf16.mxu0 0
      %1662 = vmatpush1.bf16.msra.mxu0 %v1463
      %1663 = vmatprep.subr.bf16.mxu0 0
      %1664 = vmatpush1.bf16.msra.mxu0 %v1464
      %1665 = vmatprep.subr.bf16.mxu0 0
      %1666 = vmatpush1.bf16.msra.mxu0 %v1465
      %1667 = vmatprep.subr.bf16.mxu0 0
      %1668 = vmatpush1.bf16.msra.mxu0 0
      %1669 = vmatprep.subr.bf16.mxu0 0
      %1670 = vmatpush1.bf16.msra.mxu0 0
      %1671 = vmatprep.subr.bf16.mxu0 0
      %1672 = vmatpush1.bf16.msra.mxu0 0
      %1673 = vmatprep.subr.bf16.mxu0 0
      %1674 = vmatpush1.bf16.msra.mxu0 0
      %1675 = vmatprep.subr.bf16.mxu0 0
      %1676 = vmatpush1.bf16.msra.mxu0 0
      %1677 = vmatprep.subr.bf16.mxu0 0
      %1678 = vmatpush1.bf16.msra.mxu0 0
      %1679 = vmatprep.subr.bf16.mxu0 0
      %1680 = vmatpush1.bf16.msra.mxu0 0
      %1681 = vmatprep.subr.bf16.mxu0 0
      %1682 = vmatpush1.bf16.msra.mxu0 0
      %1683 = vmatprep.mubr.bf16.mxu0 0
      %1684 = vmatmul.mubr.bf16.gmra.mrb[0].mxu0 %v1171
      %v1685 = vpop.f32.mrb[0].mxu0
      %v1686 = vadd.f32 %v1525, %v1685
      %v1687 = vpop.f32.mrb[0].mxu0
      %v1688 = vpop.f32.mrb[0].mxu0
      %v1689 = vadd.f32 %v1528, %v1688
      %v1690 = vpop.f32.mrb[0].mxu0
      %1691 = vmatprep.mubr.bf16.mxu0 0
      %1692 = vmatmul.mubr.bf16.gmra.mrb[0].mxu0 %v1174
      %v1693 = vpop.f32.mrb[0].mxu0
      %v1694 = vadd.f32 %v1533, %v1693
      %v1695 = vpop.f32.mrb[0].mxu0
      %v1696 = vpop.f32.mrb[0].mxu0
      %v1697 = vadd.f32 %v1536, %v1696
      %v1698 = vpop.f32.mrb[0].mxu0
      %1699 = vmatprep.mubr.bf16.mxu0 0
      %1700 = vmatmul.mubr.bf16.gmra.mrb[0].mxu0 %v1177
      %v1701 = vpop.f32.mrb[0].mxu0
      %v1702 = vadd.f32 %v1541, %v1701
      %v1703 = vpop.f32.mrb[0].mxu0
      %v1704 = vpop.f32.mrb[0].mxu0
      %v1705 = vadd.f32 %v1544, %v1704
      %v1706 = vpop.f32.mrb[0].mxu0
      %1707 = vmatprep.mubr.bf16.mxu0 0
      %1708 = vmatmul.mubr.bf16.gmra.mrb[0].mxu0 %v1180
      %v1709 = vpop.f32.mrb[0].mxu0
      %v1710 = vadd.f32 %v1549, %v1709
      %v1711 = vpop.f32.mrb[0].mxu0
      %v1712 = vpop.f32.mrb[0].mxu0
      %v1713 = vadd.f32 %v1552, %v1712
      %v1714 = vpop.f32.mrb[0].mxu0
      %1715 = vmatprep.mubr.bf16.mxu0 0
      %1716 = vmatmul.mubr.bf16.gmra.mrb[0].mxu0 %v1183
      %v1717 = vpop.f32.mrb[0].mxu0
      %v1718 = vadd.f32 %v1557, %v1717
      %v1719 = vpop.f32.mrb[0].mxu0
      %v1720 = vpop.f32.mrb[0].mxu0
      %v1721 = vadd.f32 %v1560, %v1720
      %v1722 = vpop.f32.mrb[0].mxu0
      %1723 = vmatprep.mubr.bf16.mxu0 0
      %1724 = vmatmul.mubr.bf16.gmra.mrb[0].mxu0 %v1186
      %v1725 = vpop.f32.mrb[0].mxu0
      %v1726 = vadd.f32 %v1565, %v1725
      %v1727 = vpop.f32.mrb[0].mxu0
      %v1728 = vpop.f32.mrb[0].mxu0
      %v1729 = vadd.f32 %v1568, %v1728
      %v1730 = vpop.f32.mrb[0].mxu0
      %1731 = vmatprep.mubr.bf16.mxu0 0
      %1732 = vmatmul.mubr.bf16.gmra.mrb[0].mxu0 %v1189
      %v1733 = vpop.f32.mrb[0].mxu0
      %v1734 = vadd.f32 %v1573, %v1733
      %v1735 = vpop.f32.mrb[0].mxu0
      %v1736 = vpop.f32.mrb[0].mxu0
      %v1737 = vadd.f32 %v1576, %v1736
      %v1738 = vpop.f32.mrb[0].mxu0
      %1739 = vmatprep.mubr.bf16.mxu0 0
      %1740 = vmatmul.mubr.bf16.gmra.mrb[0].mxu0 %v1192
      %v1741 = vpop.f32.mrb[0].mxu0
      %v1742 = vadd.f32 %v1581, %v1741
      %v1743 = vpop.f32.mrb[0].mxu0
      %v1744 = vpop.f32.mrb[0].mxu0
      %v1745 = vadd.f32 %v1584, %v1744
      %v1746 = vpop.f32.mrb[0].mxu0
      %1747 = vmatprep.mubr.bf16.mxu0 0
      %1748 = vmatmul.mubr.bf16.gmra.mrb[0].mxu0 %v1195
      %v1749 = vpop.f32.mrb[0].mxu0
      %v1750 = vadd.f32 %v1589, %v1749
      %v1751 = vpop.f32.mrb[0].mxu0
      %v1752 = vpop.f32.mrb[0].mxu0
      %v1753 = vadd.f32 %v1592, %v1752
      %v1754 = vpop.f32.mrb[0].mxu0
      %1755 = vmatprep.mubr.bf16.mxu0 0
      %1756 = vmatmul.mubr.bf16.gmra.mrb[0].mxu0 %v1198
      %v1757 = vpop.f32.mrb[0].mxu0
      %v1758 = vadd.f32 %v1597, %v1757
      %v1759 = vpop.f32.mrb[0].mxu0
      %v1760 = vpop.f32.mrb[0].mxu0
      %v1761 = vadd.f32 %v1600, %v1760
      %v1762 = vpop.f32.mrb[0].mxu0
      %1763 = vmatprep.mubr.bf16.mxu0 0
      %1764 = vmatmul.mubr.bf16.gmra.mrb[0].mxu0 %v1201
      %v1765 = vpop.f32.mrb[0].mxu0
      %v1766 = vadd.f32 %v1605, %v1765
      %v1767 = vpop.f32.mrb[0].mxu0
      %v1768 = vpop.f32.mrb[0].mxu0
      %v1769 = vadd.f32 %v1608, %v1768
      %v1770 = vpop.f32.mrb[0].mxu0
      %1771 = vmatprep.mubr.bf16.mxu0 0
      %1772 = vmatmul.mubr.bf16.gmra.mrb[0].mxu0 %v1204
      %v1773 = vpop.f32.mrb[0].mxu0
      %v1774 = vadd.f32 %v1613, %v1773
      %v1775 = vpop.f32.mrb[0].mxu0
      %v1776 = vpop.f32.mrb[0].mxu0
      %v1777 = vadd.f32 %v1616, %v1776
      %v1778 = vpop.f32.mrb[0].mxu0
      %1779 = vmatprep.mubr.bf16.mxu0 0
      %1780 = vmatmul.mubr.bf16.gmra.mrb[0].mxu0 %v1207
      %v1781 = vpop.f32.mrb[0].mxu0
      %v1782 = vadd.f32 %v1621, %v1781
      %v1783 = vpop.f32.mrb[0].mxu0
      %v1784 = vpop.f32.mrb[0].mxu0
      %v1785 = vadd.f32 %v1624, %v1784
      %v1786 = vpop.f32.mrb[0].mxu0
      %1787 = vmatprep.mubr.bf16.mxu0 0
      %1788 = vmatmul.mubr.bf16.gmra.mrb[0].mxu0 %v1210
      %v1789 = vpop.f32.mrb[0].mxu0
      %v1790 = vadd.f32 %v1629, %v1789
      %v1791 = vpop.f32.mrb[0].mxu0
      %v1792 = vpop.f32.mrb[0].mxu0
      %v1793 = vadd.f32 %v1632, %v1792
      %v1794 = vpop.f32.mrb[0].mxu0
      %1795 = vmatprep.mubr.bf16.mxu0 0
      %1796 = vmatmul.mubr.bf16.gmra.mrb[0].mxu0 %v1213
      %v1797 = vpop.f32.mrb[0].mxu0
      %v1798 = vadd.f32 %v1637, %v1797
      %v1799 = vpop.f32.mrb[0].mxu0
      %v1800 = vpop.f32.mrb[0].mxu0
      %v1801 = vadd.f32 %v1640, %v1800
      %v1802 = vpop.f32.mrb[0].mxu0
      %1803 = vmatprep.mubr.bf16.mxu0 0
      %1804 = vmatmul.mubr.bf16.gmra.mrb[0].mxu0 %v1295
      %v1805 = vpop.f32.mrb[0].mxu0
      %v1806 = vadd.f32 %v1645, %v1805
      %v1807 = vpop.f32.mrb[0].mxu0
      %v1808 = vpop.f32.mrb[0].mxu0
      %v1809 = vadd.f32 %v1648, %v1808
      %v1810 = vpop.f32.mrb[0].mxu0
      %1811 = vdwg.mxu0
      %v1860 = vunpack.c.l.b16 %v1230
      %v1861 = vunpack.c.l.b16 %v1231
      %v1862 = vunpack.c.l.b16 %v1232
      %v1863 = vunpack.c.l.b16 %v1233
      %v1864 = vunpack.c.l.b16 %v1234
      %v1865 = vunpack.c.l.b16 %v1235
      %v1866 = vunpack.c.l.b16 %v1236
      %v1867 = vunpack.c.l.b16 %v1237
      %v1868 = vunpack.c.l.b16 %v1238
      %v1869 = vunpack.c.l.b16 %v1239
      %v1870 = vunpack.c.l.b16 %v1240
      %v1871 = vunpack.c.l.b16 %v1241
      %v1872 = vunpack.c.l.b16 %v1242
      %v1873 = vunpack.c.l.b16 %v1243
      %v1874 = vunpack.c.l.b16 %v1244
      %v1875 = vunpack.c.l.b16 %v1245
      %v1876 = vunpack.c.l.b16 %v1246
      %v1877 = vunpack.c.l.b16 %v1247
      %v1878 = vunpack.c.l.b16 %v1248
      %v1879 = vunpack.c.l.b16 %v1249
      %v1880 = vunpack.c.l.b16 %v1250
      %v1881 = vunpack.c.l.b16 %v1251
      %v1882 = vunpack.c.l.b16 %v1252
      %v1883 = vunpack.c.l.b16 %v1253
      %v1884 = vunpack.c.l.b16 %v1254
      %v1885 = vunpack.c.l.b16 %v1255
      %v1886 = vunpack.c.l.b16 %v1256
      %v1887 = vunpack.c.l.b16 %v1257
      %v1888 = vunpack.c.l.b16 %v1258
      %v1889 = vunpack.c.l.b16 %v1259
      %v1890 = vunpack.c.l.b16 %v1260
      %v1891 = vunpack.c.l.b16 %v1261
      %v1892 = vunpack.c.l.b16 %v1262
      %v1893 = vunpack.c.l.b16 %v1263
      %v1894 = vunpack.c.l.b16 %v1264
      %v1895 = vunpack.c.l.b16 %v1265
      %v1896 = vunpack.c.l.b16 %v1266
      %v1897 = vunpack.c.l.b16 %v1267
      %v1898 = vunpack.c.l.b16 %v1268
      %v1899 = vunpack.c.l.b16 %v1269
      %v1900 = vunpack.c.l.b16 %v1270
      %v1901 = vunpack.c.l.b16 %v1271
      %v1902 = vunpack.c.l.b16 %v1272
      %v1903 = vunpack.c.l.b16 %v1273
      %v1904 = vunpack.c.l.b16 %v1274
      %v1905 = vunpack.c.l.b16 %v1275
      %v1906 = vunpack.c.l.b16 %v1276
      %v1907 = vunpack.c.l.b16 %v1277
      %v1908 = vpack.c.b16 %v1861, %v1860
      %v1909 = vpack.c.b16 %v1863, %v1862
      %v1910 = vpack.c.b16 %v1865, %v1864
      %v1911 = vpack.c.b16 %v1867, %v1866
      %v1912 = vpack.c.b16 %v1869, %v1868
      %v1913 = vpack.c.b16 %v1871, %v1870
      %v1914 = vpack.c.b16 %v1873, %v1872
      %v1915 = vpack.c.b16 %v1875, %v1874
      %v1916 = vpack.c.b16 %v1877, %v1876
      %v1917 = vpack.c.b16 %v1879, %v1878
      %v1918 = vpack.c.b16 %v1881, %v1880
      %v1919 = vpack.c.b16 %v1883, %v1882
      %v1920 = vpack.c.b16 %v1885, %v1884
      %v1921 = vpack.c.b16 %v1887, %v1886
      %v1922 = vpack.c.b16 %v1889, %v1888
      %v1923 = vpack.c.b16 %v1891, %v1890
      %v1924 = vpack.c.b16 %v1893, %v1892
      %v1925 = vpack.c.b16 %v1895, %v1894
      %v1926 = vpack.c.b16 %v1897, %v1896
      %v1927 = vpack.c.b16 %v1899, %v1898
      %v1928 = vpack.c.b16 %v1901, %v1900
      %v1929 = vpack.c.b16 %v1903, %v1902
      %v1930 = vpack.c.b16 %v1905, %v1904
      %v1931 = vpack.c.b16 %v1907, %v1906
      %1956 = vmatprep.subr.bf16.mxu0 0
      %1957 = vmatpush1.bf16.msra.mxu0 %v1908
      %1958 = vmatprep.subr.bf16.mxu0 0
      %1959 = vmatpush1.bf16.msra.mxu0 %v1909
      %1960 = vmatprep.subr.bf16.mxu0 0
      %1961 = vmatpush1.bf16.msra.mxu0 %v1910
      %1962 = vmatprep.subr.bf16.mxu0 0
      %1963 = vmatpush1.bf16.msra.mxu0 %v1911
      %1964 = vmatprep.subr.bf16.mxu0 0
      %1965 = vmatpush1.bf16.msra.mxu0 %v1912
      %1966 = vmatprep.subr.bf16.mxu0 0
      %1967 = vmatpush1.bf16.msra.mxu0 %v1913
      %1968 = vmatprep.subr.bf16.mxu0 0
      %1969 = vmatpush1.bf16.msra.mxu0 %v1914
      %1970 = vmatprep.subr.bf16.mxu0 0
      %1971 = vmatpush1.bf16.msra.mxu0 %v1915
      %1972 = vmatprep.subr.bf16.mxu0 0
      %1973 = vmatpush1.bf16.msra.mxu0 %v1916
      %1974 = vmatprep.subr.bf16.mxu0 0
      %1975 = vmatpush1.bf16.msra.mxu0 %v1917
      %1976 = vmatprep.subr.bf16.mxu0 0
      %1977 = vmatpush1.bf16.msra.mxu0 %v1918
      %1978 = vmatprep.subr.bf16.mxu0 0
      %1979 = vmatpush1.bf16.msra.mxu0 %v1919
      %1980 = vmatprep.subr.bf16.mxu0 0
      %1981 = vmatpush1.bf16.msra.mxu0 %v1920
      %1982 = vmatprep.subr.bf16.mxu0 0
      %1983 = vmatpush1.bf16.msra.mxu0 %v1921
      %1984 = vmatprep.subr.bf16.mxu0 0
      %1985 = vmatpush1.bf16.msra.mxu0 %v1922
      %1986 = vmatprep.subr.bf16.mxu0 0
      %1987 = vmatpush1.bf16.msra.mxu0 %v1923
      %1988 = vmatprep.mubr.bf16.mxu0 %v938
      %1989 = vmatmul.mubr.bf16.gmra.mrb[0].mxu0 0
      %v1990 = vpop.f32.mrb[0].mxu0
      %v1991 = vadd.f32 %v1686, %v1990
      %v1992 = vpop.f32.mrb[0].mxu0
      %v1993 = vpop.f32.mrb[0].mxu0
      %v1994 = vadd.f32 %v1689, %v1993
      %v1995 = vpop.f32.mrb[0].mxu0
      %1996 = vmatprep.mubr.bf16.mxu0 %v950
      %1997 = vmatmul.mubr.bf16.gmra.mrb[0].mxu0 %v898
      %v1998 = vpop.f32.mrb[0].mxu0
      %v1999 = vadd.f32 %v1694, %v1998
      %v2000 = vpop.f32.mrb[0].mxu0
      %v2001 = vpop.f32.mrb[0].mxu0
      %v2002 = vadd.f32 %v1697, %v2001
      %v2003 = vpop.f32.mrb[0].mxu0
      %2004 = vmatprep.mubr.bf16.mxu0 %v962
      %2005 = vmatmul.mubr.bf16.gmra.mrb[0].mxu0 %v899
      %v2006 = vpop.f32.mrb[0].mxu0
      %v2007 = vadd.f32 %v1702, %v2006
      %v2008 = vpop.f32.mrb[0].mxu0
      %v2009 = vpop.f32.mrb[0].mxu0
      %v2010 = vadd.f32 %v1705, %v2009
      %v2011 = vpop.f32.mrb[0].mxu0
      %2012 = vmatprep.mubr.bf16.mxu0 %v974
      %2013 = vmatmul.mubr.bf16.gmra.mrb[0].mxu0 %v900
      %v2014 = vpop.f32.mrb[0].mxu0
      %v2015 = vadd.f32 %v1710, %v2014
      %v2016 = vpop.f32.mrb[0].mxu0
      %v2017 = vpop.f32.mrb[0].mxu0
      %v2018 = vadd.f32 %v1713, %v2017
      %v2019 = vpop.f32.mrb[0].mxu0
      %2020 = vmatprep.mubr.bf16.mxu0 %v986
      %2021 = vmatmul.mubr.bf16.gmra.mrb[0].mxu0 %v901
      %v2022 = vpop.f32.mrb[0].mxu0
      %v2023 = vadd.f32 %v1718, %v2022
      %v2024 = vpop.f32.mrb[0].mxu0
      %v2025 = vpop.f32.mrb[0].mxu0
      %v2026 = vadd.f32 %v1721, %v2025
      %v2027 = vpop.f32.mrb[0].mxu0
      %2028 = vmatprep.mubr.bf16.mxu0 %v998
      %2029 = vmatmul.mubr.bf16.gmra.mrb[0].mxu0 %v902
      %v2030 = vpop.f32.mrb[0].mxu0
      %v2031 = vadd.f32 %v1726, %v2030
      %v2032 = vpop.f32.mrb[0].mxu0
      %v2033 = vpop.f32.mrb[0].mxu0
      %v2034 = vadd.f32 %v1729, %v2033
      %v2035 = vpop.f32.mrb[0].mxu0
      %2036 = vmatprep.mubr.bf16.mxu0 %v1010
      %2037 = vmatmul.mubr.bf16.gmra.mrb[0].mxu0 %v903
      %v2038 = vpop.f32.mrb[0].mxu0
      %v2039 = vadd.f32 %v1734, %v2038
      %v2040 = vpop.f32.mrb[0].mxu0
      %v2041 = vpop.f32.mrb[0].mxu0
      %v2042 = vadd.f32 %v1737, %v2041
      %v2043 = vpop.f32.mrb[0].mxu0
      %2044 = vmatprep.mubr.bf16.mxu0 %v1022
      %2045 = vmatmul.mubr.bf16.gmra.mrb[0].mxu0 %v904
      %v2046 = vpop.f32.mrb[0].mxu0
      %v2047 = vadd.f32 %v1742, %v2046
      %v2048 = vpop.f32.mrb[0].mxu0
      %v2049 = vpop.f32.mrb[0].mxu0
      %v2050 = vadd.f32 %v1745, %v2049
      %v2051 = vpop.f32.mrb[0].mxu0
      %2052 = vmatprep.mubr.bf16.mxu0 %v1034
      %2053 = vmatmul.mubr.bf16.gmra.mrb[0].mxu0 %v905
      %v2054 = vpop.f32.mrb[0].mxu0
      %v2055 = vadd.f32 %v1750, %v2054
      %v2056 = vpop.f32.mrb[0].mxu0
      %v2057 = vpop.f32.mrb[0].mxu0
      %v2058 = vadd.f32 %v1753, %v2057
      %v2059 = vpop.f32.mrb[0].mxu0
      %2060 = vmatprep.mubr.bf16.mxu0 %v1046
      %2061 = vmatmul.mubr.bf16.gmra.mrb[0].mxu0 %v906
      %v2062 = vpop.f32.mrb[0].mxu0
      %v2063 = vadd.f32 %v1758, %v2062
      %v2064 = vpop.f32.mrb[0].mxu0
      %v2065 = vpop.f32.mrb[0].mxu0
      %v2066 = vadd.f32 %v1761, %v2065
      %v2067 = vpop.f32.mrb[0].mxu0
      %2068 = vmatprep.mubr.bf16.mxu0 %v1058
      %2069 = vmatmul.mubr.bf16.gmra.mrb[0].mxu0 %v907
      %v2070 = vpop.f32.mrb[0].mxu0
      %v2071 = vadd.f32 %v1766, %v2070
      %v2072 = vpop.f32.mrb[0].mxu0
      %v2073 = vpop.f32.mrb[0].mxu0
      %v2074 = vadd.f32 %v1769, %v2073
      %v2075 = vpop.f32.mrb[0].mxu0
      %2076 = vmatprep.mubr.bf16.mxu0 %v1070
      %2077 = vmatmul.mubr.bf16.gmra.mrb[0].mxu0 %v908
      %v2078 = vpop.f32.mrb[0].mxu0
      %v2079 = vadd.f32 %v1774, %v2078
      %v2080 = vpop.f32.mrb[0].mxu0
      %v2081 = vpop.f32.mrb[0].mxu0
      %v2082 = vadd.f32 %v1777, %v2081
      %v2083 = vpop.f32.mrb[0].mxu0
      %2084 = vmatprep.mubr.bf16.mxu0 %v1082
      %2085 = vmatmul.mubr.bf16.gmra.mrb[0].mxu0 %v909
      %v2086 = vpop.f32.mrb[0].mxu0
      %v2087 = vadd.f32 %v1782, %v2086
      %v2088 = vpop.f32.mrb[0].mxu0
      %v2089 = vpop.f32.mrb[0].mxu0
      %v2090 = vadd.f32 %v1785, %v2089
      %v2091 = vpop.f32.mrb[0].mxu0
      %2092 = vmatprep.mubr.bf16.mxu0 %v1094
      %2093 = vmatmul.mubr.bf16.gmra.mrb[0].mxu0 %v910
      %v2094 = vpop.f32.mrb[0].mxu0
      %v2095 = vadd.f32 %v1790, %v2094
      %v2096 = vpop.f32.mrb[0].mxu0
      %v2097 = vpop.f32.mrb[0].mxu0
      %v2098 = vadd.f32 %v1793, %v2097
      %v2099 = vpop.f32.mrb[0].mxu0
      %2100 = vmatprep.mubr.bf16.mxu0 %v1106
      %2101 = vmatmul.mubr.bf16.gmra.mrb[0].mxu0 %v911
      %v2102 = vpop.f32.mrb[0].mxu0
      %v2103 = vadd.f32 %v1798, %v2102
      %v2104 = vpop.f32.mrb[0].mxu0
      %v2105 = vpop.f32.mrb[0].mxu0
      %v2106 = vadd.f32 %v1801, %v2105
      %v2107 = vpop.f32.mrb[0].mxu0
      %2108 = vmatprep.mubr.bf16.mxu0 %v1118
      %2109 = vmatmul.mubr.bf16.gmra.mrb[0].mxu0 %v912
      %v2110 = vpop.f32.mrb[0].mxu0
      %v2111 = vadd.f32 %v1806, %v2110
      %v2112 = vpop.f32.mrb[0].mxu0
      %v2113 = vpop.f32.mrb[0].mxu0
      %v2114 = vadd.f32 %v1809, %v2113
      %v2115 = vpop.f32.mrb[0].mxu0
      %2116 = vdwg.mxu0
      %2117 = vmatprep.subr.bf16.mxu0 0
      %2118 = vmatpush1.bf16.msra.mxu0 %v1924
      %2119 = vmatprep.subr.bf16.mxu0 0
      %2120 = vmatpush1.bf16.msra.mxu0 %v1925
      %2121 = vmatprep.subr.bf16.mxu0 0
      %2122 = vmatpush1.bf16.msra.mxu0 %v1926
      %2123 = vmatprep.subr.bf16.mxu0 0
      %2124 = vmatpush1.bf16.msra.mxu0 %v1927
      %2125 = vmatprep.subr.bf16.mxu0 0
      %2126 = vmatpush1.bf16.msra.mxu0 %v1928
      %2127 = vmatprep.subr.bf16.mxu0 0
      %2128 = vmatpush1.bf16.msra.mxu0 %v1929
      %2129 = vmatprep.subr.bf16.mxu0 0
      %2130 = vmatpush1.bf16.msra.mxu0 %v1930
      %2131 = vmatprep.subr.bf16.mxu0 0
      %2132 = vmatpush1.bf16.msra.mxu0 %v1931
      %2133 = vmatprep.subr.bf16.mxu0 0
      %2134 = vmatpush1.bf16.msra.mxu0 0
      %2135 = vmatprep.subr.bf16.mxu0 0
      %2136 = vmatpush1.bf16.msra.mxu0 0
      %2137 = vmatprep.subr.bf16.mxu0 0
      %2138 = vmatpush1.bf16.msra.mxu0 0
      %2139 = vmatprep.subr.bf16.mxu0 0
      %2140 = vmatpush1.bf16.msra.mxu0 0
      %2141 = vmatprep.subr.bf16.mxu0 0
      %2142 = vmatpush1.bf16.msra.mxu0 0
      %2143 = vmatprep.subr.bf16.mxu0 0
      %2144 = vmatpush1.bf16.msra.mxu0 0
      %2145 = vmatprep.subr.bf16.mxu0 0
      %2146 = vmatpush1.bf16.msra.mxu0 0
      %2147 = vmatprep.subr.bf16.mxu0 0
      %2148 = vmatpush1.bf16.msra.mxu0 0
      %2149 = vmatprep.mubr.bf16.mxu0 0
      %2150 = vmatmul.mubr.bf16.gmra.mrb[0].mxu0 %v1168
      %v2151 = vpop.f32.mrb[0].mxu0
      %v2152 = vadd.f32 %v1991, %v2151
      %v2153 = vpop.f32.mrb[0].mxu0
      %v2154 = vpop.f32.mrb[0].mxu0
      %v2155 = vadd.f32 %v1994, %v2154
      %v2156 = vpop.f32.mrb[0].mxu0
      %2157 = vmatprep.mubr.bf16.mxu0 0
      %2158 = vmatmul.mubr.bf16.gmra.mrb[0].mxu0 %v1171
      %v2159 = vpop.f32.mrb[0].mxu0
      %v2160 = vadd.f32 %v1999, %v2159
      %v2161 = vpop.f32.mrb[0].mxu0
      %v2162 = vpop.f32.mrb[0].mxu0
      %v2163 = vadd.f32 %v2002, %v2162
      %v2164 = vpop.f32.mrb[0].mxu0
      %2165 = vmatprep.mubr.bf16.mxu0 0
      %2166 = vmatmul.mubr.bf16.gmra.mrb[0].mxu0 %v1174
      %v2167 = vpop.f32.mrb[0].mxu0
      %v2168 = vadd.f32 %v2007, %v2167
      %v2169 = vpop.f32.mrb[0].mxu0
      %v2170 = vpop.f32.mrb[0].mxu0
      %v2171 = vadd.f32 %v2010, %v2170
      %v2172 = vpop.f32.mrb[0].mxu0
      %2173 = vmatprep.mubr.bf16.mxu0 0
      %2174 = vmatmul.mubr.bf16.gmra.mrb[0].mxu0 %v1177
      %v2175 = vpop.f32.mrb[0].mxu0
      %v2176 = vadd.f32 %v2015, %v2175
      %v2177 = vpop.f32.mrb[0].mxu0
      %v2178 = vpop.f32.mrb[0].mxu0
      %v2179 = vadd.f32 %v2018, %v2178
      %v2180 = vpop.f32.mrb[0].mxu0
      %2181 = vmatprep.mubr.bf16.mxu0 0
      %2182 = vmatmul.mubr.bf16.gmra.mrb[0].mxu0 %v1180
      %v2183 = vpop.f32.mrb[0].mxu0
      %v2184 = vadd.f32 %v2023, %v2183
      %v2185 = vpop.f32.mrb[0].mxu0
      %v2186 = vpop.f32.mrb[0].mxu0
      %v2187 = vadd.f32 %v2026, %v2186
      %v2188 = vpop.f32.mrb[0].mxu0
      %2189 = vmatprep.mubr.bf16.mxu0 0
      %2190 = vmatmul.mubr.bf16.gmra.mrb[0].mxu0 %v1183
      %v2191 = vpop.f32.mrb[0].mxu0
      %v2192 = vadd.f32 %v2031, %v2191
      %v2193 = vpop.f32.mrb[0].mxu0
      %v2194 = vpop.f32.mrb[0].mxu0
      %v2195 = vadd.f32 %v2034, %v2194
      %v2196 = vpop.f32.mrb[0].mxu0
      %2197 = vmatprep.mubr.bf16.mxu0 0
      %2198 = vmatmul.mubr.bf16.gmra.mrb[0].mxu0 %v1186
      %v2199 = vpop.f32.mrb[0].mxu0
      %v2200 = vadd.f32 %v2039, %v2199
      %v2201 = vpop.f32.mrb[0].mxu0
      %v2202 = vpop.f32.mrb[0].mxu0
      %v2203 = vadd.f32 %v2042, %v2202
      %v2204 = vpop.f32.mrb[0].mxu0
      %2205 = vmatprep.mubr.bf16.mxu0 0
      %2206 = vmatmul.mubr.bf16.gmra.mrb[0].mxu0 %v1189
      %v2207 = vpop.f32.mrb[0].mxu0
      %v2208 = vadd.f32 %v2047, %v2207
      %v2209 = vpop.f32.mrb[0].mxu0
      %v2210 = vpop.f32.mrb[0].mxu0
      %v2211 = vadd.f32 %v2050, %v2210
      %v2212 = vpop.f32.mrb[0].mxu0
      %2213 = vmatprep.mubr.bf16.mxu0 0
      %2214 = vmatmul.mubr.bf16.gmra.mrb[0].mxu0 %v1192
      %v2215 = vpop.f32.mrb[0].mxu0
      %v2216 = vadd.f32 %v2055, %v2215
      %v2217 = vpop.f32.mrb[0].mxu0
      %v2218 = vpop.f32.mrb[0].mxu0
      %v2219 = vadd.f32 %v2058, %v2218
      %v2220 = vpop.f32.mrb[0].mxu0
      %2221 = vmatprep.mubr.bf16.mxu0 0
      %2222 = vmatmul.mubr.bf16.gmra.mrb[0].mxu0 %v1195
      %v2223 = vpop.f32.mrb[0].mxu0
      %v2224 = vadd.f32 %v2063, %v2223
      %v2225 = vpop.f32.mrb[0].mxu0
      %v2226 = vpop.f32.mrb[0].mxu0
      %v2227 = vadd.f32 %v2066, %v2226
      %v2228 = vpop.f32.mrb[0].mxu0
      %2229 = vmatprep.mubr.bf16.mxu0 0
      %2230 = vmatmul.mubr.bf16.gmra.mrb[0].mxu0 %v1198
      %v2231 = vpop.f32.mrb[0].mxu0
      %v2232 = vadd.f32 %v2071, %v2231
      %v2233 = vpop.f32.mrb[0].mxu0
      %v2234 = vpop.f32.mrb[0].mxu0
      %v2235 = vadd.f32 %v2074, %v2234
      %v2236 = vpop.f32.mrb[0].mxu0
      %2237 = vmatprep.mubr.bf16.mxu0 0
      %2238 = vmatmul.mubr.bf16.gmra.mrb[0].mxu0 %v1201
      %v2239 = vpop.f32.mrb[0].mxu0
      %v2240 = vadd.f32 %v2079, %v2239
      %v2241 = vpop.f32.mrb[0].mxu0
      %v2242 = vpop.f32.mrb[0].mxu0
      %v2243 = vadd.f32 %v2082, %v2242
      %v2244 = vpop.f32.mrb[0].mxu0
      %2245 = vmatprep.mubr.bf16.mxu0 0
      %2246 = vmatmul.mubr.bf16.gmra.mrb[0].mxu0 %v1204
      %v2247 = vpop.f32.mrb[0].mxu0
      %v2248 = vadd.f32 %v2087, %v2247
      %v2249 = vpop.f32.mrb[0].mxu0
      %v2250 = vpop.f32.mrb[0].mxu0
      %v2251 = vadd.f32 %v2090, %v2250
      %v2252 = vpop.f32.mrb[0].mxu0
      %2253 = vmatprep.mubr.bf16.mxu0 0
      %2254 = vmatmul.mubr.bf16.gmra.mrb[0].mxu0 %v1207
      %v2255 = vpop.f32.mrb[0].mxu0
      %v2256 = vadd.f32 %v2095, %v2255
      %v2257 = vpop.f32.mrb[0].mxu0
      %v2258 = vpop.f32.mrb[0].mxu0
      %v2259 = vadd.f32 %v2098, %v2258
      %v2260 = vpop.f32.mrb[0].mxu0
      %2261 = vmatprep.mubr.bf16.mxu0 0
      %2262 = vmatmul.mubr.bf16.gmra.mrb[0].mxu0 %v1210
      %v2263 = vpop.f32.mrb[0].mxu0
      %v2264 = vadd.f32 %v2103, %v2263
      %v2265 = vpop.f32.mrb[0].mxu0
      %v2266 = vpop.f32.mrb[0].mxu0
      %v2267 = vadd.f32 %v2106, %v2266
      %v2268 = vpop.f32.mrb[0].mxu0
      %2269 = vmatprep.mubr.bf16.mxu0 0
      %2270 = vmatmul.mubr.bf16.gmra.mrb[0].mxu0 %v1213
      %v2271 = vpop.f32.mrb[0].mxu0
      %v2272 = vadd.f32 %v2111, %v2271
      %v2273 = vpop.f32.mrb[0].mxu0
      %v2274 = vpop.f32.mrb[0].mxu0
      %v2275 = vadd.f32 %v2114, %v2274
      %v2276 = vpop.f32.mrb[0].mxu0
      %2277 = vdwg.mxu0
      %s2278 = scalar_lea.vmem %s4, 384
      %v2279 = vld [vmem:[%s2278] sm:$0xf]
      %v2280 = vld [vmem:[%s2278 + $0x4] sm:$0xf]
      %v2281 = vld [vmem:[%s2278 + $0x8] sm:$0xf]
      %v2282 = vld [vmem:[%s2278 + $0xc] sm:$0xf]
      %v2283 = vld [vmem:[%s2278 + $0x10] sm:$0xf]
      %v2284 = vld [vmem:[%s2278 + $0x14] sm:$0xf]
      %v2285 = vld [vmem:[%s2278 + $0x18] sm:$0xf]
      %v2286 = vld [vmem:[%s2278 + $0x1c] sm:$0xf]
      %v2287 = vld [vmem:[%s2278 + $0x20] sm:$0xf]
      %v2288 = vld [vmem:[%s2278 + $0x24] sm:$0xf]
      %v2289 = vld [vmem:[%s2278 + $0x28] sm:$0xf]
      %v2290 = vld [vmem:[%s2278 + $0x2c] sm:$0xf]
      %v2291 = vld [vmem:[%s2278 + $0x30] sm:$0xf]
      %v2292 = vld [vmem:[%s2278 + $0x34] sm:$0xf]
      %v2293 = vld [vmem:[%s2278 + $0x38] sm:$0xf]
      %v2294 = vld [vmem:[%s2278 + $0x3c] sm:$0xf]
      %v2295 = vld [vmem:[%s2278 + $0x40] sm:$0xf]
      %v2296 = vld [vmem:[%s2278 + $0x44] sm:$0xf]
      %v2297 = vld [vmem:[%s2278 + $0x48] sm:$0xf]
      %v2298 = vld [vmem:[%s2278 + $0x4c] sm:$0xf]
      %v2299 = vld [vmem:[%s2278 + $0x50] sm:$0xf]
      %v2300 = vld [vmem:[%s2278 + $0x54] sm:$0xf]
      %v2301 = vld [vmem:[%s2278 + $0x58] sm:$0xf]
      %v2302 = vld [vmem:[%s2278 + $0x5c] sm:$0xf]
      %v2303 = vld [vmem:[%s2278 + $0x60] sm:$0xf]
      %v2304 = vld [vmem:[%s2278 + $0x64] sm:$0xf]
      %v2305 = vld [vmem:[%s2278 + $0x68] sm:$0xf]
      %v2306 = vld [vmem:[%s2278 + $0x6c] sm:$0xf]
      %v2307 = vld [vmem:[%s2278 + $0x70] sm:$0xf]
      %v2308 = vld [vmem:[%s2278 + $0x74] sm:$0xf]
      %v2309 = vld [vmem:[%s2278 + $0x78] sm:$0xf]
      %v2310 = vld [vmem:[%s2278 + $0x7c] sm:$0xf]
      %v2311 = vld [vmem:[%s2278 + $0x80] sm:$0xf]
      %v2312 = vld [vmem:[%s2278 + $0x84] sm:$0xf]
      %v2313 = vld [vmem:[%s2278 + $0x88] sm:$0xf]
      %v2314 = vld [vmem:[%s2278 + $0x8c] sm:$0xf]
      %v2315 = vld [vmem:[%s2278 + $0x90] sm:$0xf]
      %v2316 = vld [vmem:[%s2278 + $0x94] sm:$0xf]
      %v2317 = vld [vmem:[%s2278 + $0x98] sm:$0xf]
      %v2318 = vld [vmem:[%s2278 + $0x9c] sm:$0xf]
      %v2319 = vld [vmem:[%s2278 + $0xa0] sm:$0xf]
      %v2320 = vld [vmem:[%s2278 + $0xa4] sm:$0xf]
      %v2321 = vld [vmem:[%s2278 + $0xa8] sm:$0xf]
      %v2322 = vld [vmem:[%s2278 + $0xac] sm:$0xf]
      %v2323 = vld [vmem:[%s2278 + $0xb0] sm:$0xf]
      %v2324 = vld [vmem:[%s2278 + $0xb4] sm:$0xf]
      %v2325 = vld [vmem:[%s2278 + $0xb8] sm:$0xf]
      %v2326 = vld [vmem:[%s2278 + $0xbc] sm:$0xf]
      %v2375 = vunpack.c.l.b16 %v2279
      %v2376 = vunpack.c.l.b16 %v2280
      %v2377 = vunpack.c.l.b16 %v2281
      %v2378 = vunpack.c.l.b16 %v2282
      %v2379 = vunpack.c.l.b16 %v2283
      %v2380 = vunpack.c.l.b16 %v2284
      %v2381 = vunpack.c.l.b16 %v2285
      %v2382 = vunpack.c.l.b16 %v2286
      %v2383 = vunpack.c.l.b16 %v2287
      %v2384 = vunpack.c.l.b16 %v2288
      %v2385 = vunpack.c.l.b16 %v2289
      %v2386 = vunpack.c.l.b16 %v2290
      %v2387 = vunpack.c.l.b16 %v2291
      %v2388 = vunpack.c.l.b16 %v2292
      %v2389 = vunpack.c.l.b16 %v2293
      %v2390 = vunpack.c.l.b16 %v2294
      %v2391 = vunpack.c.l.b16 %v2295
      %v2392 = vunpack.c.l.b16 %v2296
      %v2393 = vunpack.c.l.b16 %v2297
      %v2394 = vunpack.c.l.b16 %v2298
      %v2395 = vunpack.c.l.b16 %v2299
      %v2396 = vunpack.c.l.b16 %v2300
      %v2397 = vunpack.c.l.b16 %v2301
      %v2398 = vunpack.c.l.b16 %v2302
      %v2399 = vunpack.c.l.b16 %v2303
      %v2400 = vunpack.c.l.b16 %v2304
      %v2401 = vunpack.c.l.b16 %v2305
      %v2402 = vunpack.c.l.b16 %v2306
      %v2403 = vunpack.c.l.b16 %v2307
      %v2404 = vunpack.c.l.b16 %v2308
      %v2405 = vunpack.c.l.b16 %v2309
      %v2406 = vunpack.c.l.b16 %v2310
      %v2407 = vunpack.c.l.b16 %v2311
      %v2408 = vunpack.c.l.b16 %v2312
      %v2409 = vunpack.c.l.b16 %v2313
      %v2410 = vunpack.c.l.b16 %v2314
      %v2411 = vunpack.c.l.b16 %v2315
      %v2412 = vunpack.c.l.b16 %v2316
      %v2413 = vunpack.c.l.b16 %v2317
      %v2414 = vunpack.c.l.b16 %v2318
      %v2415 = vunpack.c.l.b16 %v2319
      %v2416 = vunpack.c.l.b16 %v2320
      %v2417 = vunpack.c.l.b16 %v2321
      %v2418 = vunpack.c.l.b16 %v2322
      %v2419 = vunpack.c.l.b16 %v2323
      %v2420 = vunpack.c.l.b16 %v2324
      %v2421 = vunpack.c.l.b16 %v2325
      %v2422 = vunpack.c.l.b16 %v2326
      %v2423 = vpack.c.b16 %v2376, %v2375
      %v2424 = vpack.c.b16 %v2378, %v2377
      %v2425 = vpack.c.b16 %v2380, %v2379
      %v2426 = vpack.c.b16 %v2382, %v2381
      %v2427 = vpack.c.b16 %v2384, %v2383
      %v2428 = vpack.c.b16 %v2386, %v2385
      %v2429 = vpack.c.b16 %v2388, %v2387
      %v2430 = vpack.c.b16 %v2390, %v2389
      %v2431 = vpack.c.b16 %v2392, %v2391
      %v2432 = vpack.c.b16 %v2394, %v2393
      %v2433 = vpack.c.b16 %v2396, %v2395
      %v2434 = vpack.c.b16 %v2398, %v2397
      %v2435 = vpack.c.b16 %v2400, %v2399
      %v2436 = vpack.c.b16 %v2402, %v2401
      %v2437 = vpack.c.b16 %v2404, %v2403
      %v2438 = vpack.c.b16 %v2406, %v2405
      %v2439 = vpack.c.b16 %v2408, %v2407
      %v2440 = vpack.c.b16 %v2410, %v2409
      %v2441 = vpack.c.b16 %v2412, %v2411
      %v2442 = vpack.c.b16 %v2414, %v2413
      %v2443 = vpack.c.b16 %v2416, %v2415
      %v2444 = vpack.c.b16 %v2418, %v2417
      %v2445 = vpack.c.b16 %v2420, %v2419
      %v2446 = vpack.c.b16 %v2422, %v2421
      %2471 = vmatprep.subr.bf16.mxu0 0
      %2472 = vmatpush1.bf16.msra.mxu0 %v2423
      %2473 = vmatprep.subr.bf16.mxu0 0
      %2474 = vmatpush1.bf16.msra.mxu0 %v2424
      %2475 = vmatprep.subr.bf16.mxu0 0
      %2476 = vmatpush1.bf16.msra.mxu0 %v2425
      %2477 = vmatprep.subr.bf16.mxu0 0
      %2478 = vmatpush1.bf16.msra.mxu0 %v2426
      %2479 = vmatprep.subr.bf16.mxu0 0
      %2480 = vmatpush1.bf16.msra.mxu0 %v2427
      %2481 = vmatprep.subr.bf16.mxu0 0
      %2482 = vmatpush1.bf16.msra.mxu0 %v2428
      %2483 = vmatprep.subr.bf16.mxu0 0
      %2484 = vmatpush1.bf16.msra.mxu0 %v2429
      %2485 = vmatprep.subr.bf16.mxu0 0
      %2486 = vmatpush1.bf16.msra.mxu0 %v2430
      %2487 = vmatprep.subr.bf16.mxu0 0
      %2488 = vmatpush1.bf16.msra.mxu0 %v2431
      %2489 = vmatprep.subr.bf16.mxu0 0
      %2490 = vmatpush1.bf16.msra.mxu0 %v2432
      %2491 = vmatprep.subr.bf16.mxu0 0
      %2492 = vmatpush1.bf16.msra.mxu0 %v2433
      %2493 = vmatprep.subr.bf16.mxu0 0
      %2494 = vmatpush1.bf16.msra.mxu0 %v2434
      %2495 = vmatprep.subr.bf16.mxu0 0
      %2496 = vmatpush1.bf16.msra.mxu0 %v2435
      %2497 = vmatprep.subr.bf16.mxu0 0
      %2498 = vmatpush1.bf16.msra.mxu0 %v2436
      %2499 = vmatprep.subr.bf16.mxu0 0
      %2500 = vmatpush1.bf16.msra.mxu0 %v2437
      %2501 = vmatprep.subr.bf16.mxu0 0
      %2502 = vmatpush1.bf16.msra.mxu0 %v2438
      %2503 = vmatprep.mubr.bf16.mxu0 %v962
      %2504 = vmatmul.mubr.bf16.gmra.mrb[0].mxu0 %v899
      %v2505 = vpop.f32.mrb[0].mxu0
      %v2506 = vadd.f32 0.0, %v2505
      %v2507 = vpop.f32.mrb[0].mxu0
      %v2508 = vpop.f32.mrb[0].mxu0
      %v2509 = vadd.f32 0.0, %v2508
      %v2510 = vpop.f32.mrb[0].mxu0
      %2511 = vmatprep.mubr.bf16.mxu0 %v974
      %2512 = vmatmul.mubr.bf16.gmra.mrb[0].mxu0 %v900
      %v2513 = vpop.f32.mrb[0].mxu0
      %v2514 = vadd.f32 0.0, %v2513
      %v2515 = vpop.f32.mrb[0].mxu0
      %v2516 = vpop.f32.mrb[0].mxu0
      %v2517 = vadd.f32 0.0, %v2516
      %v2518 = vpop.f32.mrb[0].mxu0
      %2519 = vmatprep.mubr.bf16.mxu0 %v986
      %2520 = vmatmul.mubr.bf16.gmra.mrb[0].mxu0 %v901
      %v2521 = vpop.f32.mrb[0].mxu0
      %v2522 = vadd.f32 0.0, %v2521
      %v2523 = vpop.f32.mrb[0].mxu0
      %v2524 = vpop.f32.mrb[0].mxu0
      %v2525 = vadd.f32 0.0, %v2524
      %v2526 = vpop.f32.mrb[0].mxu0
      %2527 = vmatprep.mubr.bf16.mxu0 %v998
      %2528 = vmatmul.mubr.bf16.gmra.mrb[0].mxu0 %v902
      %v2529 = vpop.f32.mrb[0].mxu0
      %v2530 = vadd.f32 0.0, %v2529
      %v2531 = vpop.f32.mrb[0].mxu0
      %v2532 = vpop.f32.mrb[0].mxu0
      %v2533 = vadd.f32 0.0, %v2532
      %v2534 = vpop.f32.mrb[0].mxu0
      %2535 = vmatprep.mubr.bf16.mxu0 %v1010
      %2536 = vmatmul.mubr.bf16.gmra.mrb[0].mxu0 %v903
      %v2537 = vpop.f32.mrb[0].mxu0
      %v2538 = vadd.f32 0.0, %v2537
      %v2539 = vpop.f32.mrb[0].mxu0
      %v2540 = vpop.f32.mrb[0].mxu0
      %v2541 = vadd.f32 0.0, %v2540
      %v2542 = vpop.f32.mrb[0].mxu0
      %2543 = vmatprep.mubr.bf16.mxu0 %v1022
      %2544 = vmatmul.mubr.bf16.gmra.mrb[0].mxu0 %v904
      %v2545 = vpop.f32.mrb[0].mxu0
      %v2546 = vadd.f32 0.0, %v2545
      %v2547 = vpop.f32.mrb[0].mxu0
      %v2548 = vpop.f32.mrb[0].mxu0
      %v2549 = vadd.f32 0.0, %v2548
      %v2550 = vpop.f32.mrb[0].mxu0
      %2551 = vmatprep.mubr.bf16.mxu0 %v1034
      %2552 = vmatmul.mubr.bf16.gmra.mrb[0].mxu0 %v905
      %v2553 = vpop.f32.mrb[0].mxu0
      %v2554 = vadd.f32 0.0, %v2553
      %v2555 = vpop.f32.mrb[0].mxu0
      %v2556 = vpop.f32.mrb[0].mxu0
      %v2557 = vadd.f32 0.0, %v2556
      %v2558 = vpop.f32.mrb[0].mxu0
      %2559 = vmatprep.mubr.bf16.mxu0 %v1046
      %2560 = vmatmul.mubr.bf16.gmra.mrb[0].mxu0 %v906
      %v2561 = vpop.f32.mrb[0].mxu0
      %v2562 = vadd.f32 0.0, %v2561
      %v2563 = vpop.f32.mrb[0].mxu0
      %v2564 = vpop.f32.mrb[0].mxu0
      %v2565 = vadd.f32 0.0, %v2564
      %v2566 = vpop.f32.mrb[0].mxu0
      %2567 = vmatprep.mubr.bf16.mxu0 %v1058
      %2568 = vmatmul.mubr.bf16.gmra.mrb[0].mxu0 %v907
      %v2569 = vpop.f32.mrb[0].mxu0
      %v2570 = vadd.f32 0.0, %v2569
      %v2571 = vpop.f32.mrb[0].mxu0
      %v2572 = vpop.f32.mrb[0].mxu0
      %v2573 = vadd.f32 0.0, %v2572
      %v2574 = vpop.f32.mrb[0].mxu0
      %2575 = vmatprep.mubr.bf16.mxu0 %v1070
      %2576 = vmatmul.mubr.bf16.gmra.mrb[0].mxu0 %v908
      %v2577 = vpop.f32.mrb[0].mxu0
      %v2578 = vadd.f32 0.0, %v2577
      %v2579 = vpop.f32.mrb[0].mxu0
      %v2580 = vpop.f32.mrb[0].mxu0
      %v2581 = vadd.f32 0.0, %v2580
      %v2582 = vpop.f32.mrb[0].mxu0
      %2583 = vmatprep.mubr.bf16.mxu0 %v1082
      %2584 = vmatmul.mubr.bf16.gmra.mrb[0].mxu0 %v909
      %v2585 = vpop.f32.mrb[0].mxu0
      %v2586 = vadd.f32 0.0, %v2585
      %v2587 = vpop.f32.mrb[0].mxu0
      %v2588 = vpop.f32.mrb[0].mxu0
      %v2589 = vadd.f32 0.0, %v2588
      %v2590 = vpop.f32.mrb[0].mxu0
      %2591 = vmatprep.mubr.bf16.mxu0 %v1094
      %2592 = vmatmul.mubr.bf16.gmra.mrb[0].mxu0 %v910
      %v2593 = vpop.f32.mrb[0].mxu0
      %v2594 = vadd.f32 0.0, %v2593
      %v2595 = vpop.f32.mrb[0].mxu0
      %v2596 = vpop.f32.mrb[0].mxu0
      %v2597 = vadd.f32 0.0, %v2596
      %v2598 = vpop.f32.mrb[0].mxu0
      %2599 = vmatprep.mubr.bf16.mxu0 %v1106
      %2600 = vmatmul.mubr.bf16.gmra.mrb[0].mxu0 %v911
      %v2601 = vpop.f32.mrb[0].mxu0
      %v2602 = vadd.f32 0.0, %v2601
      %v2603 = vpop.f32.mrb[0].mxu0
      %v2604 = vpop.f32.mrb[0].mxu0
      %v2605 = vadd.f32 0.0, %v2604
      %v2606 = vpop.f32.mrb[0].mxu0
      %2607 = vmatprep.mubr.bf16.mxu0 %v1118
      %2608 = vmatmul.mubr.bf16.gmra.mrb[0].mxu0 %v912
      %v2609 = vpop.f32.mrb[0].mxu0
      %v2610 = vadd.f32 0.0, %v2609
      %v2611 = vpop.f32.mrb[0].mxu0
      %v2612 = vpop.f32.mrb[0].mxu0
      %v2613 = vadd.f32 0.0, %v2612
      %v2614 = vpop.f32.mrb[0].mxu0
      %2615 = vmatprep.mubr.bf16.mxu0 %v1289
      %2616 = vmatmul.mubr.bf16.gmra.mrb[0].mxu0 %v913
      %v2617 = vpop.f32.mrb[0].mxu0
      %v2618 = vadd.f32 0.0, %v2617
      %v2619 = vpop.f32.mrb[0].mxu0
      %v2620 = vpop.f32.mrb[0].mxu0
      %v2621 = vadd.f32 0.0, %v2620
      %v2622 = vpop.f32.mrb[0].mxu0
      %2623 = vmatprep.mubr.bf16.mxu0 %v938
      %2624 = vmatmul.mubr.bf16.gmra.mrb[0].mxu0 0
      %v2625 = vpop.f32.mrb[0].mxu0
      %v2626 = vadd.f32 0.0, %v2625
      %v2627 = vpop.f32.mrb[0].mxu0
      %v2628 = vpop.f32.mrb[0].mxu0
      %v2629 = vadd.f32 0.0, %v2628
      %v2630 = vpop.f32.mrb[0].mxu0
      %2631 = vdwg.mxu0
      %2632 = vmatprep.subr.bf16.mxu0 0
      %2633 = vmatpush1.bf16.msra.mxu0 %v2439
      %2634 = vmatprep.subr.bf16.mxu0 0
      %2635 = vmatpush1.bf16.msra.mxu0 %v2440
      %2636 = vmatprep.subr.bf16.mxu0 0
      %2637 = vmatpush1.bf16.msra.mxu0 %v2441
      %2638 = vmatprep.subr.bf16.mxu0 0
      %2639 = vmatpush1.bf16.msra.mxu0 %v2442
      %2640 = vmatprep.subr.bf16.mxu0 0
      %2641 = vmatpush1.bf16.msra.mxu0 %v2443
      %2642 = vmatprep.subr.bf16.mxu0 0
      %2643 = vmatpush1.bf16.msra.mxu0 %v2444
      %2644 = vmatprep.subr.bf16.mxu0 0
      %2645 = vmatpush1.bf16.msra.mxu0 %v2445
      %2646 = vmatprep.subr.bf16.mxu0 0
      %2647 = vmatpush1.bf16.msra.mxu0 %v2446
      %2648 = vmatprep.subr.bf16.mxu0 0
      %2649 = vmatpush1.bf16.msra.mxu0 0
      %2650 = vmatprep.subr.bf16.mxu0 0
      %2651 = vmatpush1.bf16.msra.mxu0 0
      %2652 = vmatprep.subr.bf16.mxu0 0
      %2653 = vmatpush1.bf16.msra.mxu0 0
      %2654 = vmatprep.subr.bf16.mxu0 0
      %2655 = vmatpush1.bf16.msra.mxu0 0
      %2656 = vmatprep.subr.bf16.mxu0 0
      %2657 = vmatpush1.bf16.msra.mxu0 0
      %2658 = vmatprep.subr.bf16.mxu0 0
      %2659 = vmatpush1.bf16.msra.mxu0 0
      %2660 = vmatprep.subr.bf16.mxu0 0
      %2661 = vmatpush1.bf16.msra.mxu0 0
      %2662 = vmatprep.subr.bf16.mxu0 0
      %2663 = vmatpush1.bf16.msra.mxu0 0
      %2664 = vmatprep.mubr.bf16.mxu0 0
      %2665 = vmatmul.mubr.bf16.gmra.mrb[0].mxu0 %v1174
      %v2666 = vpop.f32.mrb[0].mxu0
      %v2667 = vadd.f32 %v2506, %v2666
      %v2668 = vpop.f32.mrb[0].mxu0
      %v2669 = vpop.f32.mrb[0].mxu0
      %v2670 = vadd.f32 %v2509, %v2669
      %v2671 = vpop.f32.mrb[0].mxu0
      %2672 = vmatprep.mubr.bf16.mxu0 0
      %2673 = vmatmul.mubr.bf16.gmra.mrb[0].mxu0 %v1177
      %v2674 = vpop.f32.mrb[0].mxu0
      %v2675 = vadd.f32 %v2514, %v2674
      %v2676 = vpop.f32.mrb[0].mxu0
      %v2677 = vpop.f32.mrb[0].mxu0
      %v2678 = vadd.f32 %v2517, %v2677
      %v2679 = vpop.f32.mrb[0].mxu0
      %2680 = vmatprep.mubr.bf16.mxu0 0
      %2681 = vmatmul.mubr.bf16.gmra.mrb[0].mxu0 %v1180
      %v2682 = vpop.f32.mrb[0].mxu0
      %v2683 = vadd.f32 %v2522, %v2682
      %v2684 = vpop.f32.mrb[0].mxu0
      %v2685 = vpop.f32.mrb[0].mxu0
      %v2686 = vadd.f32 %v2525, %v2685
      %v2687 = vpop.f32.mrb[0].mxu0
      %2688 = vmatprep.mubr.bf16.mxu0 0
      %2689 = vmatmul.mubr.bf16.gmra.mrb[0].mxu0 %v1183
      %v2690 = vpop.f32.mrb[0].mxu0
      %v2691 = vadd.f32 %v2530, %v2690
      %v2692 = vpop.f32.mrb[0].mxu0
      %v2693 = vpop.f32.mrb[0].mxu0
      %v2694 = vadd.f32 %v2533, %v2693
      %v2695 = vpop.f32.mrb[0].mxu0
      %2696 = vmatprep.mubr.bf16.mxu0 0
      %2697 = vmatmul.mubr.bf16.gmra.mrb[0].mxu0 %v1186
      %v2698 = vpop.f32.mrb[0].mxu0
      %v2699 = vadd.f32 %v2538, %v2698
      %v2700 = vpop.f32.mrb[0].mxu0
      %v2701 = vpop.f32.mrb[0].mxu0
      %v2702 = vadd.f32 %v2541, %v2701
      %v2703 = vpop.f32.mrb[0].mxu0
      %2704 = vmatprep.mubr.bf16.mxu0 0
      %2705 = vmatmul.mubr.bf16.gmra.mrb[0].mxu0 %v1189
      %v2706 = vpop.f32.mrb[0].mxu0
      %v2707 = vadd.f32 %v2546, %v2706
      %v2708 = vpop.f32.mrb[0].mxu0
      %v2709 = vpop.f32.mrb[0].mxu0
      %v2710 = vadd.f32 %v2549, %v2709
      %v2711 = vpop.f32.mrb[0].mxu0
      %2712 = vmatprep.mubr.bf16.mxu0 0
      %2713 = vmatmul.mubr.bf16.gmra.mrb[0].mxu0 %v1192
      %v2714 = vpop.f32.mrb[0].mxu0
      %v2715 = vadd.f32 %v2554, %v2714
      %v2716 = vpop.f32.mrb[0].mxu0
      %v2717 = vpop.f32.mrb[0].mxu0
      %v2718 = vadd.f32 %v2557, %v2717
      %v2719 = vpop.f32.mrb[0].mxu0
      %2720 = vmatprep.mubr.bf16.mxu0 0
      %2721 = vmatmul.mubr.bf16.gmra.mrb[0].mxu0 %v1195
      %v2722 = vpop.f32.mrb[0].mxu0
      %v2723 = vadd.f32 %v2562, %v2722
      %v2724 = vpop.f32.mrb[0].mxu0
      %v2725 = vpop.f32.mrb[0].mxu0
      %v2726 = vadd.f32 %v2565, %v2725
      %v2727 = vpop.f32.mrb[0].mxu0
      %2728 = vmatprep.mubr.bf16.mxu0 0
      %2729 = vmatmul.mubr.bf16.gmra.mrb[0].mxu0 %v1198
      %v2730 = vpop.f32.mrb[0].mxu0
      %v2731 = vadd.f32 %v2570, %v2730
      %v2732 = vpop.f32.mrb[0].mxu0
      %v2733 = vpop.f32.mrb[0].mxu0
      %v2734 = vadd.f32 %v2573, %v2733
      %v2735 = vpop.f32.mrb[0].mxu0
      %2736 = vmatprep.mubr.bf16.mxu0 0
      %2737 = vmatmul.mubr.bf16.gmra.mrb[0].mxu0 %v1201
      %v2738 = vpop.f32.mrb[0].mxu0
      %v2739 = vadd.f32 %v2578, %v2738
      %v2740 = vpop.f32.mrb[0].mxu0
      %v2741 = vpop.f32.mrb[0].mxu0
      %v2742 = vadd.f32 %v2581, %v2741
      %v2743 = vpop.f32.mrb[0].mxu0
      %2744 = vmatprep.mubr.bf16.mxu0 0
      %2745 = vmatmul.mubr.bf16.gmra.mrb[0].mxu0 %v1204
      %v2746 = vpop.f32.mrb[0].mxu0
      %v2747 = vadd.f32 %v2586, %v2746
      %v2748 = vpop.f32.mrb[0].mxu0
      %v2749 = vpop.f32.mrb[0].mxu0
      %v2750 = vadd.f32 %v2589, %v2749
      %v2751 = vpop.f32.mrb[0].mxu0
      %2752 = vmatprep.mubr.bf16.mxu0 0
      %2753 = vmatmul.mubr.bf16.gmra.mrb[0].mxu0 %v1207
      %v2754 = vpop.f32.mrb[0].mxu0
      %v2755 = vadd.f32 %v2594, %v2754
      %v2756 = vpop.f32.mrb[0].mxu0
      %v2757 = vpop.f32.mrb[0].mxu0
      %v2758 = vadd.f32 %v2597, %v2757
      %v2759 = vpop.f32.mrb[0].mxu0
      %2760 = vmatprep.mubr.bf16.mxu0 0
      %2761 = vmatmul.mubr.bf16.gmra.mrb[0].mxu0 %v1210
      %v2762 = vpop.f32.mrb[0].mxu0
      %v2763 = vadd.f32 %v2602, %v2762
      %v2764 = vpop.f32.mrb[0].mxu0
      %v2765 = vpop.f32.mrb[0].mxu0
      %v2766 = vadd.f32 %v2605, %v2765
      %v2767 = vpop.f32.mrb[0].mxu0
      %2768 = vmatprep.mubr.bf16.mxu0 0
      %2769 = vmatmul.mubr.bf16.gmra.mrb[0].mxu0 %v1213
      %v2770 = vpop.f32.mrb[0].mxu0
      %v2771 = vadd.f32 %v2610, %v2770
      %v2772 = vpop.f32.mrb[0].mxu0
      %v2773 = vpop.f32.mrb[0].mxu0
      %v2774 = vadd.f32 %v2613, %v2773
      %v2775 = vpop.f32.mrb[0].mxu0
      %2776 = vmatprep.mubr.bf16.mxu0 0
      %2777 = vmatmul.mubr.bf16.gmra.mrb[0].mxu0 %v1295
      %v2778 = vpop.f32.mrb[0].mxu0
      %v2779 = vadd.f32 %v2618, %v2778
      %v2780 = vpop.f32.mrb[0].mxu0
      %v2781 = vpop.f32.mrb[0].mxu0
      %v2782 = vadd.f32 %v2621, %v2781
      %v2783 = vpop.f32.mrb[0].mxu0
      %2784 = vmatprep.mubr.bf16.mxu0 0
      %2785 = vmatmul.mubr.bf16.gmra.mrb[0].mxu0 %v1168
      %v2786 = vpop.f32.mrb[0].mxu0
      %v2787 = vadd.f32 %v2626, %v2786
      %v2788 = vpop.f32.mrb[0].mxu0
      %v2789 = vpop.f32.mrb[0].mxu0
      %v2790 = vadd.f32 %v2629, %v2789
      %v2791 = vpop.f32.mrb[0].mxu0
      %2792 = vdwg.mxu0
      %v2793 = vadd.f32 %v2152, %v2667
      %v2794 = vadd.f32 %v2155, %v2670
      %v2795 = vadd.f32 %v2160, %v2675
      %v2796 = vadd.f32 %v2163, %v2678
      %v2797 = vadd.f32 %v2168, %v2683
      %v2798 = vadd.f32 %v2171, %v2686
      %v2799 = vadd.f32 %v2176, %v2691
      %v2800 = vadd.f32 %v2179, %v2694
      %v2801 = vadd.f32 %v2184, %v2699
      %v2802 = vadd.f32 %v2187, %v2702
      %v2803 = vadd.f32 %v2192, %v2707
      %v2804 = vadd.f32 %v2195, %v2710
      %v2805 = vadd.f32 %v2200, %v2715
      %v2806 = vadd.f32 %v2203, %v2718
      %v2807 = vadd.f32 %v2208, %v2723
      %v2808 = vadd.f32 %v2211, %v2726
      %v2809 = vadd.f32 %v2216, %v2731
      %v2810 = vadd.f32 %v2219, %v2734
      %v2811 = vadd.f32 %v2224, %v2739
      %v2812 = vadd.f32 %v2227, %v2742
      %v2813 = vadd.f32 %v2232, %v2747
      %v2814 = vadd.f32 %v2235, %v2750
      %v2815 = vadd.f32 %v2240, %v2755
      %v2816 = vadd.f32 %v2243, %v2758
      %v2817 = vadd.f32 %v2248, %v2763
      %v2818 = vadd.f32 %v2251, %v2766
      %v2819 = vadd.f32 %v2256, %v2771
      %v2820 = vadd.f32 %v2259, %v2774
      %v2821 = vadd.f32 %v2264, %v2779
      %v2822 = vadd.f32 %v2267, %v2782
      %v2823 = vadd.f32 %v2272, %v2787
      %v2824 = vadd.f32 %v2275, %v2790
      %v2825 = vpack.c.bf16 %v2794, %v2793
      %v2826 = vpack.c.bf16 %v2796, %v2795
      %v2827 = vpack.c.bf16 %v2798, %v2797
      %v2828 = vpack.c.bf16 %v2800, %v2799
      %v2829 = vpack.c.bf16 %v2802, %v2801
      %v2830 = vpack.c.bf16 %v2804, %v2803
      %v2831 = vpack.c.bf16 %v2806, %v2805
      %v2832 = vpack.c.bf16 %v2808, %v2807
      %v2833 = vpack.c.bf16 %v2810, %v2809
      %v2834 = vpack.c.bf16 %v2812, %v2811
      %v2835 = vpack.c.bf16 %v2814, %v2813
      %v2836 = vpack.c.bf16 %v2816, %v2815
      %v2837 = vpack.c.bf16 %v2818, %v2817
      %v2838 = vpack.c.bf16 %v2820, %v2819
      %v2839 = vpack.c.bf16 %v2822, %v2821
      %v2840 = vpack.c.bf16 %v2824, %v2823
      %v2857 = vunpack.c.l.b16 %v2825
      %v2858 = vunpack.c.h.b16 %v2825
      %v2859 = vunpack.c.l.b16 %v2826
      %v2860 = vunpack.c.h.b16 %v2826
      %v2861 = vunpack.c.l.b16 %v2827
      %v2862 = vunpack.c.h.b16 %v2827
      %v2863 = vunpack.c.l.b16 %v2828
      %v2864 = vunpack.c.h.b16 %v2828
      %v2865 = vunpack.c.l.b16 %v2829
      %v2866 = vunpack.c.h.b16 %v2829
      %v2867 = vunpack.c.l.b16 %v2830
      %v2868 = vunpack.c.h.b16 %v2830
      %v2869 = vunpack.c.l.b16 %v2831
      %v2870 = vunpack.c.h.b16 %v2831
      %v2871 = vunpack.c.l.b16 %v2832
      %v2872 = vunpack.c.h.b16 %v2832
      %v2873 = vunpack.c.l.b16 %v2833
      %v2874 = vunpack.c.h.b16 %v2833
      %v2875 = vunpack.c.l.b16 %v2834
      %v2876 = vunpack.c.h.b16 %v2834
      %v2877 = vunpack.c.l.b16 %v2835
      %v2878 = vunpack.c.h.b16 %v2835
      %v2879 = vunpack.c.l.b16 %v2836
      %v2880 = vunpack.c.h.b16 %v2836
      %v2881 = vunpack.c.l.b16 %v2837
      %v2882 = vunpack.c.h.b16 %v2837
      %v2883 = vunpack.c.l.b16 %v2838
      %v2884 = vunpack.c.h.b16 %v2838
      %v2885 = vunpack.c.l.b16 %v2839
      %v2886 = vunpack.c.h.b16 %v2839
      %v2887 = vunpack.c.l.b16 %v2840
      %v2888 = vunpack.c.h.b16 %v2840
      %v2889 = vpack.c.b16 %v2857, %v2857
      %v2890 = vpack.c.b16 %v2858, %v2858
      %v2891 = vpack.c.b16 %v2859, %v2859
      %v2892 = vpack.c.b16 %v2860, %v2860
      %v2893 = vpack.c.b16 %v2861, %v2861
      %v2894 = vpack.c.b16 %v2862, %v2862
      %v2895 = vpack.c.b16 %v2863, %v2863
      %v2896 = vpack.c.b16 %v2864, %v2864
      %v2897 = vpack.c.b16 %v2865, %v2865
      %v2898 = vpack.c.b16 %v2866, %v2866
      %v2899 = vpack.c.b16 %v2867, %v2867
      %v2900 = vpack.c.b16 %v2868, %v2868
      %v2901 = vpack.c.b16 %v2869, %v2869
      %v2902 = vpack.c.b16 %v2870, %v2870
      %v2903 = vpack.c.b16 %v2871, %v2871
      %v2904 = vpack.c.b16 %v2872, %v2872
      %v2905 = vpack.c.b16 %v2873, %v2873
      %v2906 = vpack.c.b16 %v2874, %v2874
      %v2907 = vpack.c.b16 %v2875, %v2875
      %v2908 = vpack.c.b16 %v2876, %v2876
      %v2909 = vpack.c.b16 %v2877, %v2877
      %v2910 = vpack.c.b16 %v2878, %v2878
      %v2911 = vpack.c.b16 %v2879, %v2879
      %v2912 = vpack.c.b16 %v2880, %v2880
      %v2913 = vpack.c.b16 %v2881, %v2881
      %v2914 = vpack.c.b16 %v2882, %v2882
      %v2915 = vpack.c.b16 %v2883, %v2883
      %v2916 = vpack.c.b16 %v2884, %v2884
      %v2917 = vpack.c.b16 %v2885, %v2885
      %v2918 = vpack.c.b16 %v2886, %v2886
      %v2919 = vpack.c.b16 %v2887, %v2887
      %v2920 = vpack.c.b16 %v2888, %v2888
      %2953 = vst [vmem:[%s293] sm:$0xf] %v2889
      %2954 = vst [vmem:[%s293 + $0x4] sm:$0xf] %v2890
      %2955 = vst [vmem:[%s293 + $0x8] sm:$0xf] %v2891
      %2956 = vst [vmem:[%s293 + $0xc] sm:$0xf] %v2892
      %2957 = vst [vmem:[%s293 + $0x10] sm:$0xf] %v2893
      %2958 = vst [vmem:[%s293 + $0x14] sm:$0xf] %v2894
      %2959 = vst [vmem:[%s293 + $0x18] sm:$0xf] %v2895
      %2960 = vst [vmem:[%s293 + $0x1c] sm:$0xf] %v2896
      %2961 = vst [vmem:[%s293 + $0x20] sm:$0xf] %v2897
      %2962 = vst [vmem:[%s293 + $0x24] sm:$0xf] %v2898
      %2963 = vst [vmem:[%s293 + $0x28] sm:$0xf] %v2899
      %2964 = vst [vmem:[%s293 + $0x2c] sm:$0xf] %v2900
      %2965 = vst [vmem:[%s293 + $0x30] sm:$0xf] %v2901
      %2966 = vst [vmem:[%s293 + $0x34] sm:$0xf] %v2902
      %2967 = vst [vmem:[%s293 + $0x38] sm:$0xf] %v2903
      %2968 = vst [vmem:[%s293 + $0x3c] sm:$0xf] %v2904
      %2969 = vst [vmem:[%s293 + $0x40] sm:$0xf] %v2905
      %2970 = vst [vmem:[%s293 + $0x44] sm:$0xf] %v2906
      %2971 = vst [vmem:[%s293 + $0x48] sm:$0xf] %v2907
      %2972 = vst [vmem:[%s293 + $0x4c] sm:$0xf] %v2908
      %2973 = vst [vmem:[%s293 + $0x50] sm:$0xf] %v2909
      %2974 = vst [vmem:[%s293 + $0x54] sm:$0xf] %v2910
      %2975 = vst [vmem:[%s293 + $0x58] sm:$0xf] %v2911
      %2976 = vst [vmem:[%s293 + $0x5c] sm:$0xf] %v2912
      %2977 = vst [vmem:[%s293 + $0x60] sm:$0xf] %v2913
      %2978 = vst [vmem:[%s293 + $0x64] sm:$0xf] %v2914
      %2979 = vst [vmem:[%s293 + $0x68] sm:$0xf] %v2915
      %2980 = vst [vmem:[%s293 + $0x6c] sm:$0xf] %v2916
      %2981 = vst [vmem:[%s293 + $0x70] sm:$0xf] %v2917
      %2982 = vst [vmem:[%s293 + $0x74] sm:$0xf] %v2918
      %2983 = vst [vmem:[%s293 + $0x78] sm:$0xf] %v2919
      %2984 = vst [vmem:[%s293 + $0x7c] sm:$0xf] %v2920
      %v2985 = vadd.f32 %v2793, %v2794
      %v2986 = vadd.f32 %v2985, %v2795
      %v2987 = vadd.f32 %v2986, %v2796
      %v2988 = vadd.f32 %v2987, %v2797
      %v2989 = vadd.f32 %v2988, %v2798
      %v2990 = vadd.f32 %v2989, %v2799
      %v2991 = vadd.f32 %v2990, %v2800
      %v2992 = vadd.f32 %v2991, %v2801
      %v2993 = vadd.f32 %v2992, %v2802
      %v2994 = vadd.f32 %v2993, %v2803
      %v2995 = vadd.f32 %v2994, %v2804
      %v2996 = vadd.f32 %v2995, %v2805
      %v2997 = vadd.f32 %v2996, %v2806
      %v2998 = vadd.f32 %v2997, %v2807
      %v2999 = vadd.f32 %v2998, %v2808
      %v3000 = vadd.f32 %v2999, %v2809
      %v3001 = vadd.f32 %v3000, %v2810
      %v3002 = vadd.f32 %v3001, %v2811
      %v3003 = vadd.f32 %v3002, %v2812
      %v3004 = vadd.f32 %v3003, %v2813
      %v3005 = vadd.f32 %v3004, %v2814
      %v3006 = vadd.f32 %v3005, %v2815
      %v3007 = vadd.f32 %v3006, %v2816
      %v3008 = vadd.f32 %v3007, %v2817
      %v3009 = vadd.f32 %v3008, %v2818
      %v3010 = vadd.f32 %v3009, %v2819
      %v3011 = vadd.f32 %v3010, %v2820
      %v3012 = vadd.f32 %v3011, %v2821
      %v3013 = vadd.f32 %v3012, %v2822
      %v3014 = vadd.f32 %v3013, %v2823
      %v3015 = vadd.f32 %v3014, %v2824
      %v3016 = vrot.slane %v3015, 4
      %v3017 = vadd.f32 %v3015, %v3016
      %v3018 = vrot.slane %v3017, 2
      %v3019 = vadd.f32 %v3017, %v3018
      %v3020 = vrot.slane %v3019, 1
      %v3021 = vadd.f32 %v3019, %v3020
      %v3022 = vmul.f32 %v2793, %v2793
      %v3023 = vmul.f32 %v2794, %v2794
      %v3024 = vmul.f32 %v2795, %v2795
      %v3025 = vmul.f32 %v2796, %v2796
      %v3026 = vmul.f32 %v2797, %v2797
      %v3027 = vmul.f32 %v2798, %v2798
      %v3028 = vmul.f32 %v2799, %v2799
      %v3029 = vmul.f32 %v2800, %v2800
      %v3030 = vmul.f32 %v2801, %v2801
      %v3031 = vmul.f32 %v2802, %v2802
      %v3032 = vmul.f32 %v2803, %v2803
      %v3033 = vmul.f32 %v2804, %v2804
      %v3034 = vmul.f32 %v2805, %v2805
      %v3035 = vmul.f32 %v2806, %v2806
      %v3036 = vmul.f32 %v2807, %v2807
      %v3037 = vmul.f32 %v2808, %v2808
      %v3038 = vmul.f32 %v2809, %v2809
      %v3039 = vmul.f32 %v2810, %v2810
      %v3040 = vmul.f32 %v2811, %v2811
      %v3041 = vmul.f32 %v2812, %v2812
      %v3042 = vmul.f32 %v2813, %v2813
      %v3043 = vmul.f32 %v2814, %v2814
      %v3044 = vmul.f32 %v2815, %v2815
      %v3045 = vmul.f32 %v2816, %v2816
      %v3046 = vmul.f32 %v2817, %v2817
      %v3047 = vmul.f32 %v2818, %v2818
      %v3048 = vmul.f32 %v2819, %v2819
      %v3049 = vmul.f32 %v2820, %v2820
      %v3050 = vmul.f32 %v2821, %v2821
      %v3051 = vmul.f32 %v2822, %v2822
      %v3052 = vmul.f32 %v2823, %v2823
      %v3053 = vmul.f32 %v2824, %v2824
      %v3054 = vadd.f32 %v3022, %v3023
      %v3055 = vadd.f32 %v3054, %v3024
      %v3056 = vadd.f32 %v3055, %v3025
      %v3057 = vadd.f32 %v3056, %v3026
      %v3058 = vadd.f32 %v3057, %v3027
      %v3059 = vadd.f32 %v3058, %v3028
      %v3060 = vadd.f32 %v3059, %v3029
      %v3061 = vadd.f32 %v3060, %v3030
      %v3062 = vadd.f32 %v3061, %v3031
      %v3063 = vadd.f32 %v3062, %v3032
      %v3064 = vadd.f32 %v3063, %v3033
      %v3065 = vadd.f32 %v3064, %v3034
      %v3066 = vadd.f32 %v3065, %v3035
      %v3067 = vadd.f32 %v3066, %v3036
      %v3068 = vadd.f32 %v3067, %v3037
      %v3069 = vadd.f32 %v3068, %v3038
      %v3070 = vadd.f32 %v3069, %v3039
      %v3071 = vadd.f32 %v3070, %v3040
      %v3072 = vadd.f32 %v3071, %v3041
      %v3073 = vadd.f32 %v3072, %v3042
      %v3074 = vadd.f32 %v3073, %v3043
      %v3075 = vadd.f32 %v3074, %v3044
      %v3076 = vadd.f32 %v3075, %v3045
      %v3077 = vadd.f32 %v3076, %v3046
      %v3078 = vadd.f32 %v3077, %v3047
      %v3079 = vadd.f32 %v3078, %v3048
      %v3080 = vadd.f32 %v3079, %v3049
      %v3081 = vadd.f32 %v3080, %v3050
      %v3082 = vadd.f32 %v3081, %v3051
      %v3083 = vadd.f32 %v3082, %v3052
      %v3084 = vadd.f32 %v3083, %v3053
      %v3085 = vrot.slane %v3084, 4
      %v3086 = vadd.f32 %v3084, %v3085
      %v3087 = vrot.slane %v3086, 2
      %v3088 = vadd.f32 %v3086, %v3087
      %v3089 = vrot.slane %v3088, 1
      %v3090 = vadd.f32 %v3088, %v3089
      %3091 = vst [vmem:[%s298] sm:$0xff] %v3021
      %3092 = vst [vmem:[%s302] sm:$0xff] %v3090
      %s3093 = smul.u32 32, %s19
      %p3094 = scmp.lt.s32.totalorder %s3093, 63
      %s3095 = scalar_select %p3094, %s3093, 63
      %s3096 = smul.addr %s3095, 4
      %s3097 = scalar_lea.vmem %s5, %s3096
      %p3098 = scmp.lt.s32.totalorder %s19, 1
      %s3099 = scalar_select %p3098, %s19, 1
      %s3100 = smul.addr %s3099, 8
      %s3101 = scalar_lea.vmem %s6, %s3100
      %p3102 = scmp.lt.s32.totalorder %s19, 1
      %s3103 = scalar_select %p3102, %s19, 1
      %s3104 = smul.addr %s3103, 8
      %s3105 = scalar_lea.vmem %s7, %s3104
      // Predicated region
      $region41: #{bottleneck_forward.5} parent=39 // pred_check
        %p3106 = pneg %p147
      $region42: #{bottleneck_forward.5} parent=39 // pred_check_branch
        %3108 = sbr.rel (%p3106) target = $region44
      $region43: #{bottleneck_forward.5} parent=39 // pred_region
        %s3109 = smul.u32 32, %s19
      $region44: #{bottleneck_forward.5} parent=39 // pred_fallthru
        _
      // Predicated region
      $region45: #{bottleneck_forward.5} parent=39 // pred_check
        %p3110 = pneg %p173
      $region46: #{bottleneck_forward.5} parent=39 // pred_check_branch
        %3112 = sbr.rel (%p3110) target = $region48
      $region47: #{bottleneck_forward.5} parent=39 // pred_region
        _
      $region48: #{bottleneck_forward.5} parent=39 // pred_fallthru
        _
      // Predicated region
      $region49: #{bottleneck_forward.5} parent=39 // pred_check
        %p3113 = pneg %p199
      $region50: #{bottleneck_forward.5} parent=39 // pred_check_branch
        %3115 = sbr.rel (%p3113) target = $region52
      $region51: #{bottleneck_forward.5} parent=39 // pred_region
        _
      $region52: #{bottleneck_forward.5} parent=39 // pred_fallthru
        _
    $region40: #{bottleneck_forward.5} parent=5 // pred_fallthru
      _
    %p3116 = scmp.le.s32.totalorder 2, %s14
    // Predicated region
    $region53: #{bottleneck_forward.5} parent=5 // pred_check
      %p3117 = pneg %p3116
    $region54: #{bottleneck_forward.5} parent=5 // pred_check_branch
      %3119 = sbr.rel (%p3117) target = $region56
    $region55: #{bottleneck_forward.5} parent=5 // pred_region
      %s3120 = ssub.s32 %s14, 2
      // Predicated region
      $region57: #{bottleneck_forward.5} parent=55 // pred_check
        %p3121 = pneg %p153
      $region58: #{bottleneck_forward.5} parent=55 // pred_check_branch
        %3123 = sbr.rel (%p3121) target = $region60
      $region59: #{bottleneck_forward.5} parent=55 // pred_region
        %s3124 = smul.u32 32, %s20
        %p3125 = scmp.lt.s32.totalorder %s3124, 63
        %s3126 = scalar_select %p3125, %s3124, 63
        %s3127 = smul.addr %s3126, 4
        %s3128 = scalar_lea.vmem %s5, %s3127
      $region60: #{bottleneck_forward.5} parent=55 // pred_fallthru
        _
      // Predicated region
      $region61: #{bottleneck_forward.5} parent=55 // pred_check
        %p3129 = pneg %p179
      $region62: #{bottleneck_forward.5} parent=55 // pred_check_branch
        %3131 = sbr.rel (%p3129) target = $region64
      $region63: #{bottleneck_forward.5} parent=55 // pred_region
        %p3132 = scmp.lt.s32.totalorder %s20, 1
        %s3133 = scalar_select %p3132, %s20, 1
        %s3134 = smul.addr %s3133, 8
        %s3135 = scalar_lea.vmem %s6, %s3134
      $region64: #{bottleneck_forward.5} parent=55 // pred_fallthru
        _
      // Predicated region
      $region65: #{bottleneck_forward.5} parent=55 // pred_check
        %p3136 = pneg %p205
      $region66: #{bottleneck_forward.5} parent=55 // pred_check_branch
        %3138 = sbr.rel (%p3136) target = $region68
      $region67: #{bottleneck_forward.5} parent=55 // pred_region
        %p3139 = scmp.lt.s32.totalorder %s20, 1
        %s3140 = scalar_select %p3139, %s20, 1
        %s3141 = smul.addr %s3140, 8
        %s3142 = scalar_lea.vmem %s7, %s3141
      $region68: #{bottleneck_forward.5} parent=55 // pred_fallthru
        _
    $region56: #{bottleneck_forward.5} parent=5 // pred_fallthru
      _
  $region6: #{bottleneck_forward.5} parent=0 // loop_footer
    %s18 = sadd.s32 1, %s14
  $region7: #{bottleneck_forward.5} parent=0 // loop_footer_branch
    %13 = sbr.rel target = $region3
  $region8: #{bottleneck_forward.5} parent=0 // loop_exit
    _

</llo_original>
